<compile_context>
chip_gen: v5e
topology: v5e:2x2
jax: 0.10.0
libtpu: 0.0.40
codegen_flags: <defaults>
</compile_context>

<pallas_src>
import jax
import jax.numpy as jnp
from jax import lax
from jax.experimental import pallas as pl
from jax.experimental.pallas import tpu as pltpu


# ----------------------- configuration (small synthetic Falcon) -----------------
VOCAB = 256
HIDDEN = 128
N_HEADS = 4
HEAD_DIM = HIDDEN // N_HEADS          # 32
ROT_HALF = HEAD_DIM // 2              # 16
N_KV_HEADS = 1                        # Falcon multi-query attention
FFN = 4 * HIDDEN                      # 512
N_LAYERS = 2
LN_EPS = 1e-5

Q_WIDTH = N_HEADS * HEAD_DIM          # 128   (q heads 0..3, 32 cols each)
K_OFF = Q_WIDTH                       # 128   (shared K)
V_OFF = Q_WIDTH + HEAD_DIM            # 160   (shared V)
QKV_USED = Q_WIDTH + 2 * HEAD_DIM     # 192
QKV_W = 256                           # zero-padded to a lane-dense width
PROJ_W = QKV_W + FFN                  # 768 = 6*128  (fused Q|K|V|pad|up)

_GELU_C = 0.7978845608028654          # sqrt(2/pi), tanh-approx GELU


# ----------------------------- fused forward kernel -----------------------------
def fused_forward_kernel(h_ref, amask_ref, cosq_ref, sinq_ref, cosk_ref, sink_ref,
                         lng_ref, lnb_ref, wqkvu_ref, wo_ref, wdn_ref,
                         lnfg_ref, lnfb_ref, lmh_ref, out_ref):
    """One grid step == one batch group (Bc sequences). Runs the whole stack."""
    Bc, S, _ = h_ref.shape
    x = h_ref[...].reshape(Bc * S, HIDDEN)          # (Bc*S, H) f32 residual stream
    cos_q = cosq_ref[...]                           # (NH*S, ROT_HALF) heads-major
    sin_q = sinq_ref[...]
    cos_k = cosk_ref[...]                           # (S, ROT_HALF)
    sin_k = sink_ref[...]
    scale = 1.0 / (HEAD_DIM ** 0.5)
    ddn = (((1,), (1,)), ((), ()))                  # contract last axes (no K^T)

    def layernorm(v, g, b):                         # f32 VPU math (v5e-safe)
        mu = jnp.mean(v, axis=-1, keepdims=True)
        var = jnp.mean(jnp.square(v - mu), axis=-1, keepdims=True)
        return (v - mu) * lax.rsqrt(var + LN_EPS) * g + b

    def rope(u, c, s):                              # u: (R, HEAD_DIM); c,s: (R, RH)
        u1 = u[:, :ROT_HALF]
        u2 = u[:, ROT_HALF:]
        return jnp.concatenate([u1 * c - u2 * s, u2 * c + u1 * s], axis=-1)

    # Per-sequence additive mask (causal AND key-padding), built in-kernel from
    # iota + the (Bc,1,S) attention_mask; stacked heads-major to match q_stack.
    qpos = lax.broadcasted_iota(jnp.int32, (S, S), 0)
    kpos = lax.broadcasted_iota(jnp.int32, (S, S), 1)
    causal_ok = kpos <= qpos
    masks = []
    for b in range(Bc):
        allow = causal_ok & (amask_ref[b] > 0.5)                     # (S,S)&(1,S)
        m = jnp.where(allow, 0.0, -1e9).astype(jnp.float32)          # (S, S)
        masks.append(jnp.concatenate([m] * N_HEADS, axis=0))         # (NH*S, S)

    for li in range(N_LAYERS):                      # static unroll; weights in VMEM
        ln16 = layernorm(x, lng_ref[li], lnb_ref[li]).astype(jnp.bfloat16)

        # fused [Q|K|V|pad|MLP-up] projection: one (Bc*S,128)@(128,768) matmul
        proj = jnp.dot(ln16, wqkvu_ref[li],
                       preferred_element_type=jnp.float32)           # (Bc*S, 768)

        # ---- attention: MQA shared K/V, all heads stacked along sublanes -------
        attn_rows = []
        for b in range(Bc):
            rows = proj[b * S:(b + 1) * S]                           # (S, 768)
            # stack the Q heads heads-major on the sublane axis -> (NH*S, D)
            q_stack = jnp.concatenate(
                [rows[:, h * HEAD_DIM:(h + 1) * HEAD_DIM] for h in range(N_HEADS)],
                axis=0)
            q_rot = rope(q_stack, cos_q, sin_q).astype(jnp.bfloat16)     # (NH*S, D)
            k_rot = rope(rows[:, K_OFF:K_OFF + HEAD_DIM],
                         cos_k, sin_k).astype(jnp.bfloat16)              # (S, D)
            v16 = rows[:, V_OFF:V_OFF + HEAD_DIM].astype(jnp.bfloat16)   # (S, D)

            # single 32-deep QK^T for all heads, contracting last axes
            sc = lax.dot_general(q_rot, k_rot, ddn,
                                 preferred_element_type=jnp.float32)     # (NH*S, S)
            sc = sc * scale + masks[b]
            sc = sc - jnp.max(sc, axis=-1, keepdims=True)
            p = jnp.exp(sc)
            p = p * pl.reciprocal(jnp.sum(p, axis=-1, keepdims=True), approx=True)
            oh = jnp.dot(p.astype(jnp.bfloat16), v16,
                         preferred_element_type=jnp.float32)             # (NH*S, D)
            # un-stack heads back onto the lane axis -> (S, HIDDEN)
            attn_rows.append(jnp.concatenate(
                [oh[h * S:(h + 1) * S, :] for h in range(N_HEADS)], axis=1))

        attn = attn_rows[0] if Bc == 1 else jnp.concatenate(attn_rows, axis=0)
        # ONE output projection for the whole batch group (128-deep contraction)
        attn_out = jnp.dot(attn.astype(jnp.bfloat16), wo_ref[li],
                           preferred_element_type=jnp.float32)           # (Bc*S, H)

        # ---- parallel MLP branch (up-projection already inside `proj`) ---------
        up = proj[:, QKV_W:]                                             # (Bc*S, FFN)
        up = 0.5 * up * (1.0 + jnp.tanh(_GELU_C * (up + 0.044715 * up * up * up)))
        mlp_out = jnp.dot(up.astype(jnp.bfloat16), wdn_ref[li],
                          preferred_element_type=jnp.float32)

        x = x + attn_out + mlp_out                                       # residual f32

    # Only the last position's logits are returned by the original forward():
    # slice the last row of each sequence straight from the register value.
    if Bc == 1:
        xl = x[S - 1:S, :]
    else:
        xl = jnp.concatenate(
            [x[b * S + S - 1:b * S + S, :] for b in range(Bc)], axis=0)  # (Bc, H)
    hf = layernorm(xl, lnfg_ref[...], lnfb_ref[...])
    out_ref[0] = jnp.dot(hf.astype(jnp.bfloat16), lmh_ref[...],
                         preferred_element_type=jnp.float32)             # (Bc, VOCAB)


# ----------------------------- host-side wrapper --------------------------------
def rope_half_tables(S, D):
    inv_freq = 1.0 / (10000.0 ** (jnp.arange(0, D, 2, dtype=jnp.float32) / D))
    freqs = jnp.outer(jnp.arange(S, dtype=jnp.float32), inv_freq)   # (S, D/2)
    return jnp.cos(freqs), jnp.sin(freqs)


def h2ogpt_forward(params, input_ids, attention_mask):
    """Equivalent of H2OGPTSHARKModel.forward: returns logits[:, -1, :] (B, VOCAB)."""
    B, S = input_ids.shape

    # token-embedding gather + RoPE table construction: host-side glue.
    h = jnp.take(params["wte"], input_ids, axis=0)                  # (B, S, H) f32
    amask = attention_mask.astype(jnp.float32).reshape(B, 1, S)     # key padding mask
    cos, sin = rope_half_tables(S, HEAD_DIM)                        # (S, RH)
    cos_q = jnp.tile(cos, (N_HEADS, 1))                             # (NH*S, RH)
    sin_q = jnp.tile(sin, (N_HEADS, 1))

    # 2-way "parallel" grid axis (both v7x TensorCores), batch folded per step.
    G = 2 if (B >= 2 and B % 2 == 0) else 1
    Bc = B // G

    def vmem():  # whole array resident in VMEM; no per-step double-buffering
        return pl.BlockSpec(memory_space=pltpu.MemorySpace.VMEM)

    out = pl.pallas_call(
        fused_forward_kernel,
        out_shape=jax.ShapeDtypeStruct((G, Bc, VOCAB), jnp.float32),
        grid=(G,),
        in_specs=[
            pl.BlockSpec((Bc, S, HIDDEN), lambda g: (g, 0, 0)),     # hidden states
            pl.BlockSpec((Bc, 1, S), lambda g: (g, 0, 0)),          # attention_mask
            vmem(), vmem(),                                         # RoPE cos/sin (stacked Q)
            vmem(), vmem(),                                         # RoPE cos/sin (K)
            vmem(), vmem(),                                         # ln gamma / beta
            vmem(), vmem(), vmem(),                                 # W[qkv|up], Wo, Wdown
            vmem(), vmem(), vmem(),                                 # final ln g/b, lm head
        ],
        out_specs=pl.BlockSpec((1, Bc, VOCAB), lambda g: (g, 0, 0)),
        compiler_params=pltpu.CompilerParams(
            dimension_semantics=("parallel",)),
    )(h, amask, cos_q, sin_q, cos, sin,
      params["ln_g"], params["ln_b"], params["wqkvu"], params["wo"], params["w_down"],
      params["lnf_g"], params["lnf_b"], params["lm_head"])
    return out.reshape(B, VOCAB)


# ----------------------------- parameters ---------------------------------------
def init_params(key):
    def nrm(k, shape, scale=0.02):
        return scale * jax.random.normal(k, shape, dtype=jnp.float32)

    keys = jax.random.split(key, 2 + N_LAYERS)
    wqkvu_l, wo_l, wdn_l = [], [], []
    for li in range(N_LAYERS):
        lk = jax.random.split(keys[2 + li], 4)
        wqkv = nrm(lk[0], (HIDDEN, QKV_USED))                       # q|k|v (no bias)
        wqkv = jnp.pad(wqkv, ((0, 0), (0, QKV_W - QKV_USED)))       # lane-dense pad
        w_up = nrm(lk[2], (HIDDEN, FFN))
        wqkvu_l.append(jnp.concatenate([wqkv, w_up], axis=1))       # (H, 768) fused
        wo_l.append(nrm(lk[1], (HIDDEN, HIDDEN)))
        wdn_l.append(nrm(lk[3], (FFN, HIDDEN)))

    return {
        "wte": nrm(keys[0], (VOCAB, HIDDEN)),
        "ln_g": jnp.ones((N_LAYERS, 1, HIDDEN), jnp.float32),
        "ln_b": jnp.zeros((N_LAYERS, 1, HIDDEN), jnp.float32),
        "lnf_g": jnp.ones((1, HIDDEN), jnp.float32),
        "lnf_b": jnp.zeros((1, HIDDEN), jnp.float32),
        # MXU operands are stored / fed in bf16; accumulation is f32 in-kernel.
        "wqkvu": jnp.stack(wqkvu_l).astype(jnp.bfloat16),
        "wo": jnp.stack(wo_l).astype(jnp.bfloat16),
        "w_down": jnp.stack(wdn_l).astype(jnp.bfloat16),
        "lm_head": nrm(keys[1], (HIDDEN, VOCAB)).astype(jnp.bfloat16),
    }


# ----------------------------- pure-JAX reference (validation) ------------------
def reference_forward(params, input_ids, attention_mask):
    B, S = input_ids.shape
    h = jnp.take(params["wte"], input_ids, axis=0)
    causal = jnp.tril(jnp.ones((S, S), jnp.float32))
    allow = causal[None, :, :] * attention_mask.astype(jnp.float32)[:, None, :]
    add_mask = jnp.where(allow > 0, 0.0, -1e9)[:, None]                 # (B,1,S,S)
    cos_h, sin_h = rope_half_tables(S, HEAD_DIM)
    cos = jnp.concatenate([cos_h, cos_h], axis=-1)
    sin = jnp.concatenate([sin_h, sin_h], axis=-1)

    def rope(u):                                                        # (B,nh,S,D)
        u1, u2 = u[..., :ROT_HALF], u[..., ROT_HALF:]
        rot = jnp.concatenate([-u2, u1], axis=-1)
        return u * cos[None, None] + rot * sin[None, None]

    scale = 1.0 / (HEAD_DIM ** 0.5)
    for li in range(N_LAYERS):
        g, b = params["ln_g"][li], params["ln_b"][li]
        mu = jnp.mean(h, axis=-1, keepdims=True)
        var = jnp.mean((h - mu) ** 2, axis=-1, keepdims=True)
        ln = (h - mu) * lax.rsqrt(var + LN_EPS) * g + b
        proj = ln @ params["wqkvu"][li].astype(jnp.float32)             # (B,S,768)
        q = proj[..., :Q_WIDTH].reshape(B, S, N_HEADS, HEAD_DIM).transpose(0, 2, 1, 3)
        k = proj[..., K_OFF:K_OFF + HEAD_DIM][:, None]                  # (B,1,S,D)
        v = proj[..., V_OFF:V_OFF + HEAD_DIM][:, None]                  # (B,1,S,D)
        up = proj[..., QKV_W:]
        q, k = rope(q), rope(k)
        k = jnp.broadcast_to(k, q.shape)
        v = jnp.broadcast_to(v, q.shape)
        sc = jnp.einsum("bhqd,bhkd->bhqk", q, k) * scale + add_mask
        sc = sc - jnp.max(sc, axis=-1, keepdims=True)
        p = jnp.exp(sc)
        p = p / jnp.sum(p, axis=-1, keepdims=True)
        attn = jnp.einsum("bhqk,bhkd->bhqd", p, v)
        attn = attn.transpose(0, 2, 1, 3).reshape(B, S, HIDDEN)
        attn_out = attn @ params["wo"][li].astype(jnp.float32)
        up = 0.5 * up * (1.0 + jnp.tanh(_GELU_C * (up + 0.044715 * up ** 3)))
        mlp_out = up @ params["w_down"][li].astype(jnp.float32)
        h = h + attn_out + mlp_out

    xl = h[:, -1, :]
    mu = jnp.mean(xl, axis=-1, keepdims=True)
    var = jnp.mean((xl - mu) ** 2, axis=-1, keepdims=True)
    hf = (xl - mu) * lax.rsqrt(var + LN_EPS) * params["lnf_g"] + params["lnf_b"]
    return hf @ params["lm_head"].astype(jnp.float32)                   # (B, VOCAB)


# ----------------------------- main ----------------------------------------------
if __name__ == "__main__":
    B, S = 4, 8
    key = jax.random.PRNGKey(0)
    kp, ki = jax.random.split(key)

    params = init_params(kp)
    input_ids = jax.random.randint(ki, (B, S), 1, VOCAB, dtype=jnp.int32)
    attention_mask = jnp.ones((B, S), dtype=jnp.int32)
    # give two sequences some left padding to exercise the in-kernel mask path
    attention_mask = attention_mask.at[1, :2].set(0)
    attention_mask = attention_mask.at[3, :3].set(0)

    logits_last = jax.jit(h2ogpt_forward)(params, input_ids, attention_mask)
    logits_last = jax.block_until_ready(logits_last)

    assert logits_last.shape == (B, VOCAB)
    assert logits_last.dtype == jnp.float32
    assert bool(jnp.all(jnp.isfinite(logits_last)))

    # numerics check vs a pure-JAX f32 reference using the same (bf16-stored) weights
    ref = jax.jit(reference_forward)(params, input_ids, attention_mask)
    ref = jax.block_until_ready(ref)
    assert bool(jnp.allclose(logits_last, ref, atol=5e-2, rtol=5e-2)), float(
        jnp.max(jnp.abs(logits_last - ref)))

    print("KERNEL_OK")
</pallas_src>

<mosaic_0001>
module attributes {stable_mosaic.version = 11 : i64} {
  func.func @fused_forward_kernel(%arg0: i32, %arg1: memref<2x8x128xf32, #tpu.memory_space<vmem>>, %arg2: memref<2x1x8xf32, #tpu.memory_space<vmem>>, %arg3: memref<32x16xf32, #tpu.memory_space<vmem>>, %arg4: memref<32x16xf32, #tpu.memory_space<vmem>>, %arg5: memref<8x16xf32, #tpu.memory_space<vmem>>, %arg6: memref<8x16xf32, #tpu.memory_space<vmem>>, %arg7: memref<2x1x128xf32, #tpu.memory_space<vmem>>, %arg8: memref<2x1x128xf32, #tpu.memory_space<vmem>>, %arg9: memref<2x128x768xbf16, #tpu.memory_space<vmem>>, %arg10: memref<2x128x128xbf16, #tpu.memory_space<vmem>>, %arg11: memref<2x512x128xbf16, #tpu.memory_space<vmem>>, %arg12: memref<1x128xf32, #tpu.memory_space<vmem>>, %arg13: memref<1x128xf32, #tpu.memory_space<vmem>>, %arg14: memref<128x256xbf16, #tpu.memory_space<vmem>>, %arg15: memref<1x2x256xf32, #tpu.memory_space<vmem>>) attributes {dimension_semantics = [#tpu.dimension_semantics<parallel>], iteration_bounds = array<i64: 2>, scalar_prefetch = 0 : i64, scratch_operands = 0 : i64, tpu.core_type = #tpu.core_type<tc>, window_params = [{transform_indices = @transform_0, window_bounds = array<i64: 2, 8, 128>}, {transform_indices = @transform_1, window_bounds = array<i64: 2, 1, 8>}, {pipeline_mode = #tpu.pipeline_mode<synchronous>, transform_indices = @transform_2, window_bounds = array<i64: 32, 16>}, {pipeline_mode = #tpu.pipeline_mode<synchronous>, transform_indices = @transform_3, window_bounds = array<i64: 32, 16>}, {pipeline_mode = #tpu.pipeline_mode<synchronous>, transform_indices = @transform_4, window_bounds = array<i64: 8, 16>}, {pipeline_mode = #tpu.pipeline_mode<synchronous>, transform_indices = @transform_5, window_bounds = array<i64: 8, 16>}, {pipeline_mode = #tpu.pipeline_mode<synchronous>, transform_indices = @transform_6, window_bounds = array<i64: 2, 1, 128>}, {pipeline_mode = #tpu.pipeline_mode<synchronous>, transform_indices = @transform_7, window_bounds = array<i64: 2, 1, 128>}, {pipeline_mode = #tpu.pipeline_mode<synchronous>, transform_indices = @transform_8, window_bounds = array<i64: 2, 128, 768>}, {pipeline_mode = #tpu.pipeline_mode<synchronous>, transform_indices = @transform_9, window_bounds = array<i64: 2, 128, 128>}, {pipeline_mode = #tpu.pipeline_mode<synchronous>, transform_indices = @transform_10, window_bounds = array<i64: 2, 512, 128>}, {pipeline_mode = #tpu.pipeline_mode<synchronous>, transform_indices = @transform_11, window_bounds = array<i64: 1, 128>}, {pipeline_mode = #tpu.pipeline_mode<synchronous>, transform_indices = @transform_12, window_bounds = array<i64: 1, 128>}, {pipeline_mode = #tpu.pipeline_mode<synchronous>, transform_indices = @transform_13, window_bounds = array<i64: 128, 256>}, {transform_indices = @transform_14, window_bounds = array<i64: 1, 2, 256>}]} {
    %c0 = arith.constant 0 : index
    %c0_0 = arith.constant 0 : index
    %c0_1 = arith.constant 0 : index
    %0 = vector.load %arg1[%c0, %c0_0, %c0_1] : memref<2x8x128xf32, #tpu.memory_space<vmem>>, vector<2x8x128xf32>
    %1 = vector.shape_cast %0 : vector<2x8x128xf32> to vector<16x128xf32>
    %c0_2 = arith.constant 0 : index
    %c0_3 = arith.constant 0 : index
    %2 = vector.load %arg3[%c0_2, %c0_3] : memref<32x16xf32, #tpu.memory_space<vmem>>, vector<32x16xf32>
    %c0_4 = arith.constant 0 : index
    %c0_5 = arith.constant 0 : index
    %3 = vector.load %arg4[%c0_4, %c0_5] : memref<32x16xf32, #tpu.memory_space<vmem>>, vector<32x16xf32>
    %c0_6 = arith.constant 0 : index
    %c0_7 = arith.constant 0 : index
    %4 = vector.load %arg5[%c0_6, %c0_7] : memref<8x16xf32, #tpu.memory_space<vmem>>, vector<8x16xf32>
    %c0_8 = arith.constant 0 : index
    %c0_9 = arith.constant 0 : index
    %5 = vector.load %arg6[%c0_8, %c0_9] : memref<8x16xf32, #tpu.memory_space<vmem>>, vector<8x16xf32>
    %6 = tpu.iota {dimensions = array<i32: 0>} : vector<8x8xi32>
    %7 = tpu.iota {dimensions = array<i32: 1>} : vector<8x8xi32>
    %8 = arith.cmpi sle, %7, %6 : vector<8x8xi32>
    %c0_10 = arith.constant 0 : index
    %c0_11 = arith.constant 0 : index
    %c0_12 = arith.constant 0 : index
    %9 = vector.load %arg2[%c0_10, %c0_11, %c0_12] : memref<2x1x8xf32, #tpu.memory_space<vmem>>, vector<1x1x8xf32>
    %10 = vector.shape_cast %9 : vector<1x1x8xf32> to vector<1x8xf32>
    %cst = arith.constant 5.000000e-01 : f32
    %11 = vector.broadcast %cst : f32 to vector<1x8xf32>
    %12 = arith.cmpf ogt, %10, %11 : vector<1x8xf32>
    %13 = vector.broadcast %12 : vector<1x8xi1> to vector<8x8xi1>
    %14 = arith.andi %8, %13 : vector<8x8xi1>
    %cst_13 = arith.constant 0.000000e+00 : f32
    %cst_14 = arith.constant -1.000000e+09 : f32
    %15 = vector.broadcast %cst_13 : f32 to vector<8x8xf32>
    %16 = vector.broadcast %cst_14 : f32 to vector<8x8xf32>
    %17 = arith.select %14, %15, %16 : vector<8x8xi1>, vector<8x8xf32>
    %18 = tpu.concatenate %17, %17, %17, %17 in 0 : vector<8x8xf32>, vector<8x8xf32>, vector<8x8xf32>, vector<8x8xf32> -> vector<32x8xf32>
    %c1 = arith.constant 1 : index
    %c0_15 = arith.constant 0 : index
    %c0_16 = arith.constant 0 : index
    %19 = vector.load %arg2[%c1, %c0_15, %c0_16] : memref<2x1x8xf32, #tpu.memory_space<vmem>>, vector<1x1x8xf32>
    %20 = vector.shape_cast %19 : vector<1x1x8xf32> to vector<1x8xf32>
    %cst_17 = arith.constant 5.000000e-01 : f32
    %21 = vector.broadcast %cst_17 : f32 to vector<1x8xf32>
    %22 = arith.cmpf ogt, %20, %21 : vector<1x8xf32>
    %23 = vector.broadcast %22 : vector<1x8xi1> to vector<8x8xi1>
    %24 = arith.andi %8, %23 : vector<8x8xi1>
    %cst_18 = arith.constant 0.000000e+00 : f32
    %cst_19 = arith.constant -1.000000e+09 : f32
    %25 = vector.broadcast %cst_18 : f32 to vector<8x8xf32>
    %26 = vector.broadcast %cst_19 : f32 to vector<8x8xf32>
    %27 = arith.select %24, %25, %26 : vector<8x8xi1>, vector<8x8xf32>
    %28 = tpu.concatenate %27, %27, %27, %27 in 0 : vector<8x8xf32>, vector<8x8xf32>, vector<8x8xf32>, vector<8x8xf32> -> vector<32x8xf32>
    %c0_20 = arith.constant 0 : index
    %c0_21 = arith.constant 0 : index
    %c0_22 = arith.constant 0 : index
    %29 = vector.load %arg7[%c0_20, %c0_21, %c0_22] : memref<2x1x128xf32, #tpu.memory_space<vmem>>, vector<1x1x128xf32>
    %30 = vector.shape_cast %29 : vector<1x1x128xf32> to vector<1x128xf32>
    %c0_23 = arith.constant 0 : index
    %c0_24 = arith.constant 0 : index
    %c0_25 = arith.constant 0 : index
    %31 = vector.load %arg8[%c0_23, %c0_24, %c0_25] : memref<2x1x128xf32, #tpu.memory_space<vmem>>, vector<1x1x128xf32>
    %32 = vector.shape_cast %31 : vector<1x1x128xf32> to vector<1x128xf32>
    %cst_26 = arith.constant dense<0.000000e+00> : vector<16xf32>
    %33 = vector.multi_reduction <add>, %1, %cst_26 [1] : vector<16x128xf32> to vector<16xf32>
    %34 = vector.shape_cast %33 : vector<16xf32> to vector<16x1xf32>
    %cst_27 = arith.constant 1.280000e+02 : f32
    %35 = vector.broadcast %cst_27 : f32 to vector<16x1xf32>
    %36 = arith.divf %34, %35 : vector<16x1xf32>
    %37 = vector.broadcast %36 : vector<16x1xf32> to vector<16x128xf32>
    %38 = arith.subf %1, %37 : vector<16x128xf32>
    %39 = arith.mulf %38, %38 : vector<16x128xf32>
    %cst_28 = arith.constant dense<0.000000e+00> : vector<16xf32>
    %40 = vector.multi_reduction <add>, %39, %cst_28 [1] : vector<16x128xf32> to vector<16xf32>
    %41 = vector.shape_cast %40 : vector<16xf32> to vector<16x1xf32>
    %cst_29 = arith.constant 1.280000e+02 : f32
    %42 = vector.broadcast %cst_29 : f32 to vector<16x1xf32>
    %43 = arith.divf %41, %42 : vector<16x1xf32>
    %44 = vector.broadcast %36 : vector<16x1xf32> to vector<16x128xf32>
    %45 = arith.subf %1, %44 : vector<16x128xf32>
    %cst_30 = arith.constant 9.99999974E-6 : f32
    %46 = vector.broadcast %cst_30 : f32 to vector<16x1xf32>
    %47 = arith.addf %43, %46 : vector<16x1xf32>
    %48 = math.rsqrt %47 : vector<16x1xf32>
    %49 = vector.broadcast %48 : vector<16x1xf32> to vector<16x128xf32>
    %50 = arith.mulf %45, %49 : vector<16x128xf32>
    %51 = vector.broadcast %30 : vector<1x128xf32> to vector<16x128xf32>
    %52 = arith.mulf %50, %51 : vector<16x128xf32>
    %53 = vector.broadcast %32 : vector<1x128xf32> to vector<16x128xf32>
    %54 = arith.addf %52, %53 : vector<16x128xf32>
    %55 = arith.truncf %54 : vector<16x128xf32> to vector<16x128xbf16>
    %c0_31 = arith.constant 0 : index
    %c0_32 = arith.constant 0 : index
    %c0_33 = arith.constant 0 : index
    %56 = vector.load %arg9[%c0_31, %c0_32, %c0_33] : memref<2x128x768xbf16, #tpu.memory_space<vmem>>, vector<1x128x768xbf16>
    %57 = vector.shape_cast %56 : vector<1x128x768xbf16> to vector<128x768xbf16>
    %cst_34 = arith.constant dense<0.000000e+00> : vector<16x768xf32>
    %58 = tpu.matmul %55, %57, %cst_34 {dimension_numbers = #tpu.dot_dimension_numbers<[1], [0], [0], [1], [0, 0, 1, 1], [], []>} : vector<16x128xbf16>, vector<128x768xbf16>, vector<16x768xf32> -> vector<16x768xf32>
    %59 = vector.extract_strided_slice %58 {offsets = [0, 0], sizes = [8, 768], strides = [1, 1]} : vector<16x768xf32> to vector<8x768xf32>
    %60 = vector.extract_strided_slice %59 {offsets = [0, 0], sizes = [8, 32], strides = [1, 1]} : vector<8x768xf32> to vector<8x32xf32>
    %61 = vector.extract_strided_slice %59 {offsets = [0, 32], sizes = [8, 32], strides = [1, 1]} : vector<8x768xf32> to vector<8x32xf32>
    %62 = vector.extract_strided_slice %59 {offsets = [0, 64], sizes = [8, 32], strides = [1, 1]} : vector<8x768xf32> to vector<8x32xf32>
    %63 = vector.extract_strided_slice %59 {offsets = [0, 96], sizes = [8, 32], strides = [1, 1]} : vector<8x768xf32> to vector<8x32xf32>
    %64 = tpu.concatenate %60, %61, %62, %63 in 0 : vector<8x32xf32>, vector<8x32xf32>, vector<8x32xf32>, vector<8x32xf32> -> vector<32x32xf32>
    %65 = vector.extract_strided_slice %64 {offsets = [0, 0], sizes = [32, 16], strides = [1, 1]} : vector<32x32xf32> to vector<32x16xf32>
    %66 = vector.extract_strided_slice %64 {offsets = [0, 16], sizes = [32, 16], strides = [1, 1]} : vector<32x32xf32> to vector<32x16xf32>
    %67 = arith.mulf %65, %2 : vector<32x16xf32>
    %68 = arith.mulf %66, %3 : vector<32x16xf32>
    %69 = arith.subf %67, %68 : vector<32x16xf32>
    %70 = arith.mulf %66, %2 : vector<32x16xf32>
    %71 = arith.mulf %65, %3 : vector<32x16xf32>
    %72 = arith.addf %70, %71 : vector<32x16xf32>
    %73 = tpu.concatenate %69, %72 in 1 : vector<32x16xf32>, vector<32x16xf32> -> vector<32x32xf32>
    %74 = arith.truncf %73 : vector<32x32xf32> to vector<32x32xbf16>
    %75 = vector.extract_strided_slice %59 {offsets = [0, 128], sizes = [8, 32], strides = [1, 1]} : vector<8x768xf32> to vector<8x32xf32>
    %76 = vector.extract_strided_slice %75 {offsets = [0, 0], sizes = [8, 16], strides = [1, 1]} : vector<8x32xf32> to vector<8x16xf32>
    %77 = vector.extract_strided_slice %75 {offsets = [0, 16], sizes = [8, 16], strides = [1, 1]} : vector<8x32xf32> to vector<8x16xf32>
    %78 = arith.mulf %76, %4 : vector<8x16xf32>
    %79 = arith.mulf %77, %5 : vector<8x16xf32>
    %80 = arith.subf %78, %79 : vector<8x16xf32>
    %81 = arith.mulf %77, %4 : vector<8x16xf32>
    %82 = arith.mulf %76, %5 : vector<8x16xf32>
    %83 = arith.addf %81, %82 : vector<8x16xf32>
    %84 = tpu.concatenate %80, %83 in 1 : vector<8x16xf32>, vector<8x16xf32> -> vector<8x32xf32>
    %85 = arith.truncf %84 : vector<8x32xf32> to vector<8x32xbf16>
    %86 = vector.extract_strided_slice %59 {offsets = [0, 160], sizes = [8, 32], strides = [1, 1]} : vector<8x768xf32> to vector<8x32xf32>
    %87 = arith.truncf %86 : vector<8x32xf32> to vector<8x32xbf16>
    %cst_35 = arith.constant dense<0.000000e+00> : vector<32x8xf32>
    %88 = tpu.matmul %74, %85, %cst_35 {dimension_numbers = #tpu.dot_dimension_numbers<[1], [1], [0], [0], [0, 0, 1, 0], [], []>} : vector<32x32xbf16>, vector<8x32xbf16>, vector<32x8xf32> -> vector<32x8xf32>
    %cst_36 = arith.constant 0.176776692 : f32
    %89 = vector.broadcast %cst_36 : f32 to vector<32x8xf32>
    %90 = arith.mulf %88, %89 : vector<32x8xf32>
    %91 = arith.addf %90, %18 : vector<32x8xf32>
    %cst_37 = arith.constant dense<0xFF800000> : vector<32xf32>
    %92 = vector.multi_reduction <maximumf>, %91, %cst_37 [1] : vector<32x8xf32> to vector<32xf32>
    %93 = vector.shape_cast %92 : vector<32xf32> to vector<32x1xf32>
    %94 = vector.broadcast %93 : vector<32x1xf32> to vector<32x8xf32>
    %95 = arith.subf %91, %94 : vector<32x8xf32>
    %96 = math.exp %95 : vector<32x8xf32>
    %cst_38 = arith.constant dense<0.000000e+00> : vector<32xf32>
    %97 = vector.multi_reduction <add>, %96, %cst_38 [1] : vector<32x8xf32> to vector<32xf32>
    %98 = vector.shape_cast %97 : vector<32xf32> to vector<32x1xf32>
    %99 = tpu.reciprocal %98 {approx = true} : vector<32x1xf32> -> vector<32x1xf32>
    %100 = vector.broadcast %99 : vector<32x1xf32> to vector<32x8xf32>
    %101 = arith.mulf %96, %100 : vector<32x8xf32>
    %102 = arith.truncf %101 : vector<32x8xf32> to vector<32x8xbf16>
    %cst_39 = arith.constant dense<0.000000e+00> : vector<32x32xf32>
    %103 = tpu.matmul %102, %87, %cst_39 {dimension_numbers = #tpu.dot_dimension_numbers<[1], [0], [0], [1], [0, 0, 1, 1], [], []>} : vector<32x8xbf16>, vector<8x32xbf16>, vector<32x32xf32> -> vector<32x32xf32>
    %104 = vector.extract_strided_slice %103 {offsets = [0, 0], sizes = [8, 32], strides = [1, 1]} : vector<32x32xf32> to vector<8x32xf32>
    %105 = vector.extract_strided_slice %103 {offsets = [8, 0], sizes = [8, 32], strides = [1, 1]} : vector<32x32xf32> to vector<8x32xf32>
    %106 = vector.extract_strided_slice %103 {offsets = [16, 0], sizes = [8, 32], strides = [1, 1]} : vector<32x32xf32> to vector<8x32xf32>
    %107 = vector.extract_strided_slice %103 {offsets = [24, 0], sizes = [8, 32], strides = [1, 1]} : vector<32x32xf32> to vector<8x32xf32>
    %108 = tpu.concatenate %104, %105, %106, %107 in 1 : vector<8x32xf32>, vector<8x32xf32>, vector<8x32xf32>, vector<8x32xf32> -> vector<8x128xf32>
    %109 = vector.extract_strided_slice %58 {offsets = [8, 0], sizes = [8, 768], strides = [1, 1]} : vector<16x768xf32> to vector<8x768xf32>
    %110 = vector.extract_strided_slice %109 {offsets = [0, 0], sizes = [8, 32], strides = [1, 1]} : vector<8x768xf32> to vector<8x32xf32>
    %111 = vector.extract_strided_slice %109 {offsets = [0, 32], sizes = [8, 32], strides = [1, 1]} : vector<8x768xf32> to vector<8x32xf32>
    %112 = vector.extract_strided_slice %109 {offsets = [0, 64], sizes = [8, 32], strides = [1, 1]} : vector<8x768xf32> to vector<8x32xf32>
    %113 = vector.extract_strided_slice %109 {offsets = [0, 96], sizes = [8, 32], strides = [1, 1]} : vector<8x768xf32> to vector<8x32xf32>
    %114 = tpu.concatenate %110, %111, %112, %113 in 0 : vector<8x32xf32>, vector<8x32xf32>, vector<8x32xf32>, vector<8x32xf32> -> vector<32x32xf32>
    %115 = vector.extract_strided_slice %114 {offsets = [0, 0], sizes = [32, 16], strides = [1, 1]} : vector<32x32xf32> to vector<32x16xf32>
    %116 = vector.extract_strided_slice %114 {offsets = [0, 16], sizes = [32, 16], strides = [1, 1]} : vector<32x32xf32> to vector<32x16xf32>
    %117 = arith.mulf %115, %2 : vector<32x16xf32>
    %118 = arith.mulf %116, %3 : vector<32x16xf32>
    %119 = arith.subf %117, %118 : vector<32x16xf32>
    %120 = arith.mulf %116, %2 : vector<32x16xf32>
    %121 = arith.mulf %115, %3 : vector<32x16xf32>
    %122 = arith.addf %120, %121 : vector<32x16xf32>
    %123 = tpu.concatenate %119, %122 in 1 : vector<32x16xf32>, vector<32x16xf32> -> vector<32x32xf32>
    %124 = arith.truncf %123 : vector<32x32xf32> to vector<32x32xbf16>
    %125 = vector.extract_strided_slice %109 {offsets = [0, 128], sizes = [8, 32], strides = [1, 1]} : vector<8x768xf32> to vector<8x32xf32>
    %126 = vector.extract_strided_slice %125 {offsets = [0, 0], sizes = [8, 16], strides = [1, 1]} : vector<8x32xf32> to vector<8x16xf32>
    %127 = vector.extract_strided_slice %125 {offsets = [0, 16], sizes = [8, 16], strides = [1, 1]} : vector<8x32xf32> to vector<8x16xf32>
    %128 = arith.mulf %126, %4 : vector<8x16xf32>
    %129 = arith.mulf %127, %5 : vector<8x16xf32>
    %130 = arith.subf %128, %129 : vector<8x16xf32>
    %131 = arith.mulf %127, %4 : vector<8x16xf32>
    %132 = arith.mulf %126, %5 : vector<8x16xf32>
    %133 = arith.addf %131, %132 : vector<8x16xf32>
    %134 = tpu.concatenate %130, %133 in 1 : vector<8x16xf32>, vector<8x16xf32> -> vector<8x32xf32>
    %135 = arith.truncf %134 : vector<8x32xf32> to vector<8x32xbf16>
    %136 = vector.extract_strided_slice %109 {offsets = [0, 160], sizes = [8, 32], strides = [1, 1]} : vector<8x768xf32> to vector<8x32xf32>
    %137 = arith.truncf %136 : vector<8x32xf32> to vector<8x32xbf16>
    %cst_40 = arith.constant dense<0.000000e+00> : vector<32x8xf32>
    %138 = tpu.matmul %124, %135, %cst_40 {dimension_numbers = #tpu.dot_dimension_numbers<[1], [1], [0], [0], [0, 0, 1, 0], [], []>} : vector<32x32xbf16>, vector<8x32xbf16>, vector<32x8xf32> -> vector<32x8xf32>
    %cst_41 = arith.constant 0.176776692 : f32
    %139 = vector.broadcast %cst_41 : f32 to vector<32x8xf32>
    %140 = arith.mulf %138, %139 : vector<32x8xf32>
    %141 = arith.addf %140, %28 : vector<32x8xf32>
    %cst_42 = arith.constant dense<0xFF800000> : vector<32xf32>
    %142 = vector.multi_reduction <maximumf>, %141, %cst_42 [1] : vector<32x8xf32> to vector<32xf32>
    %143 = vector.shape_cast %142 : vector<32xf32> to vector<32x1xf32>
    %144 = vector.broadcast %143 : vector<32x1xf32> to vector<32x8xf32>
    %145 = arith.subf %141, %144 : vector<32x8xf32>
    %146 = math.exp %145 : vector<32x8xf32>
    %cst_43 = arith.constant dense<0.000000e+00> : vector<32xf32>
    %147 = vector.multi_reduction <add>, %146, %cst_43 [1] : vector<32x8xf32> to vector<32xf32>
    %148 = vector.shape_cast %147 : vector<32xf32> to vector<32x1xf32>
    %149 = tpu.reciprocal %148 {approx = true} : vector<32x1xf32> -> vector<32x1xf32>
    %150 = vector.broadcast %149 : vector<32x1xf32> to vector<32x8xf32>
    %151 = arith.mulf %146, %150 : vector<32x8xf32>
    %152 = arith.truncf %151 : vector<32x8xf32> to vector<32x8xbf16>
    %cst_44 = arith.constant dense<0.000000e+00> : vector<32x32xf32>
    %153 = tpu.matmul %152, %137, %cst_44 {dimension_numbers = #tpu.dot_dimension_numbers<[1], [0], [0], [1], [0, 0, 1, 1], [], []>} : vector<32x8xbf16>, vector<8x32xbf16>, vector<32x32xf32> -> vector<32x32xf32>
    %154 = vector.extract_strided_slice %153 {offsets = [0, 0], sizes = [8, 32], strides = [1, 1]} : vector<32x32xf32> to vector<8x32xf32>
    %155 = vector.extract_strided_slice %153 {offsets = [8, 0], sizes = [8, 32], strides = [1, 1]} : vector<32x32xf32> to vector<8x32xf32>
    %156 = vector.extract_strided_slice %153 {offsets = [16, 0], sizes = [8, 32], strides = [1, 1]} : vector<32x32xf32> to vector<8x32xf32>
    %157 = vector.extract_strided_slice %153 {offsets = [24, 0], sizes = [8, 32], strides = [1, 1]} : vector<32x32xf32> to vector<8x32xf32>
    %158 = tpu.concatenate %154, %155, %156, %157 in 1 : vector<8x32xf32>, vector<8x32xf32>, vector<8x32xf32>, vector<8x32xf32> -> vector<8x128xf32>
    %159 = tpu.concatenate %108, %158 in 0 : vector<8x128xf32>, vector<8x128xf32> -> vector<16x128xf32>
    %160 = arith.truncf %159 : vector<16x128xf32> to vector<16x128xbf16>
    %c0_45 = arith.constant 0 : index
    %c0_46 = arith.constant 0 : index
    %c0_47 = arith.constant 0 : index
    %161 = vector.load %arg10[%c0_45, %c0_46, %c0_47] : memref<2x128x128xbf16, #tpu.memory_space<vmem>>, vector<1x128x128xbf16>
    %162 = vector.shape_cast %161 : vector<1x128x128xbf16> to vector<128x128xbf16>
    %cst_48 = arith.constant dense<0.000000e+00> : vector<16x128xf32>
    %163 = tpu.matmul %160, %162, %cst_48 {dimension_numbers = #tpu.dot_dimension_numbers<[1], [0], [0], [1], [0, 0, 1, 1], [], []>} : vector<16x128xbf16>, vector<128x128xbf16>, vector<16x128xf32> -> vector<16x128xf32>
    %164 = vector.extract_strided_slice %58 {offsets = [0, 256], sizes = [16, 512], strides = [1, 1]} : vector<16x768xf32> to vector<16x512xf32>
    %cst_49 = arith.constant 5.000000e-01 : f32
    %165 = vector.broadcast %cst_49 : f32 to vector<16x512xf32>
    %166 = arith.mulf %165, %164 : vector<16x512xf32>
    %cst_50 = arith.constant 4.471500e-02 : f32
    %167 = vector.broadcast %cst_50 : f32 to vector<16x512xf32>
    %168 = arith.mulf %167, %164 : vector<16x512xf32>
    %169 = arith.mulf %168, %164 : vector<16x512xf32>
    %170 = arith.mulf %169, %164 : vector<16x512xf32>
    %171 = arith.addf %164, %170 : vector<16x512xf32>
    %cst_51 = arith.constant 0.797884583 : f32
    %172 = vector.broadcast %cst_51 : f32 to vector<16x512xf32>
    %173 = arith.mulf %172, %171 : vector<16x512xf32>
    %174 = math.tanh %173 : vector<16x512xf32>
    %cst_52 = arith.constant 1.000000e+00 : f32
    %175 = vector.broadcast %cst_52 : f32 to vector<16x512xf32>
    %176 = arith.addf %175, %174 : vector<16x512xf32>
    %177 = arith.mulf %166, %176 : vector<16x512xf32>
    %178 = arith.truncf %177 : vector<16x512xf32> to vector<16x512xbf16>
    %c0_53 = arith.constant 0 : index
    %c0_54 = arith.constant 0 : index
    %c0_55 = arith.constant 0 : index
    %179 = vector.load %arg11[%c0_53, %c0_54, %c0_55] : memref<2x512x128xbf16, #tpu.memory_space<vmem>>, vector<1x512x128xbf16>
    %180 = vector.shape_cast %179 : vector<1x512x128xbf16> to vector<512x128xbf16>
    %cst_56 = arith.constant dense<0.000000e+00> : vector<16x128xf32>
    %181 = tpu.matmul %178, %180, %cst_56 {dimension_numbers = #tpu.dot_dimension_numbers<[1], [0], [0], [1], [0, 0, 1, 1], [], []>} : vector<16x512xbf16>, vector<512x128xbf16>, vector<16x128xf32> -> vector<16x128xf32>
    %182 = arith.addf %1, %163 : vector<16x128xf32>
    %183 = arith.addf %182, %181 : vector<16x128xf32>
    %c1_57 = arith.constant 1 : index
    %c0_58 = arith.constant 0 : index
    %c0_59 = arith.constant 0 : index
    %184 = vector.load %arg7[%c1_57, %c0_58, %c0_59] : memref<2x1x128xf32, #tpu.memory_space<vmem>>, vector<1x1x128xf32>
    %185 = vector.shape_cast %184 : vector<1x1x128xf32> to vector<1x128xf32>
    %c1_60 = arith.constant 1 : index
    %c0_61 = arith.constant 0 : index
    %c0_62 = arith.constant 0 : index
    %186 = vector.load %arg8[%c1_60, %c0_61, %c0_62] : memref<2x1x128xf32, #tpu.memory_space<vmem>>, vector<1x1x128xf32>
    %187 = vector.shape_cast %186 : vector<1x1x128xf32> to vector<1x128xf32>
    %cst_63 = arith.constant dense<0.000000e+00> : vector<16xf32>
    %188 = vector.multi_reduction <add>, %183, %cst_63 [1] : vector<16x128xf32> to vector<16xf32>
    %189 = vector.shape_cast %188 : vector<16xf32> to vector<16x1xf32>
    %cst_64 = arith.constant 1.280000e+02 : f32
    %190 = vector.broadcast %cst_64 : f32 to vector<16x1xf32>
    %191 = arith.divf %189, %190 : vector<16x1xf32>
    %192 = vector.broadcast %191 : vector<16x1xf32> to vector<16x128xf32>
    %193 = arith.subf %183, %192 : vector<16x128xf32>
    %194 = arith.mulf %193, %193 : vector<16x128xf32>
    %cst_65 = arith.constant dense<0.000000e+00> : vector<16xf32>
    %195 = vector.multi_reduction <add>, %194, %cst_65 [1] : vector<16x128xf32> to vector<16xf32>
    %196 = vector.shape_cast %195 : vector<16xf32> to vector<16x1xf32>
    %cst_66 = arith.constant 1.280000e+02 : f32
    %197 = vector.broadcast %cst_66 : f32 to vector<16x1xf32>
    %198 = arith.divf %196, %197 : vector<16x1xf32>
    %199 = vector.broadcast %191 : vector<16x1xf32> to vector<16x128xf32>
    %200 = arith.subf %183, %199 : vector<16x128xf32>
    %cst_67 = arith.constant 9.99999974E-6 : f32
    %201 = vector.broadcast %cst_67 : f32 to vector<16x1xf32>
    %202 = arith.addf %198, %201 : vector<16x1xf32>
    %203 = math.rsqrt %202 : vector<16x1xf32>
    %204 = vector.broadcast %203 : vector<16x1xf32> to vector<16x128xf32>
    %205 = arith.mulf %200, %204 : vector<16x128xf32>
    %206 = vector.broadcast %185 : vector<1x128xf32> to vector<16x128xf32>
    %207 = arith.mulf %205, %206 : vector<16x128xf32>
    %208 = vector.broadcast %187 : vector<1x128xf32> to vector<16x128xf32>
    %209 = arith.addf %207, %208 : vector<16x128xf32>
    %210 = arith.truncf %209 : vector<16x128xf32> to vector<16x128xbf16>
    %c1_68 = arith.constant 1 : index
    %c0_69 = arith.constant 0 : index
    %c0_70 = arith.constant 0 : index
    %211 = vector.load %arg9[%c1_68, %c0_69, %c0_70] : memref<2x128x768xbf16, #tpu.memory_space<vmem>>, vector<1x128x768xbf16>
    %212 = vector.shape_cast %211 : vector<1x128x768xbf16> to vector<128x768xbf16>
    %cst_71 = arith.constant dense<0.000000e+00> : vector<16x768xf32>
    %213 = tpu.matmul %210, %212, %cst_71 {dimension_numbers = #tpu.dot_dimension_numbers<[1], [0], [0], [1], [0, 0, 1, 1], [], []>} : vector<16x128xbf16>, vector<128x768xbf16>, vector<16x768xf32> -> vector<16x768xf32>
    %214 = vector.extract_strided_slice %213 {offsets = [0, 0], sizes = [8, 768], strides = [1, 1]} : vector<16x768xf32> to vector<8x768xf32>
    %215 = vector.extract_strided_slice %214 {offsets = [0, 0], sizes = [8, 32], strides = [1, 1]} : vector<8x768xf32> to vector<8x32xf32>
    %216 = vector.extract_strided_slice %214 {offsets = [0, 32], sizes = [8, 32], strides = [1, 1]} : vector<8x768xf32> to vector<8x32xf32>
    %217 = vector.extract_strided_slice %214 {offsets = [0, 64], sizes = [8, 32], strides = [1, 1]} : vector<8x768xf32> to vector<8x32xf32>
    %218 = vector.extract_strided_slice %214 {offsets = [0, 96], sizes = [8, 32], strides = [1, 1]} : vector<8x768xf32> to vector<8x32xf32>
    %219 = tpu.concatenate %215, %216, %217, %218 in 0 : vector<8x32xf32>, vector<8x32xf32>, vector<8x32xf32>, vector<8x32xf32> -> vector<32x32xf32>
    %220 = vector.extract_strided_slice %219 {offsets = [0, 0], sizes = [32, 16], strides = [1, 1]} : vector<32x32xf32> to vector<32x16xf32>
    %221 = vector.extract_strided_slice %219 {offsets = [0, 16], sizes = [32, 16], strides = [1, 1]} : vector<32x32xf32> to vector<32x16xf32>
    %222 = arith.mulf %220, %2 : vector<32x16xf32>
    %223 = arith.mulf %221, %3 : vector<32x16xf32>
    %224 = arith.subf %222, %223 : vector<32x16xf32>
    %225 = arith.mulf %221, %2 : vector<32x16xf32>
    %226 = arith.mulf %220, %3 : vector<32x16xf32>
    %227 = arith.addf %225, %226 : vector<32x16xf32>
    %228 = tpu.concatenate %224, %227 in 1 : vector<32x16xf32>, vector<32x16xf32> -> vector<32x32xf32>
    %229 = arith.truncf %228 : vector<32x32xf32> to vector<32x32xbf16>
    %230 = vector.extract_strided_slice %214 {offsets = [0, 128], sizes = [8, 32], strides = [1, 1]} : vector<8x768xf32> to vector<8x32xf32>
    %231 = vector.extract_strided_slice %230 {offsets = [0, 0], sizes = [8, 16], strides = [1, 1]} : vector<8x32xf32> to vector<8x16xf32>
    %232 = vector.extract_strided_slice %230 {offsets = [0, 16], sizes = [8, 16], strides = [1, 1]} : vector<8x32xf32> to vector<8x16xf32>
    %233 = arith.mulf %231, %4 : vector<8x16xf32>
    %234 = arith.mulf %232, %5 : vector<8x16xf32>
    %235 = arith.subf %233, %234 : vector<8x16xf32>
    %236 = arith.mulf %232, %4 : vector<8x16xf32>
    %237 = arith.mulf %231, %5 : vector<8x16xf32>
    %238 = arith.addf %236, %237 : vector<8x16xf32>
    %239 = tpu.concatenate %235, %238 in 1 : vector<8x16xf32>, vector<8x16xf32> -> vector<8x32xf32>
    %240 = arith.truncf %239 : vector<8x32xf32> to vector<8x32xbf16>
    %241 = vector.extract_strided_slice %214 {offsets = [0, 160], sizes = [8, 32], strides = [1, 1]} : vector<8x768xf32> to vector<8x32xf32>
    %242 = arith.truncf %241 : vector<8x32xf32> to vector<8x32xbf16>
    %cst_72 = arith.constant dense<0.000000e+00> : vector<32x8xf32>
    %243 = tpu.matmul %229, %240, %cst_72 {dimension_numbers = #tpu.dot_dimension_numbers<[1], [1], [0], [0], [0, 0, 1, 0], [], []>} : vector<32x32xbf16>, vector<8x32xbf16>, vector<32x8xf32> -> vector<32x8xf32>
    %cst_73 = arith.constant 0.176776692 : f32
    %244 = vector.broadcast %cst_73 : f32 to vector<32x8xf32>
    %245 = arith.mulf %243, %244 : vector<32x8xf32>
    %246 = arith.addf %245, %18 : vector<32x8xf32>
    %cst_74 = arith.constant dense<0xFF800000> : vector<32xf32>
    %247 = vector.multi_reduction <maximumf>, %246, %cst_74 [1] : vector<32x8xf32> to vector<32xf32>
    %248 = vector.shape_cast %247 : vector<32xf32> to vector<32x1xf32>
    %249 = vector.broadcast %248 : vector<32x1xf32> to vector<32x8xf32>
    %250 = arith.subf %246, %249 : vector<32x8xf32>
    %251 = math.exp %250 : vector<32x8xf32>
    %cst_75 = arith.constant dense<0.000000e+00> : vector<32xf32>
    %252 = vector.multi_reduction <add>, %251, %cst_75 [1] : vector<32x8xf32> to vector<32xf32>
    %253 = vector.shape_cast %252 : vector<32xf32> to vector<32x1xf32>
    %254 = tpu.reciprocal %253 {approx = true} : vector<32x1xf32> -> vector<32x1xf32>
    %255 = vector.broadcast %254 : vector<32x1xf32> to vector<32x8xf32>
    %256 = arith.mulf %251, %255 : vector<32x8xf32>
    %257 = arith.truncf %256 : vector<32x8xf32> to vector<32x8xbf16>
    %cst_76 = arith.constant dense<0.000000e+00> : vector<32x32xf32>
    %258 = tpu.matmul %257, %242, %cst_76 {dimension_numbers = #tpu.dot_dimension_numbers<[1], [0], [0], [1], [0, 0, 1, 1], [], []>} : vector<32x8xbf16>, vector<8x32xbf16>, vector<32x32xf32> -> vector<32x32xf32>
    %259 = vector.extract_strided_slice %258 {offsets = [0, 0], sizes = [8, 32], strides = [1, 1]} : vector<32x32xf32> to vector<8x32xf32>
    %260 = vector.extract_strided_slice %258 {offsets = [8, 0], sizes = [8, 32], strides = [1, 1]} : vector<32x32xf32> to vector<8x32xf32>
    %261 = vector.extract_strided_slice %258 {offsets = [16, 0], sizes = [8, 32], strides = [1, 1]} : vector<32x32xf32> to vector<8x32xf32>
    %262 = vector.extract_strided_slice %258 {offsets = [24, 0], sizes = [8, 32], strides = [1, 1]} : vector<32x32xf32> to vector<8x32xf32>
    %263 = tpu.concatenate %259, %260, %261, %262 in 1 : vector<8x32xf32>, vector<8x32xf32>, vector<8x32xf32>, vector<8x32xf32> -> vector<8x128xf32>
    %264 = vector.extract_strided_slice %213 {offsets = [8, 0], sizes = [8, 768], strides = [1, 1]} : vector<16x768xf32> to vector<8x768xf32>
    %265 = vector.extract_strided_slice %264 {offsets = [0, 0], sizes = [8, 32], strides = [1, 1]} : vector<8x768xf32> to vector<8x32xf32>
    %266 = vector.extract_strided_slice %264 {offsets = [0, 32], sizes = [8, 32], strides = [1, 1]} : vector<8x768xf32> to vector<8x32xf32>
    %267 = vector.extract_strided_slice %264 {offsets = [0, 64], sizes = [8, 32], strides = [1, 1]} : vector<8x768xf32> to vector<8x32xf32>
    %268 = vector.extract_strided_slice %264 {offsets = [0, 96], sizes = [8, 32], strides = [1, 1]} : vector<8x768xf32> to vector<8x32xf32>
    %269 = tpu.concatenate %265, %266, %267, %268 in 0 : vector<8x32xf32>, vector<8x32xf32>, vector<8x32xf32>, vector<8x32xf32> -> vector<32x32xf32>
    %270 = vector.extract_strided_slice %269 {offsets = [0, 0], sizes = [32, 16], strides = [1, 1]} : vector<32x32xf32> to vector<32x16xf32>
    %271 = vector.extract_strided_slice %269 {offsets = [0, 16], sizes = [32, 16], strides = [1, 1]} : vector<32x32xf32> to vector<32x16xf32>
    %272 = arith.mulf %270, %2 : vector<32x16xf32>
    %273 = arith.mulf %271, %3 : vector<32x16xf32>
    %274 = arith.subf %272, %273 : vector<32x16xf32>
    %275 = arith.mulf %271, %2 : vector<32x16xf32>
    %276 = arith.mulf %270, %3 : vector<32x16xf32>
    %277 = arith.addf %275, %276 : vector<32x16xf32>
    %278 = tpu.concatenate %274, %277 in 1 : vector<32x16xf32>, vector<32x16xf32> -> vector<32x32xf32>
    %279 = arith.truncf %278 : vector<32x32xf32> to vector<32x32xbf16>
    %280 = vector.extract_strided_slice %264 {offsets = [0, 128], sizes = [8, 32], strides = [1, 1]} : vector<8x768xf32> to vector<8x32xf32>
    %281 = vector.extract_strided_slice %280 {offsets = [0, 0], sizes = [8, 16], strides = [1, 1]} : vector<8x32xf32> to vector<8x16xf32>
    %282 = vector.extract_strided_slice %280 {offsets = [0, 16], sizes = [8, 16], strides = [1, 1]} : vector<8x32xf32> to vector<8x16xf32>
    %283 = arith.mulf %281, %4 : vector<8x16xf32>
    %284 = arith.mulf %282, %5 : vector<8x16xf32>
    %285 = arith.subf %283, %284 : vector<8x16xf32>
    %286 = arith.mulf %282, %4 : vector<8x16xf32>
    %287 = arith.mulf %281, %5 : vector<8x16xf32>
    %288 = arith.addf %286, %287 : vector<8x16xf32>
    %289 = tpu.concatenate %285, %288 in 1 : vector<8x16xf32>, vector<8x16xf32> -> vector<8x32xf32>
    %290 = arith.truncf %289 : vector<8x32xf32> to vector<8x32xbf16>
    %291 = vector.extract_strided_slice %264 {offsets = [0, 160], sizes = [8, 32], strides = [1, 1]} : vector<8x768xf32> to vector<8x32xf32>
    %292 = arith.truncf %291 : vector<8x32xf32> to vector<8x32xbf16>
    %cst_77 = arith.constant dense<0.000000e+00> : vector<32x8xf32>
    %293 = tpu.matmul %279, %290, %cst_77 {dimension_numbers = #tpu.dot_dimension_numbers<[1], [1], [0], [0], [0, 0, 1, 0], [], []>} : vector<32x32xbf16>, vector<8x32xbf16>, vector<32x8xf32> -> vector<32x8xf32>
    %cst_78 = arith.constant 0.176776692 : f32
    %294 = vector.broadcast %cst_78 : f32 to vector<32x8xf32>
    %295 = arith.mulf %293, %294 : vector<32x8xf32>
    %296 = arith.addf %295, %28 : vector<32x8xf32>
    %cst_79 = arith.constant dense<0xFF800000> : vector<32xf32>
    %297 = vector.multi_reduction <maximumf>, %296, %cst_79 [1] : vector<32x8xf32> to vector<32xf32>
    %298 = vector.shape_cast %297 : vector<32xf32> to vector<32x1xf32>
    %299 = vector.broadcast %298 : vector<32x1xf32> to vector<32x8xf32>
    %300 = arith.subf %296, %299 : vector<32x8xf32>
    %301 = math.exp %300 : vector<32x8xf32>
    %cst_80 = arith.constant dense<0.000000e+00> : vector<32xf32>
    %302 = vector.multi_reduction <add>, %301, %cst_80 [1] : vector<32x8xf32> to vector<32xf32>
    %303 = vector.shape_cast %302 : vector<32xf32> to vector<32x1xf32>
    %304 = tpu.reciprocal %303 {approx = true} : vector<32x1xf32> -> vector<32x1xf32>
    %305 = vector.broadcast %304 : vector<32x1xf32> to vector<32x8xf32>
    %306 = arith.mulf %301, %305 : vector<32x8xf32>
    %307 = arith.truncf %306 : vector<32x8xf32> to vector<32x8xbf16>
    %cst_81 = arith.constant dense<0.000000e+00> : vector<32x32xf32>
    %308 = tpu.matmul %307, %292, %cst_81 {dimension_numbers = #tpu.dot_dimension_numbers<[1], [0], [0], [1], [0, 0, 1, 1], [], []>} : vector<32x8xbf16>, vector<8x32xbf16>, vector<32x32xf32> -> vector<32x32xf32>
    %309 = vector.extract_strided_slice %308 {offsets = [0, 0], sizes = [8, 32], strides = [1, 1]} : vector<32x32xf32> to vector<8x32xf32>
    %310 = vector.extract_strided_slice %308 {offsets = [8, 0], sizes = [8, 32], strides = [1, 1]} : vector<32x32xf32> to vector<8x32xf32>
    %311 = vector.extract_strided_slice %308 {offsets = [16, 0], sizes = [8, 32], strides = [1, 1]} : vector<32x32xf32> to vector<8x32xf32>
    %312 = vector.extract_strided_slice %308 {offsets = [24, 0], sizes = [8, 32], strides = [1, 1]} : vector<32x32xf32> to vector<8x32xf32>
    %313 = tpu.concatenate %309, %310, %311, %312 in 1 : vector<8x32xf32>, vector<8x32xf32>, vector<8x32xf32>, vector<8x32xf32> -> vector<8x128xf32>
    %314 = tpu.concatenate %263, %313 in 0 : vector<8x128xf32>, vector<8x128xf32> -> vector<16x128xf32>
    %315 = arith.truncf %314 : vector<16x128xf32> to vector<16x128xbf16>
    %c1_82 = arith.constant 1 : index
    %c0_83 = arith.constant 0 : index
    %c0_84 = arith.constant 0 : index
    %316 = vector.load %arg10[%c1_82, %c0_83, %c0_84] : memref<2x128x128xbf16, #tpu.memory_space<vmem>>, vector<1x128x128xbf16>
    %317 = vector.shape_cast %316 : vector<1x128x128xbf16> to vector<128x128xbf16>
    %cst_85 = arith.constant dense<0.000000e+00> : vector<16x128xf32>
    %318 = tpu.matmul %315, %317, %cst_85 {dimension_numbers = #tpu.dot_dimension_numbers<[1], [0], [0], [1], [0, 0, 1, 1], [], []>} : vector<16x128xbf16>, vector<128x128xbf16>, vector<16x128xf32> -> vector<16x128xf32>
    %319 = vector.extract_strided_slice %213 {offsets = [0, 256], sizes = [16, 512], strides = [1, 1]} : vector<16x768xf32> to vector<16x512xf32>
    %cst_86 = arith.constant 5.000000e-01 : f32
    %320 = vector.broadcast %cst_86 : f32 to vector<16x512xf32>
    %321 = arith.mulf %320, %319 : vector<16x512xf32>
    %cst_87 = arith.constant 4.471500e-02 : f32
    %322 = vector.broadcast %cst_87 : f32 to vector<16x512xf32>
    %323 = arith.mulf %322, %319 : vector<16x512xf32>
    %324 = arith.mulf %323, %319 : vector<16x512xf32>
    %325 = arith.mulf %324, %319 : vector<16x512xf32>
    %326 = arith.addf %319, %325 : vector<16x512xf32>
    %cst_88 = arith.constant 0.797884583 : f32
    %327 = vector.broadcast %cst_88 : f32 to vector<16x512xf32>
    %328 = arith.mulf %327, %326 : vector<16x512xf32>
    %329 = math.tanh %328 : vector<16x512xf32>
    %cst_89 = arith.constant 1.000000e+00 : f32
    %330 = vector.broadcast %cst_89 : f32 to vector<16x512xf32>
    %331 = arith.addf %330, %329 : vector<16x512xf32>
    %332 = arith.mulf %321, %331 : vector<16x512xf32>
    %333 = arith.truncf %332 : vector<16x512xf32> to vector<16x512xbf16>
    %c1_90 = arith.constant 1 : index
    %c0_91 = arith.constant 0 : index
    %c0_92 = arith.constant 0 : index
    %334 = vector.load %arg11[%c1_90, %c0_91, %c0_92] : memref<2x512x128xbf16, #tpu.memory_space<vmem>>, vector<1x512x128xbf16>
    %335 = vector.shape_cast %334 : vector<1x512x128xbf16> to vector<512x128xbf16>
    %cst_93 = arith.constant dense<0.000000e+00> : vector<16x128xf32>
    %336 = tpu.matmul %333, %335, %cst_93 {dimension_numbers = #tpu.dot_dimension_numbers<[1], [0], [0], [1], [0, 0, 1, 1], [], []>} : vector<16x512xbf16>, vector<512x128xbf16>, vector<16x128xf32> -> vector<16x128xf32>
    %337 = arith.addf %183, %318 : vector<16x128xf32>
    %338 = arith.addf %337, %336 : vector<16x128xf32>
    %339 = vector.extract_strided_slice %338 {offsets = [7, 0], sizes = [1, 128], strides = [1, 1]} : vector<16x128xf32> to vector<1x128xf32>
    %340 = vector.extract_strided_slice %338 {offsets = [15, 0], sizes = [1, 128], strides = [1, 1]} : vector<16x128xf32> to vector<1x128xf32>
    %341 = tpu.concatenate %339, %340 in 0 : vector<1x128xf32>, vector<1x128xf32> -> vector<2x128xf32>
    %c0_94 = arith.constant 0 : index
    %c0_95 = arith.constant 0 : index
    %342 = vector.load %arg12[%c0_94, %c0_95] : memref<1x128xf32, #tpu.memory_space<vmem>>, vector<1x128xf32>
    %c0_96 = arith.constant 0 : index
    %c0_97 = arith.constant 0 : index
    %343 = vector.load %arg13[%c0_96, %c0_97] : memref<1x128xf32, #tpu.memory_space<vmem>>, vector<1x128xf32>
    %cst_98 = arith.constant dense<0.000000e+00> : vector<2xf32>
    %344 = vector.multi_reduction <add>, %341, %cst_98 [1] : vector<2x128xf32> to vector<2xf32>
    %345 = vector.shape_cast %344 : vector<2xf32> to vector<2x1xf32>
    %cst_99 = arith.constant 1.280000e+02 : f32
    %346 = vector.broadcast %cst_99 : f32 to vector<2x1xf32>
    %347 = arith.divf %345, %346 : vector<2x1xf32>
    %348 = vector.broadcast %347 : vector<2x1xf32> to vector<2x128xf32>
    %349 = arith.subf %341, %348 : vector<2x128xf32>
    %350 = arith.mulf %349, %349 : vector<2x128xf32>
    %cst_100 = arith.constant dense<0.000000e+00> : vector<2xf32>
    %351 = vector.multi_reduction <add>, %350, %cst_100 [1] : vector<2x128xf32> to vector<2xf32>
    %352 = vector.shape_cast %351 : vector<2xf32> to vector<2x1xf32>
    %cst_101 = arith.constant 1.280000e+02 : f32
    %353 = vector.broadcast %cst_101 : f32 to vector<2x1xf32>
    %354 = arith.divf %352, %353 : vector<2x1xf32>
    %355 = vector.broadcast %347 : vector<2x1xf32> to vector<2x128xf32>
    %356 = arith.subf %341, %355 : vector<2x128xf32>
    %cst_102 = arith.constant 9.99999974E-6 : f32
    %357 = vector.broadcast %cst_102 : f32 to vector<2x1xf32>
    %358 = arith.addf %354, %357 : vector<2x1xf32>
    %359 = math.rsqrt %358 : vector<2x1xf32>
    %360 = vector.broadcast %359 : vector<2x1xf32> to vector<2x128xf32>
    %361 = arith.mulf %356, %360 : vector<2x128xf32>
    %362 = vector.broadcast %342 : vector<1x128xf32> to vector<2x128xf32>
    %363 = arith.mulf %361, %362 : vector<2x128xf32>
    %364 = vector.broadcast %343 : vector<1x128xf32> to vector<2x128xf32>
    %365 = arith.addf %363, %364 : vector<2x128xf32>
    %366 = arith.truncf %365 : vector<2x128xf32> to vector<2x128xbf16>
    %c0_103 = arith.constant 0 : index
    %c0_104 = arith.constant 0 : index
    %367 = vector.load %arg14[%c0_103, %c0_104] : memref<128x256xbf16, #tpu.memory_space<vmem>>, vector<128x256xbf16>
    %cst_105 = arith.constant dense<0.000000e+00> : vector<2x256xf32>
    %368 = tpu.matmul %366, %367, %cst_105 {dimension_numbers = #tpu.dot_dimension_numbers<[1], [0], [0], [1], [0, 0, 1, 1], [], []>} : vector<2x128xbf16>, vector<128x256xbf16>, vector<2x256xf32> -> vector<2x256xf32>
    %c0_106 = arith.constant 0 : index
    %c0_107 = arith.constant 0 : index
    %c0_108 = arith.constant 0 : index
    %369 = vector.load %arg15[%c0_106, %c0_107, %c0_108] : memref<1x2x256xf32, #tpu.memory_space<vmem>>, vector<1x2x256xf32>
    %370 = vector.shape_cast %369 : vector<1x2x256xf32> to vector<2x256xf32>
    %371 = vector.shape_cast %368 : vector<2x256xf32> to vector<1x2x256xf32>
    tpu.vector_store %arg15[%c0_106, %c0_107, %c0_108], %371 {strides = array<i32>} : memref<1x2x256xf32, #tpu.memory_space<vmem>>, vector<1x2x256xf32>,
    return
  }
  func.func @transform_0(%arg0: i32) -> (i32, i32, i32) {
    %c0_i32 = arith.constant 0 : i32
    %c0_i32_0 = arith.constant 0 : i32
    %c0_i32_1 = arith.constant 0 : i32
    return %arg0, %c0_i32, %c0_i32_0 : i32, i32, i32
  }
  func.func @transform_1(%arg0: i32) -> (i32, i32, i32) {
    %c0_i32 = arith.constant 0 : i32
    %c0_i32_0 = arith.constant 0 : i32
    %c0_i32_1 = arith.constant 0 : i32
    return %arg0, %c0_i32, %c0_i32_0 : i32, i32, i32
  }
  func.func @transform_2(%arg0: i32) -> (i32, i32) {
    %c0_i32 = arith.constant 0 : i32
    %c0_i32_0 = arith.constant 0 : i32
    %c0_i32_1 = arith.constant 0 : i32
    return %c0_i32, %c0_i32_0 : i32, i32
  }
  func.func @transform_3(%arg0: i32) -> (i32, i32) {
    %c0_i32 = arith.constant 0 : i32
    %c0_i32_0 = arith.constant 0 : i32
    %c0_i32_1 = arith.constant 0 : i32
    return %c0_i32, %c0_i32_0 : i32, i32
  }
  func.func @transform_4(%arg0: i32) -> (i32, i32) {
    %c0_i32 = arith.constant 0 : i32
    %c0_i32_0 = arith.constant 0 : i32
    %c0_i32_1 = arith.constant 0 : i32
    return %c0_i32, %c0_i32_0 : i32, i32
  }
  func.func @transform_5(%arg0: i32) -> (i32, i32) {
    %c0_i32 = arith.constant 0 : i32
    %c0_i32_0 = arith.constant 0 : i32
    %c0_i32_1 = arith.constant 0 : i32
    return %c0_i32, %c0_i32_0 : i32, i32
  }
  func.func @transform_6(%arg0: i32) -> (i32, i32, i32) {
    %c0_i32 = arith.constant 0 : i32
    %c0_i32_0 = arith.constant 0 : i32
    %c0_i32_1 = arith.constant 0 : i32
    %c0_i32_2 = arith.constant 0 : i32
    return %c0_i32, %c0_i32_0, %c0_i32_1 : i32, i32, i32
  }
  func.func @transform_7(%arg0: i32) -> (i32, i32, i32) {
    %c0_i32 = arith.constant 0 : i32
    %c0_i32_0 = arith.constant 0 : i32
    %c0_i32_1 = arith.constant 0 : i32
    %c0_i32_2 = arith.constant 0 : i32
    return %c0_i32, %c0_i32_0, %c0_i32_1 : i32, i32, i32
  }
  func.func @transform_8(%arg0: i32) -> (i32, i32, i32) {
    %c0_i32 = arith.constant 0 : i32
    %c0_i32_0 = arith.constant 0 : i32
    %c0_i32_1 = arith.constant 0 : i32
    %c0_i32_2 = arith.constant 0 : i32
    return %c0_i32, %c0_i32_0, %c0_i32_1 : i32, i32, i32
  }
  func.func @transform_9(%arg0: i32) -> (i32, i32, i32) {
    %c0_i32 = arith.constant 0 : i32
    %c0_i32_0 = arith.constant 0 : i32
    %c0_i32_1 = arith.constant 0 : i32
    %c0_i32_2 = arith.constant 0 : i32
    return %c0_i32, %c0_i32_0, %c0_i32_1 : i32, i32, i32
  }
  func.func @transform_10(%arg0: i32) -> (i32, i32, i32) {
    %c0_i32 = arith.constant 0 : i32
    %c0_i32_0 = arith.constant 0 : i32
    %c0_i32_1 = arith.constant 0 : i32
    %c0_i32_2 = arith.constant 0 : i32
    return %c0_i32, %c0_i32_0, %c0_i32_1 : i32, i32, i32
  }
  func.func @transform_11(%arg0: i32) -> (i32, i32) {
    %c0_i32 = arith.constant 0 : i32
    %c0_i32_0 = arith.constant 0 : i32
    %c0_i32_1 = arith.constant 0 : i32
    return %c0_i32, %c0_i32_0 : i32, i32
  }
  func.func @transform_12(%arg0: i32) -> (i32, i32) {
    %c0_i32 = arith.constant 0 : i32
    %c0_i32_0 = arith.constant 0 : i32
    %c0_i32_1 = arith.constant 0 : i32
    return %c0_i32, %c0_i32_0 : i32, i32
  }
  func.func @transform_13(%arg0: i32) -> (i32, i32) {
    %c0_i32 = arith.constant 0 : i32
    %c0_i32_0 = arith.constant 0 : i32
    %c0_i32_1 = arith.constant 0 : i32
    return %c0_i32, %c0_i32_0 : i32, i32
  }
  func.func @transform_14(%arg0: i32) -> (i32, i32, i32) {
    %c0_i32 = arith.constant 0 : i32
    %c0_i32_0 = arith.constant 0 : i32
    %c0_i32_1 = arith.constant 0 : i32
    return %arg0, %c0_i32, %c0_i32_0 : i32, i32, i32
  }
}

</mosaic_0001>

<llo_original>
// kernel: h2ogpt_forward.1
$region0: #{h2ogpt_forward.1}
  #allocation0 [shape = 'u32[]', space=smem, size = 0x4, offset = 0x4, fixed_abs, tag = 'smem constant byte address 0x4 - core index']
  #allocation1 [shape = 'u32[72,128]{1,0:T(1,128)}', space=vmem, size = 0x9000, scoped, tag = 'internal scratch']
  %s0 = inlined_call_operand.vmem [shape: f32[4,8,128], index: 0, kind: input, shape index: {}]
  %s1 = inlined_call_operand.vmem [shape: f32[4,1,8], index: 1, kind: input, shape index: {}]
  %s2 = inlined_call_operand.vmem [shape: f32[32,16], index: 2, kind: input, shape index: {}]
  %s3 = inlined_call_operand.vmem [shape: f32[32,16], index: 3, kind: input, shape index: {}]
  %s4 = inlined_call_operand.vmem [shape: f32[8,16], index: 4, kind: input, shape index: {}]
  %s5 = inlined_call_operand.vmem [shape: f32[8,16], index: 5, kind: input, shape index: {}]
  %s6 = inlined_call_operand.vmem [shape: f32[2,1,128], index: 6, kind: input, shape index: {}]
  %s7 = inlined_call_operand.vmem [shape: f32[2,1,128], index: 7, kind: input, shape index: {}]
  %s8 = inlined_call_operand.hbm [shape: bf16[2,128,768], index: 8, kind: input, shape index: {}]
  %s9 = inlined_call_operand.vmem [shape: bf16[2,128,128], index: 9, kind: input, shape index: {}]
  %s10 = inlined_call_operand.hbm [shape: bf16[2,512,128], index: 10, kind: input, shape index: {}]
  %s11 = inlined_call_operand.vmem [shape: f32[1,128], index: 11, kind: input, shape index: {}]
  %s12 = inlined_call_operand.vmem [shape: f32[1,128], index: 12, kind: input, shape index: {}]
  %s13 = inlined_call_operand.vmem [shape: bf16[128,256], index: 13, kind: input, shape index: {}]
  %s14 = inlined_call_operand.vmem [shape: f32[2,2,256], index: 14, kind: output, shape index: {}]
  %s15 = sld [smem:[#allocation0]]
  $region97: #{h2ogpt_forward.1} parent=0
    _
  %s17 = ssub.s32 1, %s15
  %s18 = scalar_select 0, %s17, %s15
  $region1: #{h2ogpt_forward.1} parent=0
    #allocation2 [shape = 'u8[393216]{0}', space=vmem, size = 0x60000, scoped, tag = 'input window, operand 8, single buffered']
    #allocation3 [shape = 's32[2]{0}', space=sflag, size = 0x8, scoped, tag = 'scoped memory for h2ogpt_forward.1']
    #allocation4 [shape = 'u8[262144]{0}', space=vmem, size = 0x40000, scoped, tag = 'input window, operand 10, single buffered']
    #allocation5 [shape = 's32[1]{0}', space=sflag, size = 0x4, scoped, tag = 'scoped memory for h2ogpt_forward.1']
    %19 = vsyncpa [#allocation3], 0
    %20 = vsyncpa [#allocation5], 0
    loop: start=0, step=1, limit=4
    $region2: #{h2ogpt_forward.1} parent=1 // loop_pre_header
      _
    $region3: #{h2ogpt_forward.1} parent=1 // loop_header
      %s22 = sphi 0, %s26
      %p23 = scmp.ge.s32.totalorder %s22, 4
      %s32 = sphi 0, %s34
      %s35 = sphi 0, %s32
      %s36 = sphi 0, %s35
      %s52 = sphi 0, %s36
      %s58 = sphi 0, %s60
      %s61 = sphi 0, %s58
      %s62 = sphi 0, %s61
      %s78 = sphi 0, %s62
      %s82 = sphi 0, %s82
      %s84 = sphi 0, %s82
      %s85 = sphi 0, %s84
      %s99 = sphi 0, %s85
      %s103 = sphi 0, %s103
      %s105 = sphi 0, %s103
      %s106 = sphi 0, %s105
      %s120 = sphi 0, %s106
      %s124 = sphi 0, %s124
      %s126 = sphi 0, %s124
      %s127 = sphi 0, %s126
      %s141 = sphi 0, %s127
      %s145 = sphi 0, %s145
      %s147 = sphi 0, %s145
      %s148 = sphi 0, %s147
      %s162 = sphi 0, %s148
      %s166 = sphi 0, %s166
      %s168 = sphi 0, %s166
      %s169 = sphi 0, %s168
      %s183 = sphi 0, %s169
      %s187 = sphi 0, %s187
      %s189 = sphi 0, %s187
      %s190 = sphi 0, %s189
      %s204 = sphi 0, %s190
      %s208 = sphi 0, %s208
      %s210 = sphi 0, %s208
      %s211 = sphi 0, %s210
      %s225 = sphi 0, %s211
      %s229 = sphi 0, %s229
      %s231 = sphi 0, %s229
      %s232 = sphi 0, %s231
      %s246 = sphi 0, %s232
      %s250 = sphi 0, %s250
      %s252 = sphi 0, %s250
      %s253 = sphi 0, %s252
      %s267 = sphi 0, %s253
      %s271 = sphi 0, %s271
      %s273 = sphi 0, %s271
      %s274 = sphi 0, %s273
      %s288 = sphi 0, %s274
      %s292 = sphi 0, %s292
      %s294 = sphi 0, %s292
      %s295 = sphi 0, %s294
      %s309 = sphi 0, %s295
      %s313 = sphi 0, %s313
      %s315 = sphi 0, %s313
      %s316 = sphi 0, %s315
      %s330 = sphi 0, %s316
      %s336 = sphi 0, %s338
      %s339 = sphi 0, %s336
      %s340 = sphi 0, %s339
      %s356 = sphi 0, %s340
    $region4: #{h2ogpt_forward.1} parent=1 // loop_header_branch
      %25 = sbr.rel (%p23) target = $region8
    $region5: #{h2ogpt_forward.1} parent=1 // loop_body
      %s27 = ssub.s32 %s22, 1
      %s28 = ssub.s32 %s22, 2
      %s29 = sadd.s32 %s22, 1
      %s30 = ssub.s32 %s22, %s29
      %p31 = scmp.eq.s32.totalorder %s30, 0
      %s33 = sadd.s32 %s32, 1
      %s34 = scalar_select %p31, %s32, %s33
      %p37 = pneg %p31
      %p38 = scmp.eq.s32.totalorder %s22, 1
      %p39 = por %p37, %p38
      %p40 = scmp.ne.s32.totalorder %s32, %s35
      %p41 = scmp.eq.s32.totalorder %s22, 0
      %p42 = por %p40, %p41
      %p43 = scmp.ne.s32.totalorder %s32, %s35
      %p44 = scmp.eq.s32.totalorder %s27, 1
      %p45 = por %p43, %p44
      %p46 = scmp.ne.s32.totalorder %s35, %s36
      %p47 = scmp.eq.s32.totalorder %s27, 0
      %p48 = por %p46, %p47
      %p49 = scmp.ne.s32.totalorder %s35, %s36
      %p50 = scmp.eq.s32.totalorder %s28, 1
      %p51 = por %p49, %p50
      %p53 = scmp.ne.s32.totalorder %s36, %s52
      %p54 = scmp.eq.s32.totalorder %s28, 0
      %p55 = por %p53, %p54
      %s56 = ssub.s32 %s22, %s29
      %p57 = scmp.eq.s32.totalorder %s56, 0
      %s59 = sadd.s32 %s58, 1
      %s60 = scalar_select %p57, %s58, %s59
      %p63 = pneg %p57
      %p64 = scmp.eq.s32.totalorder %s22, 1
      %p65 = por %p63, %p64
      %p66 = scmp.ne.s32.totalorder %s58, %s61
      %p67 = scmp.eq.s32.totalorder %s22, 0
      %p68 = por %p66, %p67
      %p69 = scmp.ne.s32.totalorder %s58, %s61
      %p70 = scmp.eq.s32.totalorder %s27, 1
      %p71 = por %p69, %p70
      %p72 = scmp.ne.s32.totalorder %s61, %s62
      %p73 = scmp.eq.s32.totalorder %s27, 0
      %p74 = por %p72, %p73
      %p75 = scmp.ne.s32.totalorder %s61, %s62
      %p76 = scmp.eq.s32.totalorder %s28, 1
      %p77 = por %p75, %p76
      %p79 = scmp.ne.s32.totalorder %s62, %s78
      %p80 = scmp.eq.s32.totalorder %s28, 0
      %p81 = por %p79, %p80
      %s83 = sadd.s32 %s82, 1
      %p86 = scmp.eq.s32.totalorder %s22, 1
      %p87 = scmp.ne.s32.totalorder %s82, %s84
      %p88 = scmp.eq.s32.totalorder %s22, 0
      %p89 = por %p87, %p88
      %p90 = scmp.ne.s32.totalorder %s82, %s84
      %p91 = scmp.eq.s32.totalorder %s27, 1
      %p92 = por %p90, %p91
      %p93 = scmp.ne.s32.totalorder %s84, %s85
      %p94 = scmp.eq.s32.totalorder %s27, 0
      %p95 = por %p93, %p94
      %p96 = scmp.ne.s32.totalorder %s84, %s85
      %p97 = scmp.eq.s32.totalorder %s28, 1
      %p98 = por %p96, %p97
      %p100 = scmp.ne.s32.totalorder %s85, %s99
      %p101 = scmp.eq.s32.totalorder %s28, 0
      %p102 = por %p100, %p101
      %s104 = sadd.s32 %s103, 1
      %p107 = scmp.eq.s32.totalorder %s22, 1
      %p108 = scmp.ne.s32.totalorder %s103, %s105
      %p109 = scmp.eq.s32.totalorder %s22, 0
      %p110 = por %p108, %p109
      %p111 = scmp.ne.s32.totalorder %s103, %s105
      %p112 = scmp.eq.s32.totalorder %s27, 1
      %p113 = por %p111, %p112
      %p114 = scmp.ne.s32.totalorder %s105, %s106
      %p115 = scmp.eq.s32.totalorder %s27, 0
      %p116 = por %p114, %p115
      %p117 = scmp.ne.s32.totalorder %s105, %s106
      %p118 = scmp.eq.s32.totalorder %s28, 1
      %p119 = por %p117, %p118
      %p121 = scmp.ne.s32.totalorder %s106, %s120
      %p122 = scmp.eq.s32.totalorder %s28, 0
      %p123 = por %p121, %p122
      %s125 = sadd.s32 %s124, 1
      %p128 = scmp.eq.s32.totalorder %s22, 1
      %p129 = scmp.ne.s32.totalorder %s124, %s126
      %p130 = scmp.eq.s32.totalorder %s22, 0
      %p131 = por %p129, %p130
      %p132 = scmp.ne.s32.totalorder %s124, %s126
      %p133 = scmp.eq.s32.totalorder %s27, 1
      %p134 = por %p132, %p133
      %p135 = scmp.ne.s32.totalorder %s126, %s127
      %p136 = scmp.eq.s32.totalorder %s27, 0
      %p137 = por %p135, %p136
      %p138 = scmp.ne.s32.totalorder %s126, %s127
      %p139 = scmp.eq.s32.totalorder %s28, 1
      %p140 = por %p138, %p139
      %p142 = scmp.ne.s32.totalorder %s127, %s141
      %p143 = scmp.eq.s32.totalorder %s28, 0
      %p144 = por %p142, %p143
      %s146 = sadd.s32 %s145, 1
      %p149 = scmp.eq.s32.totalorder %s22, 1
      %p150 = scmp.ne.s32.totalorder %s145, %s147
      %p151 = scmp.eq.s32.totalorder %s22, 0
      %p152 = por %p150, %p151
      %p153 = scmp.ne.s32.totalorder %s145, %s147
      %p154 = scmp.eq.s32.totalorder %s27, 1
      %p155 = por %p153, %p154
      %p156 = scmp.ne.s32.totalorder %s147, %s148
      %p157 = scmp.eq.s32.totalorder %s27, 0
      %p158 = por %p156, %p157
      %p159 = scmp.ne.s32.totalorder %s147, %s148
      %p160 = scmp.eq.s32.totalorder %s28, 1
      %p161 = por %p159, %p160
      %p163 = scmp.ne.s32.totalorder %s148, %s162
      %p164 = scmp.eq.s32.totalorder %s28, 0
      %p165 = por %p163, %p164
      %s167 = sadd.s32 %s166, 1
      %p170 = scmp.eq.s32.totalorder %s22, 1
      %p171 = scmp.ne.s32.totalorder %s166, %s168
      %p172 = scmp.eq.s32.totalorder %s22, 0
      %p173 = por %p171, %p172
      %p174 = scmp.ne.s32.totalorder %s166, %s168
      %p175 = scmp.eq.s32.totalorder %s27, 1
      %p176 = por %p174, %p175
      %p177 = scmp.ne.s32.totalorder %s168, %s169
      %p178 = scmp.eq.s32.totalorder %s27, 0
      %p179 = por %p177, %p178
      %p180 = scmp.ne.s32.totalorder %s168, %s169
      %p181 = scmp.eq.s32.totalorder %s28, 1
      %p182 = por %p180, %p181
      %p184 = scmp.ne.s32.totalorder %s169, %s183
      %p185 = scmp.eq.s32.totalorder %s28, 0
      %p186 = por %p184, %p185
      %s188 = sadd.s32 %s187, 1
      %p191 = scmp.eq.s32.totalorder %s22, 1
      %p192 = scmp.ne.s32.totalorder %s187, %s189
      %p193 = scmp.eq.s32.totalorder %s22, 0
      %p194 = por %p192, %p193
      %p195 = scmp.ne.s32.totalorder %s187, %s189
      %p196 = scmp.eq.s32.totalorder %s27, 1
      %p197 = por %p195, %p196
      %p198 = scmp.ne.s32.totalorder %s189, %s190
      %p199 = scmp.eq.s32.totalorder %s27, 0
      %p200 = por %p198, %p199
      %p201 = scmp.ne.s32.totalorder %s189, %s190
      %p202 = scmp.eq.s32.totalorder %s28, 1
      %p203 = por %p201, %p202
      %p205 = scmp.ne.s32.totalorder %s190, %s204
      %p206 = scmp.eq.s32.totalorder %s28, 0
      %p207 = por %p205, %p206
      %s209 = sadd.s32 %s208, 1
      %p212 = scmp.eq.s32.totalorder %s22, 1
      %p213 = scmp.ne.s32.totalorder %s208, %s210
      %p214 = scmp.eq.s32.totalorder %s22, 0
      %p215 = por %p213, %p214
      %p216 = scmp.ne.s32.totalorder %s208, %s210
      %p217 = scmp.eq.s32.totalorder %s27, 1
      %p218 = por %p216, %p217
      %p219 = scmp.ne.s32.totalorder %s210, %s211
      %p220 = scmp.eq.s32.totalorder %s27, 0
      %p221 = por %p219, %p220
      %p222 = scmp.ne.s32.totalorder %s210, %s211
      %p223 = scmp.eq.s32.totalorder %s28, 1
      %p224 = por %p222, %p223
      %p226 = scmp.ne.s32.totalorder %s211, %s225
      %p227 = scmp.eq.s32.totalorder %s28, 0
      %p228 = por %p226, %p227
      %s230 = sadd.s32 %s229, 1
      %p233 = scmp.eq.s32.totalorder %s22, 1
      %p234 = scmp.ne.s32.totalorder %s229, %s231
      %p235 = scmp.eq.s32.totalorder %s22, 0
      %p236 = por %p234, %p235
      %p237 = scmp.ne.s32.totalorder %s229, %s231
      %p238 = scmp.eq.s32.totalorder %s27, 1
      %p239 = por %p237, %p238
      %p240 = scmp.ne.s32.totalorder %s231, %s232
      %p241 = scmp.eq.s32.totalorder %s27, 0
      %p242 = por %p240, %p241
      %p243 = scmp.ne.s32.totalorder %s231, %s232
      %p244 = scmp.eq.s32.totalorder %s28, 1
      %p245 = por %p243, %p244
      %p247 = scmp.ne.s32.totalorder %s232, %s246
      %p248 = scmp.eq.s32.totalorder %s28, 0
      %p249 = por %p247, %p248
      %s251 = sadd.s32 %s250, 1
      %p254 = scmp.eq.s32.totalorder %s22, 1
      %p255 = scmp.ne.s32.totalorder %s250, %s252
      %p256 = scmp.eq.s32.totalorder %s22, 0
      %p257 = por %p255, %p256
      %p258 = scmp.ne.s32.totalorder %s250, %s252
      %p259 = scmp.eq.s32.totalorder %s27, 1
      %p260 = por %p258, %p259
      %p261 = scmp.ne.s32.totalorder %s252, %s253
      %p262 = scmp.eq.s32.totalorder %s27, 0
      %p263 = por %p261, %p262
      %p264 = scmp.ne.s32.totalorder %s252, %s253
      %p265 = scmp.eq.s32.totalorder %s28, 1
      %p266 = por %p264, %p265
      %p268 = scmp.ne.s32.totalorder %s253, %s267
      %p269 = scmp.eq.s32.totalorder %s28, 0
      %p270 = por %p268, %p269
      %s272 = sadd.s32 %s271, 1
      %p275 = scmp.eq.s32.totalorder %s22, 1
      %p276 = scmp.ne.s32.totalorder %s271, %s273
      %p277 = scmp.eq.s32.totalorder %s22, 0
      %p278 = por %p276, %p277
      %p279 = scmp.ne.s32.totalorder %s271, %s273
      %p280 = scmp.eq.s32.totalorder %s27, 1
      %p281 = por %p279, %p280
      %p282 = scmp.ne.s32.totalorder %s273, %s274
      %p283 = scmp.eq.s32.totalorder %s27, 0
      %p284 = por %p282, %p283
      %p285 = scmp.ne.s32.totalorder %s273, %s274
      %p286 = scmp.eq.s32.totalorder %s28, 1
      %p287 = por %p285, %p286
      %p289 = scmp.ne.s32.totalorder %s274, %s288
      %p290 = scmp.eq.s32.totalorder %s28, 0
      %p291 = por %p289, %p290
      %s293 = sadd.s32 %s292, 1
      %p296 = scmp.eq.s32.totalorder %s22, 1
      %p297 = scmp.ne.s32.totalorder %s292, %s294
      %p298 = scmp.eq.s32.totalorder %s22, 0
      %p299 = por %p297, %p298
      %p300 = scmp.ne.s32.totalorder %s292, %s294
      %p301 = scmp.eq.s32.totalorder %s27, 1
      %p302 = por %p300, %p301
      %p303 = scmp.ne.s32.totalorder %s294, %s295
      %p304 = scmp.eq.s32.totalorder %s27, 0
      %p305 = por %p303, %p304
      %p306 = scmp.ne.s32.totalorder %s294, %s295
      %p307 = scmp.eq.s32.totalorder %s28, 1
      %p308 = por %p306, %p307
      %p310 = scmp.ne.s32.totalorder %s295, %s309
      %p311 = scmp.eq.s32.totalorder %s28, 0
      %p312 = por %p310, %p311
      %s314 = sadd.s32 %s313, 1
      %p317 = scmp.eq.s32.totalorder %s22, 1
      %p318 = scmp.ne.s32.totalorder %s313, %s315
      %p319 = scmp.eq.s32.totalorder %s22, 0
      %p320 = por %p318, %p319
      %p321 = scmp.ne.s32.totalorder %s313, %s315
      %p322 = scmp.eq.s32.totalorder %s27, 1
      %p323 = por %p321, %p322
      %p324 = scmp.ne.s32.totalorder %s315, %s316
      %p325 = scmp.eq.s32.totalorder %s27, 0
      %p326 = por %p324, %p325
      %p327 = scmp.ne.s32.totalorder %s315, %s316
      %p328 = scmp.eq.s32.totalorder %s28, 1
      %p329 = por %p327, %p328
      %p331 = scmp.ne.s32.totalorder %s316, %s330
      %p332 = scmp.eq.s32.totalorder %s28, 0
      %p333 = por %p331, %p332
      %s334 = ssub.s32 %s22, %s29
      %p335 = scmp.eq.s32.totalorder %s334, 0
      %s337 = sadd.s32 %s336, 1
      %s338 = scalar_select %p335, %s336, %s337
      %p341 = pneg %p335
      %p342 = scmp.eq.s32.totalorder %s22, 1
      %p343 = por %p341, %p342
      %p344 = scmp.ne.s32.totalorder %s336, %s339
      %p345 = scmp.eq.s32.totalorder %s22, 0
      %p346 = por %p344, %p345
      %p347 = scmp.ne.s32.totalorder %s336, %s339
      %p348 = scmp.eq.s32.totalorder %s27, 1
      %p349 = por %p347, %p348
      %p350 = scmp.ne.s32.totalorder %s339, %s340
      %p351 = scmp.eq.s32.totalorder %s27, 0
      %p352 = por %p350, %p351
      %p353 = scmp.ne.s32.totalorder %s339, %s340
      %p354 = scmp.eq.s32.totalorder %s28, 1
      %p355 = por %p353, %p354
      %p357 = scmp.ne.s32.totalorder %s340, %s356
      %p358 = scmp.eq.s32.totalorder %s28, 0
      %p359 = por %p357, %p358
      %p360 = scmp.le.s32.totalorder 1, %s22
      %p361 = scmp.lt.s32.totalorder %s22, 3
      %p362 = pnand %p360, %p361
      %p363 = pneg %p362
      // Predicated region
      $region9: #{h2ogpt_forward.1} parent=5 // pred_check
        _
      $region10: #{h2ogpt_forward.1} parent=5 // pred_check_branch
        %365 = sbr.rel (%p362) target = $region12
      $region11: #{h2ogpt_forward.1} parent=5 // pred_region
        %s366 = ssub.s32 %s22, 1
        // Predicated region
        $region13: #{h2ogpt_forward.1} parent=11 // pred_check
          %p367 = pneg %p95
        $region14: #{h2ogpt_forward.1} parent=11 // pred_check_branch
          %369 = sbr.rel (%p367) target = $region16
        $region15: #{h2ogpt_forward.1} parent=11 // pred_region
          _
        $region16: #{h2ogpt_forward.1} parent=11 // pred_fallthru
          _
        // Predicated region
        $region17: #{h2ogpt_forward.1} parent=11 // pred_check
          %p370 = pneg %p116
        $region18: #{h2ogpt_forward.1} parent=11 // pred_check_branch
          %372 = sbr.rel (%p370) target = $region20
        $region19: #{h2ogpt_forward.1} parent=11 // pred_region
          _
        $region20: #{h2ogpt_forward.1} parent=11 // pred_fallthru
          _
        // Predicated region
        $region21: #{h2ogpt_forward.1} parent=11 // pred_check
          %p373 = pneg %p137
        $region22: #{h2ogpt_forward.1} parent=11 // pred_check_branch
          %375 = sbr.rel (%p373) target = $region24
        $region23: #{h2ogpt_forward.1} parent=11 // pred_region
          _
        $region24: #{h2ogpt_forward.1} parent=11 // pred_fallthru
          _
        // Predicated region
        $region25: #{h2ogpt_forward.1} parent=11 // pred_check
          %p376 = pneg %p158
        $region26: #{h2ogpt_forward.1} parent=11 // pred_check_branch
          %378 = sbr.rel (%p376) target = $region28
        $region27: #{h2ogpt_forward.1} parent=11 // pred_region
          _
        $region28: #{h2ogpt_forward.1} parent=11 // pred_fallthru
          _
        // Predicated region
        $region29: #{h2ogpt_forward.1} parent=11 // pred_check
          %p379 = pneg %p179
        $region30: #{h2ogpt_forward.1} parent=11 // pred_check_branch
          %381 = sbr.rel (%p379) target = $region32
        $region31: #{h2ogpt_forward.1} parent=11 // pred_region
          _
        $region32: #{h2ogpt_forward.1} parent=11 // pred_fallthru
          _
        // Predicated region
        $region33: #{h2ogpt_forward.1} parent=11 // pred_check
          %p382 = pneg %p200
        $region34: #{h2ogpt_forward.1} parent=11 // pred_check_branch
          %384 = sbr.rel (%p382) target = $region36
        $region35: #{h2ogpt_forward.1} parent=11 // pred_region
          _
        $region36: #{h2ogpt_forward.1} parent=11 // pred_fallthru
          _
        // Predicated region
        $region37: #{h2ogpt_forward.1} parent=11 // pred_check
          %p385 = pneg %p221
        $region38: #{h2ogpt_forward.1} parent=11 // pred_check_branch
          %387 = sbr.rel (%p385) target = $region40
        $region39: #{h2ogpt_forward.1} parent=11 // pred_region
          %389 = vsyncadd [#allocation3], 0
          %s390 = sshll.u32 %s8, 4
          %s391 = int_to_ptr.hbm [resolvable:$true] %s390
          %s392 = sshll.u32 [#allocation2], 4
          %s393 = int_to_ptr.vmem [resolvable:$true] %s392
          %398 = dma.hbm_to_vmem [thread:$0]  %s391, 12288, %s393, [#allocation3], 384, 384, 24
        $region40: #{h2ogpt_forward.1} parent=11 // pred_fallthru
          _
        // Predicated region
        $region41: #{h2ogpt_forward.1} parent=11 // pred_check
          %p399 = pneg %p242
        $region42: #{h2ogpt_forward.1} parent=11 // pred_check_branch
          %401 = sbr.rel (%p399) target = $region44
        $region43: #{h2ogpt_forward.1} parent=11 // pred_region
          _
        $region44: #{h2ogpt_forward.1} parent=11 // pred_fallthru
          _
        // Predicated region
        $region45: #{h2ogpt_forward.1} parent=11 // pred_check
          %p402 = pneg %p263
        $region46: #{h2ogpt_forward.1} parent=11 // pred_check_branch
          %404 = sbr.rel (%p402) target = $region48
        $region47: #{h2ogpt_forward.1} parent=11 // pred_region
          %406 = vsyncadd [#allocation5], 0
          %s407 = sshll.u32 %s10, 4
          %s408 = int_to_ptr.hbm [resolvable:$true] %s407
          %s409 = sshll.u32 [#allocation4], 4
          %s410 = int_to_ptr.vmem [resolvable:$true] %s409
          %415 = dma.hbm_to_vmem [thread:$0]  %s408, 8192, %s410, [#allocation5], 64, 64, 4
        $region48: #{h2ogpt_forward.1} parent=11 // pred_fallthru
          _
        // Predicated region
        $region49: #{h2ogpt_forward.1} parent=11 // pred_check
          %p416 = pneg %p284
        $region50: #{h2ogpt_forward.1} parent=11 // pred_check_branch
          %418 = sbr.rel (%p416) target = $region52
        $region51: #{h2ogpt_forward.1} parent=11 // pred_region
          _
        $region52: #{h2ogpt_forward.1} parent=11 // pred_fallthru
          _
        // Predicated region
        $region53: #{h2ogpt_forward.1} parent=11 // pred_check
          %p419 = pneg %p305
        $region54: #{h2ogpt_forward.1} parent=11 // pred_check_branch
          %421 = sbr.rel (%p419) target = $region56
        $region55: #{h2ogpt_forward.1} parent=11 // pred_region
          _
        $region56: #{h2ogpt_forward.1} parent=11 // pred_fallthru
          _
        // Predicated region
        $region57: #{h2ogpt_forward.1} parent=11 // pred_check
          %p422 = pneg %p326
        $region58: #{h2ogpt_forward.1} parent=11 // pred_check_branch
          %424 = sbr.rel (%p422) target = $region60
        $region59: #{h2ogpt_forward.1} parent=11 // pred_region
          _
        $region60: #{h2ogpt_forward.1} parent=11 // pred_fallthru
          _
      $region12: #{h2ogpt_forward.1} parent=5 // pred_fallthru
        _
      %p425 = scmp.lt.s32.totalorder %s22, 2
      // Predicated region
      $region61: #{h2ogpt_forward.1} parent=5 // pred_check
        %p426 = pneg %p425
      $region62: #{h2ogpt_forward.1} parent=5 // pred_check_branch
        %428 = sbr.rel (%p426) target = $region64
      $region63: #{h2ogpt_forward.1} parent=5 // pred_region
        // Predicated region
        $region65: #{h2ogpt_forward.1} parent=63 // pred_check
          %p429 = pneg %p42
        $region66: #{h2ogpt_forward.1} parent=63 // pred_check_branch
          %431 = sbr.rel (%p429) target = $region68
        $region67: #{h2ogpt_forward.1} parent=63 // pred_region
          %s432 = smul.u32 2, %s22
          %p433 = scmp.lt.s32.totalorder %s432, 3
          %s434 = scalar_select %p433, %s432, 3
          %s435 = smul.addr %s434, 8
          %s436 = scalar_lea.vmem %s0, %s435
          %s437 = smul.u32 2, %s22
        $region68: #{h2ogpt_forward.1} parent=63 // pred_fallthru
          _
        // Predicated region
        $region69: #{h2ogpt_forward.1} parent=63 // pred_check
          %p438 = pneg %p68
        $region70: #{h2ogpt_forward.1} parent=63 // pred_check_branch
          %440 = sbr.rel (%p438) target = $region72
        $region71: #{h2ogpt_forward.1} parent=63 // pred_region
          %s441 = smul.u32 2, %s22
          %p442 = scmp.lt.s32.totalorder %s441, 3
          %s443 = scalar_select %p442, %s441, 3
          %s444 = scalar_lea.vmem %s1, %s443
          %s445 = smul.u32 2, %s22
        $region72: #{h2ogpt_forward.1} parent=63 // pred_fallthru
          _
      $region64: #{h2ogpt_forward.1} parent=5 // pred_fallthru
        _
      %p446 = scmp.le.s32.totalorder 1, %s22
      %p447 = scmp.lt.s32.totalorder %s22, 3
      %p448 = pnand %p446, %p447
      %p449 = pneg %p448
      // Predicated region
      $region73: #{h2ogpt_forward.1} parent=5 // pred_check
        _
      $region74: #{h2ogpt_forward.1} parent=5 // pred_check_branch
        %451 = sbr.rel (%p448) target = $region76
      $region75: #{h2ogpt_forward.1} parent=5 // pred_region
        %s452 = ssub.s32 %s22, 1
        // Predicated region
        $region77: #{h2ogpt_forward.1} parent=75 // pred_check
          %p453 = pneg %p221
        $region78: #{h2ogpt_forward.1} parent=75 // pred_check_branch
          %455 = sbr.rel (%p453) target = $region80
        $region79: #{h2ogpt_forward.1} parent=75 // pred_region
          %457 = dma.done [#allocation3], 12288
        $region80: #{h2ogpt_forward.1} parent=75 // pred_fallthru
          _
        // Predicated region
        $region81: #{h2ogpt_forward.1} parent=75 // pred_check
          %p458 = pneg %p263
        $region82: #{h2ogpt_forward.1} parent=75 // pred_check_branch
          %460 = sbr.rel (%p458) target = $region84
        $region83: #{h2ogpt_forward.1} parent=75 // pred_region
          %462 = dma.done [#allocation5], 8192
        $region84: #{h2ogpt_forward.1} parent=75 // pred_fallthru
          _
        %s463 = smul.u32 2, %s27
        %p464 = scmp.lt.s32.totalorder %s463, 3
        %s465 = scalar_select %p464, %s463, 3
        %s466 = smul.addr %s465, 8
        %s467 = scalar_lea.vmem %s0, %s466
        %p468 = pneg %p48
        %p469 = pneg %p45
        %s470 = smul.u32 2, %s27
        %p471 = scmp.lt.s32.totalorder %s470, 3
        %s472 = scalar_select %p471, %s470, 3
        %s473 = scalar_lea.vmem %s1, %s472
        %p474 = pneg %p74
        %p475 = pneg %p71
        %p476 = pneg %p95
        %p477 = pneg %p92
        %p478 = pneg %p116
        %p479 = pneg %p113
        %p480 = pneg %p137
        %p481 = pneg %p134
        %p482 = pneg %p158
        %p483 = pneg %p155
        %p484 = pneg %p179
        %p485 = pneg %p176
        %p486 = pneg %p200
        %p487 = pneg %p197
        %p488 = pneg %p221
        %p489 = pneg %p218
        %p490 = pneg %p242
        %p491 = pneg %p239
        %p492 = pneg %p263
        %p493 = pneg %p260
        %p494 = pneg %p284
        %p495 = pneg %p281
        %p496 = pneg %p305
        %p497 = pneg %p302
        %p498 = pneg %p326
        %p499 = pneg %p323
        %p500 = pneg %p352
        %p501 = pneg %p349
        %p502 = scmp.lt.s32.totalorder %s27, 1
        %s503 = scalar_select %p502, %s27, 1
        %s504 = smul.addr %s503, 2
        %s505 = smul.addr %s504, 2
        %s506 = scalar_lea.vmem %s14, %s505
        %s507 = smul.u32 2, %s27
        %p508 = scmp.lt.s32.totalorder %s507, 3
        %s509 = scalar_select %p508, %s507, 3
        %s510 = smul.addr %s509, 8
        %s511 = scalar_lea.vmem %s0, %s510
        %s512 = smul.u32 2, %s27
        %s513 = smul.u32 2, %s27
        %p514 = scmp.lt.s32.totalorder %s513, 3
        %s515 = scalar_select %p514, %s513, 3
        %s516 = scalar_lea.vmem %s1, %s515
        %s517 = smul.u32 2, %s27
        %p518 = scmp.lt.s32.totalorder %s27, 1
        %s519 = scalar_select %p518, %s27, 1
        %s520 = smul.addr %s519, 2
        %s521 = smul.addr %s520, 2
        %s522 = scalar_lea.vmem %s14, %s521
        %v524 = vld [vmem:[%s511] sm:$0xff]
        %v525 = vld [vmem:[%s511 + $0x8] sm:$0xff]
        %v526 = vld [vmem:[%s2] sm:$0xff]
        %v527 = vld [vmem:[%s2 + $0x8] sm:$0xff]
        %v528 = vld [vmem:[%s2 + $0x10] sm:$0xff]
        %v529 = vld [vmem:[%s2 + $0x18] sm:$0xff]
        %v530 = vld [vmem:[%s3] sm:$0xff]
        %v531 = vld [vmem:[%s3 + $0x8] sm:$0xff]
        %v532 = vld [vmem:[%s3 + $0x10] sm:$0xff]
        %v533 = vld [vmem:[%s3 + $0x18] sm:$0xff]
        %v534 = vld [vmem:[%s4] sm:$0xff]
        %v535 = vld [vmem:[%s5] sm:$0xff]
        %v536 = vlaneseq
        %v537 = vshrl.u32 %v536, 7
        %v538 = vlaneseq
        %v539 = vand.u32 %v538, 127
        %vm540 = vcmp.le.s32.totalorder %v539, %v537
        %v541 = vld [vmem:[%s516] sm:$0x1]
        %vm542 = vcmp.gt.f32.partialorder %v541, 0.5
        %v543 = vsel %vm542, 1, 0
        %v544 = vperm.slane %v543, 0
        %vm545 = vcmp.eq.s32.totalorder %v544, 1
        %vm546 = vmand %vm540, %vm545
        %v547 = vsel %vm546, 0.0, -1e+09
        %s548 = scalar_lea.vmem %s516, 1
        %v549 = vld [vmem:[%s548] sm:$0x1]
        %vm550 = vcmp.gt.f32.partialorder %v549, 0.5
        %v551 = vsel %vm550, 1, 0
        %v552 = vperm.slane %v551, 0
        %vm553 = vcmp.eq.s32.totalorder %v552, 1
        %vm554 = vmand %vm540, %vm553
        %v555 = vsel %vm554, 0.0, -1e+09
        %v556 = vld [vmem:[%s6] sm:$0x1]
        %v557 = vld [vmem:[%s7] sm:$0x1]
        %558 = vadd.xlane.f32.xlu0 %v524
        %v559 = vpop.xlane.xlu0 %558
        %560 = vadd.xlane.f32.xlu0 %v525
        %v561 = vpop.xlane.xlu0 %560
        %v562 = vrcp.pop 128.0
        %v563 = vmul.f32 128.0, %v562
        %v564 = vsub.f32 1.0, %v563
        %v565 = vmul.f32 %v562, %v564
        %v566 = vadd.f32 %v562, %v565
        %vm567 = vweird.f32 %v562
        %v568 = vsel %vm567, %v562, %v566
        %v569 = vmul.f32 %v559, %v568
        %v570 = vmul.f32 %v561, %v568
        %v571 = vsub.f32 %v524, %v569
        %v572 = vsub.f32 %v525, %v570
        %v573 = vmul.f32 %v571, %v571
        %v574 = vmul.f32 %v572, %v572
        %575 = vadd.xlane.f32.xlu0 %v573
        %v576 = vpop.xlane.xlu0 %575
        %577 = vadd.xlane.f32.xlu0 %v574
        %v578 = vpop.xlane.xlu0 %577
        %v579 = vmul.f32 %v576, %v568
        %v580 = vmul.f32 %v578, %v568
        %v581 = vadd.f32 %v579, 1e-05
        %v582 = vadd.f32 %v580, 1e-05
        %v583 = vrsqrt.pop %v581
        %v584 = vmul.f32 %v583, %v581
        %v585 = vmul.f32 %v584, %v583
        %v586 = vmul.f32 0.5, %v585
        %v587 = vsub.f32 1.5, %v586
        %v588 = vmul.f32 %v583, %v587
        %vm589 = vweird.f32 %v581
        %vm590 = vweird.f32 %v583
        %vm591 = vmor %vm589, %vm590
        %v592 = vsel %vm591, %v583, %v588
        %v593 = vrsqrt.pop %v582
        %v594 = vmul.f32 %v593, %v582
        %v595 = vmul.f32 %v594, %v593
        %v596 = vmul.f32 0.5, %v595
        %v597 = vsub.f32 1.5, %v596
        %v598 = vmul.f32 %v593, %v597
        %vm599 = vweird.f32 %v582
        %vm600 = vweird.f32 %v593
        %vm601 = vmor %vm599, %vm600
        %v602 = vsel %vm601, %v593, %v598
        %v603 = vmul.f32 %v571, %v592
        %v604 = vmul.f32 %v572, %v602
        %v606 = vperm.slane %v556, 0
        %v608 = vmul.f32 %v603, %v606
        %v609 = vmul.f32 %v604, %v606
        %v611 = vperm.slane %v557, 0
        %v613 = vadd.f32 %v608, %v611
        %v614 = vadd.f32 %v609, %v611
        %v615 = vpack.c.bf16 %v614, %v613
        %v616 = vld [vmem:[#allocation2] sm:$0xff]
        %v617 = vld [vmem:[#allocation2 + $0x8] sm:$0xff]
        %v618 = vld [vmem:[#allocation2 + $0x10] sm:$0xff]
        %v619 = vld [vmem:[#allocation2 + $0x18] sm:$0xff]
        %v620 = vld [vmem:[#allocation2 + $0x20] sm:$0xff]
        %v621 = vld [vmem:[#allocation2 + $0x28] sm:$0xff]
        %v622 = vld [vmem:[#allocation2 + $0x30] sm:$0xff]
        %v623 = vld [vmem:[#allocation2 + $0x38] sm:$0xff]
        %v624 = vld [vmem:[#allocation2 + $0x40] sm:$0xff]
        %v625 = vld [vmem:[#allocation2 + $0x48] sm:$0xff]
        %v626 = vld [vmem:[#allocation2 + $0x50] sm:$0xff]
        %v627 = vld [vmem:[#allocation2 + $0x58] sm:$0xff]
        %v628 = vld [vmem:[#allocation2 + $0x60] sm:$0xff]
        %v629 = vld [vmem:[#allocation2 + $0x68] sm:$0xff]
        %v630 = vld [vmem:[#allocation2 + $0x70] sm:$0xff]
        %v631 = vld [vmem:[#allocation2 + $0x78] sm:$0xff]
        %v632 = vld [vmem:[#allocation2 + $0x80] sm:$0xff]
        %v633 = vld [vmem:[#allocation2 + $0x88] sm:$0xff]
        %v634 = vld [vmem:[#allocation2 + $0x90] sm:$0xff]
        %v635 = vld [vmem:[#allocation2 + $0x98] sm:$0xff]
        %v636 = vld [vmem:[#allocation2 + $0xa0] sm:$0xff]
        %v637 = vld [vmem:[#allocation2 + $0xa8] sm:$0xff]
        %v638 = vld [vmem:[#allocation2 + $0xb0] sm:$0xff]
        %v639 = vld [vmem:[#allocation2 + $0xb8] sm:$0xff]
        %v640 = vld [vmem:[#allocation2 + $0xc0] sm:$0xff]
        %v641 = vld [vmem:[#allocation2 + $0xc8] sm:$0xff]
        %v642 = vld [vmem:[#allocation2 + $0xd0] sm:$0xff]
        %v643 = vld [vmem:[#allocation2 + $0xd8] sm:$0xff]
        %v644 = vld [vmem:[#allocation2 + $0xe0] sm:$0xff]
        %v645 = vld [vmem:[#allocation2 + $0xe8] sm:$0xff]
        %v646 = vld [vmem:[#allocation2 + $0xf0] sm:$0xff]
        %v647 = vld [vmem:[#allocation2 + $0xf8] sm:$0xff]
        %v648 = vld [vmem:[#allocation2 + $0x100] sm:$0xff]
        %v649 = vld [vmem:[#allocation2 + $0x108] sm:$0xff]
        %v650 = vld [vmem:[#allocation2 + $0x110] sm:$0xff]
        %v651 = vld [vmem:[#allocation2 + $0x118] sm:$0xff]
        %v652 = vld [vmem:[#allocation2 + $0x120] sm:$0xff]
        %v653 = vld [vmem:[#allocation2 + $0x128] sm:$0xff]
        %v654 = vld [vmem:[#allocation2 + $0x130] sm:$0xff]
        %v655 = vld [vmem:[#allocation2 + $0x138] sm:$0xff]
        %v656 = vld [vmem:[#allocation2 + $0x140] sm:$0xff]
        %v657 = vld [vmem:[#allocation2 + $0x148] sm:$0xff]
        %v658 = vld [vmem:[#allocation2 + $0x150] sm:$0xff]
        %v659 = vld [vmem:[#allocation2 + $0x158] sm:$0xff]
        %v660 = vld [vmem:[#allocation2 + $0x160] sm:$0xff]
        %v661 = vld [vmem:[#allocation2 + $0x168] sm:$0xff]
        %v662 = vld [vmem:[#allocation2 + $0x170] sm:$0xff]
        %v663 = vld [vmem:[#allocation2 + $0x178] sm:$0xff]
        %v712 = vunpack.c.l.b16 %v616
        %v713 = vunpack.c.h.b16 %v616
        %v714 = vunpack.c.l.b16 %v617
        %v715 = vunpack.c.h.b16 %v617
        %v716 = vunpack.c.l.b16 %v618
        %v717 = vunpack.c.h.b16 %v618
        %v718 = vunpack.c.l.b16 %v619
        %v719 = vunpack.c.h.b16 %v619
        %v720 = vunpack.c.l.b16 %v620
        %v721 = vunpack.c.h.b16 %v620
        %v722 = vunpack.c.l.b16 %v621
        %v723 = vunpack.c.h.b16 %v621
        %v724 = vunpack.c.l.b16 %v622
        %v725 = vunpack.c.h.b16 %v622
        %v726 = vunpack.c.l.b16 %v623
        %v727 = vunpack.c.h.b16 %v623
        %v728 = vunpack.c.l.b16 %v624
        %v729 = vunpack.c.h.b16 %v624
        %v730 = vunpack.c.l.b16 %v625
        %v731 = vunpack.c.h.b16 %v625
        %v732 = vunpack.c.l.b16 %v626
        %v733 = vunpack.c.h.b16 %v626
        %v734 = vunpack.c.l.b16 %v627
        %v735 = vunpack.c.h.b16 %v627
        %v736 = vunpack.c.l.b16 %v628
        %v737 = vunpack.c.h.b16 %v628
        %v738 = vunpack.c.l.b16 %v629
        %v739 = vunpack.c.h.b16 %v629
        %v740 = vunpack.c.l.b16 %v630
        %v741 = vunpack.c.h.b16 %v630
        %v742 = vunpack.c.l.b16 %v631
        %v743 = vunpack.c.h.b16 %v631
        %v744 = vunpack.c.l.b16 %v632
        %v745 = vunpack.c.h.b16 %v632
        %v746 = vunpack.c.l.b16 %v633
        %v747 = vunpack.c.h.b16 %v633
        %v748 = vunpack.c.l.b16 %v634
        %v749 = vunpack.c.h.b16 %v634
        %v750 = vunpack.c.l.b16 %v635
        %v751 = vunpack.c.h.b16 %v635
        %v752 = vunpack.c.l.b16 %v636
        %v753 = vunpack.c.h.b16 %v636
        %v754 = vunpack.c.l.b16 %v637
        %v755 = vunpack.c.h.b16 %v637
        %v756 = vunpack.c.l.b16 %v638
        %v757 = vunpack.c.h.b16 %v638
        %v758 = vunpack.c.l.b16 %v639
        %v759 = vunpack.c.h.b16 %v639
        %v760 = vunpack.c.l.b16 %v640
        %v761 = vunpack.c.h.b16 %v640
        %v762 = vunpack.c.l.b16 %v641
        %v763 = vunpack.c.h.b16 %v641
        %v764 = vunpack.c.l.b16 %v642
        %v765 = vunpack.c.h.b16 %v642
        %v766 = vunpack.c.l.b16 %v643
        %v767 = vunpack.c.h.b16 %v643
        %v768 = vunpack.c.l.b16 %v644
        %v769 = vunpack.c.h.b16 %v644
        %v770 = vunpack.c.l.b16 %v645
        %v771 = vunpack.c.h.b16 %v645
        %v772 = vunpack.c.l.b16 %v646
        %v773 = vunpack.c.h.b16 %v646
        %v774 = vunpack.c.l.b16 %v647
        %v775 = vunpack.c.h.b16 %v647
        %v776 = vunpack.c.l.b16 %v648
        %v777 = vunpack.c.h.b16 %v648
        %v778 = vunpack.c.l.b16 %v649
        %v779 = vunpack.c.h.b16 %v649
        %v780 = vunpack.c.l.b16 %v650
        %v781 = vunpack.c.h.b16 %v650
        %v782 = vunpack.c.l.b16 %v651
        %v783 = vunpack.c.h.b16 %v651
        %v784 = vunpack.c.l.b16 %v652
        %v785 = vunpack.c.h.b16 %v652
        %v786 = vunpack.c.l.b16 %v653
        %v787 = vunpack.c.h.b16 %v653
        %v788 = vunpack.c.l.b16 %v654
        %v789 = vunpack.c.h.b16 %v654
        %v790 = vunpack.c.l.b16 %v655
        %v791 = vunpack.c.h.b16 %v655
        %v792 = vunpack.c.l.b16 %v656
        %v793 = vunpack.c.h.b16 %v656
        %v794 = vunpack.c.l.b16 %v657
        %v795 = vunpack.c.h.b16 %v657
        %v796 = vunpack.c.l.b16 %v658
        %v797 = vunpack.c.h.b16 %v658
        %v798 = vunpack.c.l.b16 %v659
        %v799 = vunpack.c.h.b16 %v659
        %v800 = vunpack.c.l.b16 %v660
        %v801 = vunpack.c.h.b16 %v660
        %v802 = vunpack.c.l.b16 %v661
        %v803 = vunpack.c.h.b16 %v661
        %v804 = vunpack.c.l.b16 %v662
        %v805 = vunpack.c.h.b16 %v662
        %v806 = vunpack.c.l.b16 %v663
        %v807 = vunpack.c.h.b16 %v663
        %v808 = vpack.c.b16 %v718, %v712
        %v809 = vpack.c.b16 %v719, %v713
        %v810 = vpack.c.b16 %v720, %v714
        %v811 = vpack.c.b16 %v721, %v715
        %v812 = vpack.c.b16 %v722, %v716
        %v813 = vpack.c.b16 %v723, %v717
        %v814 = vpack.c.b16 %v730, %v724
        %v815 = vpack.c.b16 %v731, %v725
        %v816 = vpack.c.b16 %v732, %v726
        %v817 = vpack.c.b16 %v733, %v727
        %v818 = vpack.c.b16 %v734, %v728
        %v819 = vpack.c.b16 %v735, %v729
        %v820 = vpack.c.b16 %v742, %v736
        %v821 = vpack.c.b16 %v743, %v737
        %v822 = vpack.c.b16 %v744, %v738
        %v823 = vpack.c.b16 %v745, %v739
        %v824 = vpack.c.b16 %v746, %v740
        %v825 = vpack.c.b16 %v747, %v741
        %v826 = vpack.c.b16 %v754, %v748
        %v827 = vpack.c.b16 %v755, %v749
        %v828 = vpack.c.b16 %v756, %v750
        %v829 = vpack.c.b16 %v757, %v751
        %v830 = vpack.c.b16 %v758, %v752
        %v831 = vpack.c.b16 %v759, %v753
        %v832 = vpack.c.b16 %v766, %v760
        %v833 = vpack.c.b16 %v767, %v761
        %v834 = vpack.c.b16 %v768, %v762
        %v835 = vpack.c.b16 %v769, %v763
        %v836 = vpack.c.b16 %v770, %v764
        %v837 = vpack.c.b16 %v771, %v765
        %v838 = vpack.c.b16 %v778, %v772
        %v839 = vpack.c.b16 %v779, %v773
        %v840 = vpack.c.b16 %v780, %v774
        %v841 = vpack.c.b16 %v781, %v775
        %v842 = vpack.c.b16 %v782, %v776
        %v843 = vpack.c.b16 %v783, %v777
        %v844 = vpack.c.b16 %v790, %v784
        %v845 = vpack.c.b16 %v791, %v785
        %v846 = vpack.c.b16 %v792, %v786
        %v847 = vpack.c.b16 %v793, %v787
        %v848 = vpack.c.b16 %v794, %v788
        %v849 = vpack.c.b16 %v795, %v789
        %v850 = vpack.c.b16 %v802, %v796
        %v851 = vpack.c.b16 %v803, %v797
        %v852 = vpack.c.b16 %v804, %v798
        %v853 = vpack.c.b16 %v805, %v799
        %v854 = vpack.c.b16 %v806, %v800
        %v855 = vpack.c.b16 %v807, %v801
        %904 = vmatpush.bf16.msra.mxu0 %v850
        %905 = vmatpush.bf16.msra.mxu0 %v844
        %906 = vmatpush.bf16.msra.mxu0 %v838
        %907 = vmatpush.bf16.msra.mxu0 %v832
        %908 = vmatpush.bf16.msra.mxu0 %v826
        %909 = vmatpush.bf16.msra.mxu0 %v820
        %910 = vmatpush.bf16.msra.mxu0 %v814
        %911 = vmatpush.bf16.msra.mxu0 %v808
        %912 = vmatmul.bf16.gmra.mxu0 %v615
        %v913 = vpop.f32.mrf.mxu0
        %v914 = vadd.f32 0.0, %v913
        %v915 = vpop.f32.mrf.mxu0
        %v916 = vadd.f32 0.0, %v915
        %917 = vdwg.mxu0
        %918 = vmatpush.bf16.msra.mxu0 %v851
        %919 = vmatpush.bf16.msra.mxu0 %v845
        %920 = vmatpush.bf16.msra.mxu0 %v839
        %921 = vmatpush.bf16.msra.mxu0 %v833
        %922 = vmatpush.bf16.msra.mxu0 %v827
        %923 = vmatpush.bf16.msra.mxu0 %v821
        %924 = vmatpush.bf16.msra.mxu0 %v815
        %925 = vmatpush.bf16.msra.mxu0 %v809
        %926 = vmatmul.bf16.gmra.mxu0 %v615
        %v927 = vpop.f32.mrf.mxu0
        %v928 = vadd.f32 0.0, %v927
        %v929 = vpop.f32.mrf.mxu0
        %v930 = vadd.f32 0.0, %v929
        %931 = vdwg.mxu0
        %932 = vmatpush.bf16.msra.mxu0 %v852
        %933 = vmatpush.bf16.msra.mxu0 %v846
        %934 = vmatpush.bf16.msra.mxu0 %v840
        %935 = vmatpush.bf16.msra.mxu0 %v834
        %936 = vmatpush.bf16.msra.mxu0 %v828
        %937 = vmatpush.bf16.msra.mxu0 %v822
        %938 = vmatpush.bf16.msra.mxu0 %v816
        %939 = vmatpush.bf16.msra.mxu0 %v810
        %940 = vmatmul.bf16.gmra.mxu0 %v615
        %v941 = vpop.f32.mrf.mxu0
        %v942 = vadd.f32 0.0, %v941
        %v943 = vpop.f32.mrf.mxu0
        %v944 = vadd.f32 0.0, %v943
        %945 = vdwg.mxu0
        %946 = vmatpush.bf16.msra.mxu0 %v853
        %947 = vmatpush.bf16.msra.mxu0 %v847
        %948 = vmatpush.bf16.msra.mxu0 %v841
        %949 = vmatpush.bf16.msra.mxu0 %v835
        %950 = vmatpush.bf16.msra.mxu0 %v829
        %951 = vmatpush.bf16.msra.mxu0 %v823
        %952 = vmatpush.bf16.msra.mxu0 %v817
        %953 = vmatpush.bf16.msra.mxu0 %v811
        %954 = vmatmul.bf16.gmra.mxu0 %v615
        %v955 = vpop.f32.mrf.mxu0
        %v956 = vadd.f32 0.0, %v955
        %v957 = vpop.f32.mrf.mxu0
        %v958 = vadd.f32 0.0, %v957
        %959 = vdwg.mxu0
        %960 = vmatpush.bf16.msra.mxu0 %v854
        %961 = vmatpush.bf16.msra.mxu0 %v848
        %962 = vmatpush.bf16.msra.mxu0 %v842
        %963 = vmatpush.bf16.msra.mxu0 %v836
        %964 = vmatpush.bf16.msra.mxu0 %v830
        %965 = vmatpush.bf16.msra.mxu0 %v824
        %966 = vmatpush.bf16.msra.mxu0 %v818
        %967 = vmatpush.bf16.msra.mxu0 %v812
        %968 = vmatmul.bf16.gmra.mxu0 %v615
        %v969 = vpop.f32.mrf.mxu0
        %v970 = vadd.f32 0.0, %v969
        %v971 = vpop.f32.mrf.mxu0
        %v972 = vadd.f32 0.0, %v971
        %973 = vdwg.mxu0
        %974 = vmatpush.bf16.msra.mxu0 %v855
        %975 = vmatpush.bf16.msra.mxu0 %v849
        %976 = vmatpush.bf16.msra.mxu0 %v843
        %977 = vmatpush.bf16.msra.mxu0 %v837
        %978 = vmatpush.bf16.msra.mxu0 %v831
        %979 = vmatpush.bf16.msra.mxu0 %v825
        %980 = vmatpush.bf16.msra.mxu0 %v819
        %981 = vmatpush.bf16.msra.mxu0 %v813
        %982 = vmatmul.bf16.gmra.mxu0 %v615
        %v983 = vpop.f32.mrf.mxu0
        %v984 = vadd.f32 0.0, %v983
        %v985 = vpop.f32.mrf.mxu0
        %v986 = vadd.f32 0.0, %v985
        %987 = vdwg.mxu0
        %989 = vrot.lane.b32.xlu0 %v914, 96
        %v990 = vpop.permute.xlu0 %989
        %992 = vrot.lane.b32.xlu0 %v914, 64
        %v993 = vpop.permute.xlu0 %992
        %995 = vrot.lane.b32.xlu0 %v914, 32
        %v996 = vpop.permute.xlu0 %995
        %v998 = vmul.f32 %v914, %v526
        %v999 = vmul.f32 %v990, %v527
        %v1000 = vmul.f32 %v993, %v528
        %v1001 = vmul.f32 %v996, %v529
        %1006 = vrot.lane.b32.xlu0 %v530, 16
        %v1007 = vpop.permute.xlu0 %1006
        %1008 = vrot.lane.b32.xlu0 %v531, 16
        %v1009 = vpop.permute.xlu0 %1008
        %1010 = vrot.lane.b32.xlu0 %v532, 16
        %v1011 = vpop.permute.xlu0 %1010
        %1012 = vrot.lane.b32.xlu0 %v533, 16
        %v1013 = vpop.permute.xlu0 %1012
        %v1018 = vmul.f32 %v914, %v1007
        %v1019 = vmul.f32 %v990, %v1009
        %v1020 = vmul.f32 %v993, %v1011
        %v1021 = vmul.f32 %v996, %v1013
        %1026 = vrot.lane.b32.xlu0 %v1018, 112
        %v1027 = vpop.permute.xlu0 %1026
        %1028 = vrot.lane.b32.xlu0 %v1019, 112
        %v1029 = vpop.permute.xlu0 %1028
        %1030 = vrot.lane.b32.xlu0 %v1020, 112
        %v1031 = vpop.permute.xlu0 %1030
        %1032 = vrot.lane.b32.xlu0 %v1021, 112
        %v1033 = vpop.permute.xlu0 %1032
        %v1038 = vsub.f32 %v998, %v1027
        %v1039 = vsub.f32 %v999, %v1029
        %v1040 = vsub.f32 %v1000, %v1031
        %v1041 = vsub.f32 %v1001, %v1033
        %1046 = vrot.lane.b32.xlu0 %v526, 16
        %v1047 = vpop.permute.xlu0 %1046
        %1048 = vrot.lane.b32.xlu0 %v527, 16
        %v1049 = vpop.permute.xlu0 %1048
        %1050 = vrot.lane.b32.xlu0 %v528, 16
        %v1051 = vpop.permute.xlu0 %1050
        %1052 = vrot.lane.b32.xlu0 %v529, 16
        %v1053 = vpop.permute.xlu0 %1052
        %v1058 = vmul.f32 %v914, %v1047
        %v1059 = vmul.f32 %v990, %v1049
        %v1060 = vmul.f32 %v993, %v1051
        %v1061 = vmul.f32 %v996, %v1053
        %v1062 = vmul.f32 %v914, %v530
        %v1063 = vmul.f32 %v990, %v531
        %v1064 = vmul.f32 %v993, %v532
        %v1065 = vmul.f32 %v996, %v533
        %1070 = vrot.lane.b32.xlu0 %v1062, 16
        %v1071 = vpop.permute.xlu0 %1070
        %1072 = vrot.lane.b32.xlu0 %v1063, 16
        %v1073 = vpop.permute.xlu0 %1072
        %1074 = vrot.lane.b32.xlu0 %v1064, 16
        %v1075 = vpop.permute.xlu0 %1074
        %1076 = vrot.lane.b32.xlu0 %v1065, 16
        %v1077 = vpop.permute.xlu0 %1076
        %v1082 = vadd.f32 %v1058, %v1071
        %v1083 = vadd.f32 %v1059, %v1073
        %v1084 = vadd.f32 %v1060, %v1075
        %v1085 = vadd.f32 %v1061, %v1077
        %vm1086 = vcmask 130048
        %v1087 = vsel %vm1086, %v1038, %v1082
        %v1088 = vsel %vm1086, %v1039, %v1083
        %v1089 = vsel %vm1086, %v1040, %v1084
        %v1090 = vsel %vm1086, %v1041, %v1085
        %v1091 = vpack.c.bf16 %v1088, %v1087
        %v1092 = vpack.c.bf16 %v1090, %v1089
        %v1093 = vmul.f32 %v928, %v534
        %1095 = vrot.lane.b32.xlu0 %v535, 16
        %v1096 = vpop.permute.xlu0 %1095
        %v1098 = vmul.f32 %v928, %v1096
        %1100 = vrot.lane.b32.xlu0 %v1098, 112
        %v1101 = vpop.permute.xlu0 %1100
        %v1103 = vsub.f32 %v1093, %v1101
        %1105 = vrot.lane.b32.xlu0 %v534, 16
        %v1106 = vpop.permute.xlu0 %1105
        %v1108 = vmul.f32 %v928, %v1106
        %v1109 = vmul.f32 %v928, %v535
        %1111 = vrot.lane.b32.xlu0 %v1109, 16
        %v1112 = vpop.permute.xlu0 %1111
        %v1114 = vadd.f32 %v1108, %v1112
        %v1115 = vsel %vm1086, %v1103, %v1114
        %v1116 = vpack.c.bf16 %v1115, %v1115
        %v1117 = vpack.c.bf16 %v928, %v928
        %vm1118 = vcmask 261120
        %v1120 = vsel %vm1118, %v1091, 0
        %v1123 = vsel %vm1118, %v1092, 0
        %v1126 = vsel %vm1118, %v1116, 0
        %1128 = vmatpush.bf16.xpose.msra.mxu0 0
        %1129 = vmatpush.bf16.xpose.msra.mxu0 0
        %1130 = vmatpush.bf16.xpose.msra.mxu0 0
        %1131 = vmatpush.bf16.xpose.msra.mxu0 0
        %1132 = vmatpush.bf16.xpose.msra.mxu0 0
        %1133 = vmatpush.bf16.xpose.msra.mxu0 0
        %1134 = vmatpush.bf16.xpose.msra.mxu0 0
        %1135 = vmatpush.bf16.xpose.msra.mxu0 %v1126
        %1136 = vmatmul.bf16.gmra.mxu0 %v1120
        %v1137 = vpop.f32.mrf.mxu0
        %v1138 = vadd.f32 0.0, %v1137
        %v1139 = vpop.f32.mrf.mxu0
        %v1140 = vadd.f32 0.0, %v1139
        %1141 = vmatmul.bf16.gmra.mxu0 %v1123
        %v1142 = vpop.f32.mrf.mxu0
        %v1143 = vadd.f32 0.0, %v1142
        %v1144 = vpop.f32.mrf.mxu0
        %v1145 = vadd.f32 0.0, %v1144
        %1146 = vdwg.mxu0
        %v1147 = vmul.f32 %v1138, 0.17677669
        %v1148 = vmul.f32 %v1140, 0.17677669
        %v1149 = vmul.f32 %v1143, 0.17677669
        %v1150 = vmul.f32 %v1145, 0.17677669
        %v1151 = vadd.f32 %v1147, %v547
        %v1152 = vadd.f32 %v1148, %v547
        %v1153 = vadd.f32 %v1149, %v547
        %v1154 = vadd.f32 %v1150, %v547
        %vm1155 = vcmask 64512
        %v1156 = vsel %vm1155, %v1151, -inf
        %1157 = vmax.xlane.f32.xlu0 %v1156
        %v1158 = vpop.xlane.xlu0 %1157
        %v1159 = vsel %vm1155, %v1152, -inf
        %1160 = vmax.xlane.f32.xlu0 %v1159
        %v1161 = vpop.xlane.xlu0 %1160
        %v1162 = vsel %vm1155, %v1153, -inf
        %1163 = vmax.xlane.f32.xlu0 %v1162
        %v1164 = vpop.xlane.xlu0 %1163
        %v1165 = vsel %vm1155, %v1154, -inf
        %1166 = vmax.xlane.f32.xlu0 %v1165
        %v1167 = vpop.xlane.xlu0 %1166
        %v1168 = vsub.f32 %v1151, %v1158
        %v1169 = vsub.f32 %v1152, %v1161
        %v1170 = vsub.f32 %v1153, %v1164
        %v1171 = vsub.f32 %v1154, %v1167
        %v1172 = vmul.f32 %v1168, 1.442695
        %v1173 = vpow.pop %v1172
        %v1174 = vmul.f32 %v1169, 1.442695
        %v1175 = vpow.pop %v1174
        %v1176 = vmul.f32 %v1170, 1.442695
        %v1177 = vpow.pop %v1176
        %v1178 = vmul.f32 %v1171, 1.442695
        %v1179 = vpow.pop %v1178
        %v1180 = vsel %vm1155, %v1173, 0.0
        %1181 = vadd.xlane.f32.xlu0 %v1180
        %v1182 = vpop.xlane.xlu0 %1181
        %v1183 = vsel %vm1155, %v1175, 0.0
        %1184 = vadd.xlane.f32.xlu0 %v1183
        %v1185 = vpop.xlane.xlu0 %1184
        %v1186 = vsel %vm1155, %v1177, 0.0
        %1187 = vadd.xlane.f32.xlu0 %v1186
        %v1188 = vpop.xlane.xlu0 %1187
        %v1189 = vsel %vm1155, %v1179, 0.0
        %1190 = vadd.xlane.f32.xlu0 %v1189
        %v1191 = vpop.xlane.xlu0 %1190
        %v1192 = vrcp.pop %v1182
        %v1193 = vrcp.pop %v1185
        %v1194 = vrcp.pop %v1188
        %v1195 = vrcp.pop %v1191
        %v1196 = vmul.f32 %v1173, %v1192
        %v1197 = vmul.f32 %v1175, %v1193
        %v1198 = vmul.f32 %v1177, %v1194
        %v1199 = vmul.f32 %v1179, %v1195
        %v1200 = vpack.c.bf16 %v1197, %v1196
        %v1201 = vpack.c.bf16 %v1199, %v1198
        %1203 = vrot.lane.b32.xlu0 %v1117, 96
        %v1204 = vpop.permute.xlu0 %1203
        %v1206 = vsel %vm1155, %v1200, 0
        %v1209 = vsel %vm1155, %v1201, 0
        %vm1211 = vcmask 1043456
        %v1213 = vsel %vm1211, %v1204, 0
        %1215 = vmatpush.bf16.msra.mxu0 0
        %1216 = vmatpush.bf16.msra.mxu0 0
        %1217 = vmatpush.bf16.msra.mxu0 0
        %1218 = vmatpush.bf16.msra.mxu0 0
        %1219 = vmatpush.bf16.msra.mxu0 0
        %1220 = vmatpush.bf16.msra.mxu0 0
        %1221 = vmatpush.bf16.msra.mxu0 0
        %1222 = vmatpush.bf16.msra.mxu0 %v1213
        %1223 = vmatmul.bf16.gmra.mxu0 %v1206
        %v1224 = vpop.f32.mrf.mxu0
        %v1225 = vadd.f32 0.0, %v1224
        %v1226 = vpop.f32.mrf.mxu0
        %v1227 = vadd.f32 0.0, %v1226
        %1228 = vmatmul.bf16.gmra.mxu0 %v1209
        %v1229 = vpop.f32.mrf.mxu0
        %v1230 = vadd.f32 0.0, %v1229
        %v1231 = vpop.f32.mrf.mxu0
        %v1232 = vadd.f32 0.0, %v1231
        %1233 = vdwg.mxu0
        %1235 = vrot.lane.b32.xlu0 %v1227, 32
        %v1236 = vpop.permute.xlu0 %1235
        %1239 = vrot.lane.b32.xlu0 %v1230, 64
        %v1240 = vpop.permute.xlu0 %1239
        %1243 = vrot.lane.b32.xlu0 %v1232, 96
        %v1244 = vpop.permute.xlu0 %1243
        %v1246 = vsel %vm1118, %v1225, %v1236
        %vm1247 = vcmask 523264
        %v1248 = vsel %vm1247, %v1246, %v1240
        %vm1249 = vcmask 785408
        %v1250 = vsel %vm1249, %v1248, %v1244
        %1252 = vrot.lane.b32.xlu0 %v916, 96
        %v1253 = vpop.permute.xlu0 %1252
        %1255 = vrot.lane.b32.xlu0 %v916, 64
        %v1256 = vpop.permute.xlu0 %1255
        %1258 = vrot.lane.b32.xlu0 %v916, 32
        %v1259 = vpop.permute.xlu0 %1258
        %v1261 = vmul.f32 %v916, %v526
        %v1262 = vmul.f32 %v1253, %v527
        %v1263 = vmul.f32 %v1256, %v528
        %v1264 = vmul.f32 %v1259, %v529
        %v1265 = vmul.f32 %v916, %v1007
        %v1266 = vmul.f32 %v1253, %v1009
        %v1267 = vmul.f32 %v1256, %v1011
        %v1268 = vmul.f32 %v1259, %v1013
        %1273 = vrot.lane.b32.xlu0 %v1265, 112
        %v1274 = vpop.permute.xlu0 %1273
        %1275 = vrot.lane.b32.xlu0 %v1266, 112
        %v1276 = vpop.permute.xlu0 %1275
        %1277 = vrot.lane.b32.xlu0 %v1267, 112
        %v1278 = vpop.permute.xlu0 %1277
        %1279 = vrot.lane.b32.xlu0 %v1268, 112
        %v1280 = vpop.permute.xlu0 %1279
        %v1285 = vsub.f32 %v1261, %v1274
        %v1286 = vsub.f32 %v1262, %v1276
        %v1287 = vsub.f32 %v1263, %v1278
        %v1288 = vsub.f32 %v1264, %v1280
        %v1289 = vmul.f32 %v916, %v1047
        %v1290 = vmul.f32 %v1253, %v1049
        %v1291 = vmul.f32 %v1256, %v1051
        %v1292 = vmul.f32 %v1259, %v1053
        %v1293 = vmul.f32 %v916, %v530
        %v1294 = vmul.f32 %v1253, %v531
        %v1295 = vmul.f32 %v1256, %v532
        %v1296 = vmul.f32 %v1259, %v533
        %1301 = vrot.lane.b32.xlu0 %v1293, 16
        %v1302 = vpop.permute.xlu0 %1301
        %1303 = vrot.lane.b32.xlu0 %v1294, 16
        %v1304 = vpop.permute.xlu0 %1303
        %1305 = vrot.lane.b32.xlu0 %v1295, 16
        %v1306 = vpop.permute.xlu0 %1305
        %1307 = vrot.lane.b32.xlu0 %v1296, 16
        %v1308 = vpop.permute.xlu0 %1307
        %v1313 = vadd.f32 %v1289, %v1302
        %v1314 = vadd.f32 %v1290, %v1304
        %v1315 = vadd.f32 %v1291, %v1306
        %v1316 = vadd.f32 %v1292, %v1308
        %v1317 = vsel %vm1086, %v1285, %v1313
        %v1318 = vsel %vm1086, %v1286, %v1314
        %v1319 = vsel %vm1086, %v1287, %v1315
        %v1320 = vsel %vm1086, %v1288, %v1316
        %v1321 = vpack.c.bf16 %v1318, %v1317
        %v1322 = vpack.c.bf16 %v1320, %v1319
        %v1323 = vmul.f32 %v930, %v534
        %v1324 = vmul.f32 %v930, %v1096
        %1326 = vrot.lane.b32.xlu0 %v1324, 112
        %v1327 = vpop.permute.xlu0 %1326
        %v1329 = vsub.f32 %v1323, %v1327
        %v1330 = vmul.f32 %v930, %v1106
        %v1331 = vmul.f32 %v930, %v535
        %1333 = vrot.lane.b32.xlu0 %v1331, 16
        %v1334 = vpop.permute.xlu0 %1333
        %v1336 = vadd.f32 %v1330, %v1334
        %v1337 = vsel %vm1086, %v1329, %v1336
        %v1338 = vpack.c.bf16 %v1337, %v1337
        %v1339 = vpack.c.bf16 %v930, %v930
        %v1341 = vsel %vm1118, %v1321, 0
        %v1344 = vsel %vm1118, %v1322, 0
        %v1347 = vsel %vm1118, %v1338, 0
        %1349 = vmatpush.bf16.xpose.msra.mxu0 0
        %1350 = vmatpush.bf16.xpose.msra.mxu0 0
        %1351 = vmatpush.bf16.xpose.msra.mxu0 0
        %1352 = vmatpush.bf16.xpose.msra.mxu0 0
        %1353 = vmatpush.bf16.xpose.msra.mxu0 0
        %1354 = vmatpush.bf16.xpose.msra.mxu0 0
        %1355 = vmatpush.bf16.xpose.msra.mxu0 0
        %1356 = vmatpush.bf16.xpose.msra.mxu0 %v1347
        %1357 = vmatmul.bf16.gmra.mxu0 %v1341
        %v1358 = vpop.f32.mrf.mxu0
        %v1359 = vadd.f32 0.0, %v1358
        %v1360 = vpop.f32.mrf.mxu0
        %v1361 = vadd.f32 0.0, %v1360
        %1362 = vmatmul.bf16.gmra.mxu0 %v1344
        %v1363 = vpop.f32.mrf.mxu0
        %v1364 = vadd.f32 0.0, %v1363
        %v1365 = vpop.f32.mrf.mxu0
        %v1366 = vadd.f32 0.0, %v1365
        %1367 = vdwg.mxu0
        %v1368 = vmul.f32 %v1359, 0.17677669
        %v1369 = vmul.f32 %v1361, 0.17677669
        %v1370 = vmul.f32 %v1364, 0.17677669
        %v1371 = vmul.f32 %v1366, 0.17677669
        %v1372 = vadd.f32 %v1368, %v555
        %v1373 = vadd.f32 %v1369, %v555
        %v1374 = vadd.f32 %v1370, %v555
        %v1375 = vadd.f32 %v1371, %v555
        %v1376 = vsel %vm1155, %v1372, -inf
        %1377 = vmax.xlane.f32.xlu0 %v1376
        %v1378 = vpop.xlane.xlu0 %1377
        %v1379 = vsel %vm1155, %v1373, -inf
        %1380 = vmax.xlane.f32.xlu0 %v1379
        %v1381 = vpop.xlane.xlu0 %1380
        %v1382 = vsel %vm1155, %v1374, -inf
        %1383 = vmax.xlane.f32.xlu0 %v1382
        %v1384 = vpop.xlane.xlu0 %1383
        %v1385 = vsel %vm1155, %v1375, -inf
        %1386 = vmax.xlane.f32.xlu0 %v1385
        %v1387 = vpop.xlane.xlu0 %1386
        %v1388 = vsub.f32 %v1372, %v1378
        %v1389 = vsub.f32 %v1373, %v1381
        %v1390 = vsub.f32 %v1374, %v1384
        %v1391 = vsub.f32 %v1375, %v1387
        %v1392 = vmul.f32 %v1388, 1.442695
        %v1393 = vpow.pop %v1392
        %v1394 = vmul.f32 %v1389, 1.442695
        %v1395 = vpow.pop %v1394
        %v1396 = vmul.f32 %v1390, 1.442695
        %v1397 = vpow.pop %v1396
        %v1398 = vmul.f32 %v1391, 1.442695
        %v1399 = vpow.pop %v1398
        %v1400 = vsel %vm1155, %v1393, 0.0
        %1401 = vadd.xlane.f32.xlu0 %v1400
        %v1402 = vpop.xlane.xlu0 %1401
        %v1403 = vsel %vm1155, %v1395, 0.0
        %1404 = vadd.xlane.f32.xlu0 %v1403
        %v1405 = vpop.xlane.xlu0 %1404
        %v1406 = vsel %vm1155, %v1397, 0.0
        %1407 = vadd.xlane.f32.xlu0 %v1406
        %v1408 = vpop.xlane.xlu0 %1407
        %v1409 = vsel %vm1155, %v1399, 0.0
        %1410 = vadd.xlane.f32.xlu0 %v1409
        %v1411 = vpop.xlane.xlu0 %1410
        %v1412 = vrcp.pop %v1402
        %v1413 = vrcp.pop %v1405
        %v1414 = vrcp.pop %v1408
        %v1415 = vrcp.pop %v1411
        %v1416 = vmul.f32 %v1393, %v1412
        %v1417 = vmul.f32 %v1395, %v1413
        %v1418 = vmul.f32 %v1397, %v1414
        %v1419 = vmul.f32 %v1399, %v1415
        %v1420 = vpack.c.bf16 %v1417, %v1416
        %v1421 = vpack.c.bf16 %v1419, %v1418
        %1423 = vrot.lane.b32.xlu0 %v1339, 96
        %v1424 = vpop.permute.xlu0 %1423
        %v1426 = vsel %vm1155, %v1420, 0
        %v1429 = vsel %vm1155, %v1421, 0
        %v1432 = vsel %vm1211, %v1424, 0
        %1434 = vmatpush.bf16.msra.mxu0 0
        %1435 = vmatpush.bf16.msra.mxu0 0
        %1436 = vmatpush.bf16.msra.mxu0 0
        %1437 = vmatpush.bf16.msra.mxu0 0
        %1438 = vmatpush.bf16.msra.mxu0 0
        %1439 = vmatpush.bf16.msra.mxu0 0
        %1440 = vmatpush.bf16.msra.mxu0 0
        %1441 = vmatpush.bf16.msra.mxu0 %v1432
        %1442 = vmatmul.bf16.gmra.mxu0 %v1426
        %v1443 = vpop.f32.mrf.mxu0
        %v1444 = vadd.f32 0.0, %v1443
        %v1445 = vpop.f32.mrf.mxu0
        %v1446 = vadd.f32 0.0, %v1445
        %1447 = vmatmul.bf16.gmra.mxu0 %v1429
        %v1448 = vpop.f32.mrf.mxu0
        %v1449 = vadd.f32 0.0, %v1448
        %v1450 = vpop.f32.mrf.mxu0
        %v1451 = vadd.f32 0.0, %v1450
        %1452 = vdwg.mxu0
        %1454 = vrot.lane.b32.xlu0 %v1446, 32
        %v1455 = vpop.permute.xlu0 %1454
        %1458 = vrot.lane.b32.xlu0 %v1449, 64
        %v1459 = vpop.permute.xlu0 %1458
        %1462 = vrot.lane.b32.xlu0 %v1451, 96
        %v1463 = vpop.permute.xlu0 %1462
        %v1465 = vsel %vm1118, %v1444, %v1455
        %v1466 = vsel %vm1247, %v1465, %v1459
        %v1467 = vsel %vm1249, %v1466, %v1463
        %v1468 = vpack.c.bf16 %v1467, %v1250
        %v1469 = vld [vmem:[%s9] sm:$0xf]
        %v1470 = vld [vmem:[%s9 + $0x4] sm:$0xf]
        %v1471 = vld [vmem:[%s9 + $0x8] sm:$0xf]
        %v1472 = vld [vmem:[%s9 + $0xc] sm:$0xf]
        %v1473 = vld [vmem:[%s9 + $0x10] sm:$0xf]
        %v1474 = vld [vmem:[%s9 + $0x14] sm:$0xf]
        %v1475 = vld [vmem:[%s9 + $0x18] sm:$0xf]
        %v1476 = vld [vmem:[%s9 + $0x1c] sm:$0xf]
        %v1477 = vld [vmem:[%s9 + $0x20] sm:$0xf]
        %v1478 = vld [vmem:[%s9 + $0x24] sm:$0xf]
        %v1479 = vld [vmem:[%s9 + $0x28] sm:$0xf]
        %v1480 = vld [vmem:[%s9 + $0x2c] sm:$0xf]
        %v1481 = vld [vmem:[%s9 + $0x30] sm:$0xf]
        %v1482 = vld [vmem:[%s9 + $0x34] sm:$0xf]
        %v1483 = vld [vmem:[%s9 + $0x38] sm:$0xf]
        %v1484 = vld [vmem:[%s9 + $0x3c] sm:$0xf]
        %v1501 = vunpack.c.l.b16 %v1469
        %v1502 = vunpack.c.l.b16 %v1470
        %v1503 = vunpack.c.l.b16 %v1471
        %v1504 = vunpack.c.l.b16 %v1472
        %v1505 = vunpack.c.l.b16 %v1473
        %v1506 = vunpack.c.l.b16 %v1474
        %v1507 = vunpack.c.l.b16 %v1475
        %v1508 = vunpack.c.l.b16 %v1476
        %v1509 = vunpack.c.l.b16 %v1477
        %v1510 = vunpack.c.l.b16 %v1478
        %v1511 = vunpack.c.l.b16 %v1479
        %v1512 = vunpack.c.l.b16 %v1480
        %v1513 = vunpack.c.l.b16 %v1481
        %v1514 = vunpack.c.l.b16 %v1482
        %v1515 = vunpack.c.l.b16 %v1483
        %v1516 = vunpack.c.l.b16 %v1484
        %v1517 = vpack.c.b16 %v1502, %v1501
        %v1518 = vpack.c.b16 %v1504, %v1503
        %v1519 = vpack.c.b16 %v1506, %v1505
        %v1520 = vpack.c.b16 %v1508, %v1507
        %v1521 = vpack.c.b16 %v1510, %v1509
        %v1522 = vpack.c.b16 %v1512, %v1511
        %v1523 = vpack.c.b16 %v1514, %v1513
        %v1524 = vpack.c.b16 %v1516, %v1515
        %1533 = vmatpush.bf16.msra.mxu0 %v1524
        %1534 = vmatpush.bf16.msra.mxu0 %v1523
        %1535 = vmatpush.bf16.msra.mxu0 %v1522
        %1536 = vmatpush.bf16.msra.mxu0 %v1521
        %1537 = vmatpush.bf16.msra.mxu0 %v1520
        %1538 = vmatpush.bf16.msra.mxu0 %v1519
        %1539 = vmatpush.bf16.msra.mxu0 %v1518
        %1540 = vmatpush.bf16.msra.mxu0 %v1517
        %1541 = vmatmul.bf16.gmra.mxu0 %v1468
        %v1542 = vpop.f32.mrf.mxu0
        %v1543 = vadd.f32 0.0, %v1542
        %v1544 = vpop.f32.mrf.mxu0
        %v1545 = vadd.f32 0.0, %v1544
        %1546 = vdwg.mxu0
        %v1547 = vmul.f32 %v942, 0.5
        %v1548 = vmul.f32 %v956, 0.5
        %v1549 = vmul.f32 %v970, 0.5
        %v1550 = vmul.f32 %v984, 0.5
        %v1551 = vmul.f32 %v944, 0.5
        %v1552 = vmul.f32 %v958, 0.5
        %v1553 = vmul.f32 %v972, 0.5
        %v1554 = vmul.f32 %v986, 0.5
        %v1555 = vmul.f32 %v942, 0.044715
        %v1556 = vmul.f32 %v956, 0.044715
        %v1557 = vmul.f32 %v970, 0.044715
        %v1558 = vmul.f32 %v984, 0.044715
        %v1559 = vmul.f32 %v944, 0.044715
        %v1560 = vmul.f32 %v958, 0.044715
        %v1561 = vmul.f32 %v972, 0.044715
        %v1562 = vmul.f32 %v986, 0.044715
        %v1563 = vmul.f32 %v1555, %v942
        %v1564 = vmul.f32 %v1556, %v956
        %v1565 = vmul.f32 %v1557, %v970
        %v1566 = vmul.f32 %v1558, %v984
        %v1567 = vmul.f32 %v1559, %v944
        %v1568 = vmul.f32 %v1560, %v958
        %v1569 = vmul.f32 %v1561, %v972
        %v1570 = vmul.f32 %v1562, %v986
        %v1571 = vmul.f32 %v1563, %v942
        %v1572 = vmul.f32 %v1564, %v956
        %v1573 = vmul.f32 %v1565, %v970
        %v1574 = vmul.f32 %v1566, %v984
        %v1575 = vmul.f32 %v1567, %v944
        %v1576 = vmul.f32 %v1568, %v958
        %v1577 = vmul.f32 %v1569, %v972
        %v1578 = vmul.f32 %v1570, %v986
        %v1579 = vadd.f32 %v942, %v1571
        %v1580 = vadd.f32 %v956, %v1572
        %v1581 = vadd.f32 %v970, %v1573
        %v1582 = vadd.f32 %v984, %v1574
        %v1583 = vadd.f32 %v944, %v1575
        %v1584 = vadd.f32 %v958, %v1576
        %v1585 = vadd.f32 %v972, %v1577
        %v1586 = vadd.f32 %v986, %v1578
        %v1587 = vmul.f32 %v1579, 0.7978846
        %v1588 = vmul.f32 %v1580, 0.7978846
        %v1589 = vmul.f32 %v1581, 0.7978846
        %v1590 = vmul.f32 %v1582, 0.7978846
        %v1591 = vmul.f32 %v1583, 0.7978846
        %v1592 = vmul.f32 %v1584, 0.7978846
        %v1593 = vmul.f32 %v1585, 0.7978846
        %v1594 = vmul.f32 %v1586, 0.7978846
        %v1595 = vtanh.pop %v1587
        %v1596 = vtanh.pop %v1588
        %v1597 = vtanh.pop %v1589
        %v1598 = vtanh.pop %v1590
        %v1599 = vtanh.pop %v1591
        %v1600 = vtanh.pop %v1592
        %v1601 = vtanh.pop %v1593
        %v1602 = vtanh.pop %v1594
        %v1603 = vadd.f32 %v1595, 1.0
        %v1604 = vadd.f32 %v1596, 1.0
        %v1605 = vadd.f32 %v1597, 1.0
        %v1606 = vadd.f32 %v1598, 1.0
        %v1607 = vadd.f32 %v1599, 1.0
        %v1608 = vadd.f32 %v1600, 1.0
        %v1609 = vadd.f32 %v1601, 1.0
        %v1610 = vadd.f32 %v1602, 1.0
        %v1611 = vmul.f32 %v1547, %v1603
        %v1612 = vmul.f32 %v1548, %v1604
        %v1613 = vmul.f32 %v1549, %v1605
        %v1614 = vmul.f32 %v1550, %v1606
        %v1615 = vmul.f32 %v1551, %v1607
        %v1616 = vmul.f32 %v1552, %v1608
        %v1617 = vmul.f32 %v1553, %v1609
        %v1618 = vmul.f32 %v1554, %v1610
        %v1619 = vpack.c.bf16 %v1615, %v1611
        %v1620 = vpack.c.bf16 %v1616, %v1612
        %v1621 = vpack.c.bf16 %v1617, %v1613
        %v1622 = vpack.c.bf16 %v1618, %v1614
        %v1623 = vld [vmem:[#allocation4] sm:$0xf]
        %v1624 = vld [vmem:[#allocation4 + $0x4] sm:$0xf]
        %v1625 = vld [vmem:[#allocation4 + $0x8] sm:$0xf]
        %v1626 = vld [vmem:[#allocation4 + $0xc] sm:$0xf]
        %v1627 = vld [vmem:[#allocation4 + $0x10] sm:$0xf]
        %v1628 = vld [vmem:[#allocation4 + $0x14] sm:$0xf]
        %v1629 = vld [vmem:[#allocation4 + $0x18] sm:$0xf]
        %v1630 = vld [vmem:[#allocation4 + $0x1c] sm:$0xf]
        %v1631 = vld [vmem:[#allocation4 + $0x20] sm:$0xf]
        %v1632 = vld [vmem:[#allocation4 + $0x24] sm:$0xf]
        %v1633 = vld [vmem:[#allocation4 + $0x28] sm:$0xf]
        %v1634 = vld [vmem:[#allocation4 + $0x2c] sm:$0xf]
        %v1635 = vld [vmem:[#allocation4 + $0x30] sm:$0xf]
        %v1636 = vld [vmem:[#allocation4 + $0x34] sm:$0xf]
        %v1637 = vld [vmem:[#allocation4 + $0x38] sm:$0xf]
        %v1638 = vld [vmem:[#allocation4 + $0x3c] sm:$0xf]
        %v1639 = vld [vmem:[#allocation4 + $0x40] sm:$0xf]
        %v1640 = vld [vmem:[#allocation4 + $0x44] sm:$0xf]
        %v1641 = vld [vmem:[#allocation4 + $0x48] sm:$0xf]
        %v1642 = vld [vmem:[#allocation4 + $0x4c] sm:$0xf]
        %v1643 = vld [vmem:[#allocation4 + $0x50] sm:$0xf]
        %v1644 = vld [vmem:[#allocation4 + $0x54] sm:$0xf]
        %v1645 = vld [vmem:[#allocation4 + $0x58] sm:$0xf]
        %v1646 = vld [vmem:[#allocation4 + $0x5c] sm:$0xf]
        %v1647 = vld [vmem:[#allocation4 + $0x60] sm:$0xf]
        %v1648 = vld [vmem:[#allocation4 + $0x64] sm:$0xf]
        %v1649 = vld [vmem:[#allocation4 + $0x68] sm:$0xf]
        %v1650 = vld [vmem:[#allocation4 + $0x6c] sm:$0xf]
        %v1651 = vld [vmem:[#allocation4 + $0x70] sm:$0xf]
        %v1652 = vld [vmem:[#allocation4 + $0x74] sm:$0xf]
        %v1653 = vld [vmem:[#allocation4 + $0x78] sm:$0xf]
        %v1654 = vld [vmem:[#allocation4 + $0x7c] sm:$0xf]
        %v1655 = vld [vmem:[#allocation4 + $0x80] sm:$0xf]
        %v1656 = vld [vmem:[#allocation4 + $0x84] sm:$0xf]
        %v1657 = vld [vmem:[#allocation4 + $0x88] sm:$0xf]
        %v1658 = vld [vmem:[#allocation4 + $0x8c] sm:$0xf]
        %v1659 = vld [vmem:[#allocation4 + $0x90] sm:$0xf]
        %v1660 = vld [vmem:[#allocation4 + $0x94] sm:$0xf]
        %v1661 = vld [vmem:[#allocation4 + $0x98] sm:$0xf]
        %v1662 = vld [vmem:[#allocation4 + $0x9c] sm:$0xf]
        %v1663 = vld [vmem:[#allocation4 + $0xa0] sm:$0xf]
        %v1664 = vld [vmem:[#allocation4 + $0xa4] sm:$0xf]
        %v1665 = vld [vmem:[#allocation4 + $0xa8] sm:$0xf]
        %v1666 = vld [vmem:[#allocation4 + $0xac] sm:$0xf]
        %v1667 = vld [vmem:[#allocation4 + $0xb0] sm:$0xf]
        %v1668 = vld [vmem:[#allocation4 + $0xb4] sm:$0xf]
        %v1669 = vld [vmem:[#allocation4 + $0xb8] sm:$0xf]
        %v1670 = vld [vmem:[#allocation4 + $0xbc] sm:$0xf]
        %v1671 = vld [vmem:[#allocation4 + $0xc0] sm:$0xf]
        %v1672 = vld [vmem:[#allocation4 + $0xc4] sm:$0xf]
        %v1673 = vld [vmem:[#allocation4 + $0xc8] sm:$0xf]
        %v1674 = vld [vmem:[#allocation4 + $0xcc] sm:$0xf]
        %v1675 = vld [vmem:[#allocation4 + $0xd0] sm:$0xf]
        %v1676 = vld [vmem:[#allocation4 + $0xd4] sm:$0xf]
        %v1677 = vld [vmem:[#allocation4 + $0xd8] sm:$0xf]
        %v1678 = vld [vmem:[#allocation4 + $0xdc] sm:$0xf]
        %v1679 = vld [vmem:[#allocation4 + $0xe0] sm:$0xf]
        %v1680 = vld [vmem:[#allocation4 + $0xe4] sm:$0xf]
        %v1681 = vld [vmem:[#allocation4 + $0xe8] sm:$0xf]
        %v1682 = vld [vmem:[#allocation4 + $0xec] sm:$0xf]
        %v1683 = vld [vmem:[#allocation4 + $0xf0] sm:$0xf]
        %v1684 = vld [vmem:[#allocation4 + $0xf4] sm:$0xf]
        %v1685 = vld [vmem:[#allocation4 + $0xf8] sm:$0xf]
        %v1686 = vld [vmem:[#allocation4 + $0xfc] sm:$0xf]
        %v1751 = vunpack.c.l.b16 %v1623
        %v1752 = vunpack.c.l.b16 %v1624
        %v1753 = vunpack.c.l.b16 %v1625
        %v1754 = vunpack.c.l.b16 %v1626
        %v1755 = vunpack.c.l.b16 %v1627
        %v1756 = vunpack.c.l.b16 %v1628
        %v1757 = vunpack.c.l.b16 %v1629
        %v1758 = vunpack.c.l.b16 %v1630
        %v1759 = vunpack.c.l.b16 %v1631
        %v1760 = vunpack.c.l.b16 %v1632
        %v1761 = vunpack.c.l.b16 %v1633
        %v1762 = vunpack.c.l.b16 %v1634
        %v1763 = vunpack.c.l.b16 %v1635
        %v1764 = vunpack.c.l.b16 %v1636
        %v1765 = vunpack.c.l.b16 %v1637
        %v1766 = vunpack.c.l.b16 %v1638
        %v1767 = vunpack.c.l.b16 %v1639
        %v1768 = vunpack.c.l.b16 %v1640
        %v1769 = vunpack.c.l.b16 %v1641
        %v1770 = vunpack.c.l.b16 %v1642
        %v1771 = vunpack.c.l.b16 %v1643
        %v1772 = vunpack.c.l.b16 %v1644
        %v1773 = vunpack.c.l.b16 %v1645
        %v1774 = vunpack.c.l.b16 %v1646
        %v1775 = vunpack.c.l.b16 %v1647
        %v1776 = vunpack.c.l.b16 %v1648
        %v1777 = vunpack.c.l.b16 %v1649
        %v1778 = vunpack.c.l.b16 %v1650
        %v1779 = vunpack.c.l.b16 %v1651
        %v1780 = vunpack.c.l.b16 %v1652
        %v1781 = vunpack.c.l.b16 %v1653
        %v1782 = vunpack.c.l.b16 %v1654
        %v1783 = vunpack.c.l.b16 %v1655
        %v1784 = vunpack.c.l.b16 %v1656
        %v1785 = vunpack.c.l.b16 %v1657
        %v1786 = vunpack.c.l.b16 %v1658
        %v1787 = vunpack.c.l.b16 %v1659
        %v1788 = vunpack.c.l.b16 %v1660
        %v1789 = vunpack.c.l.b16 %v1661
        %v1790 = vunpack.c.l.b16 %v1662
        %v1791 = vunpack.c.l.b16 %v1663
        %v1792 = vunpack.c.l.b16 %v1664
        %v1793 = vunpack.c.l.b16 %v1665
        %v1794 = vunpack.c.l.b16 %v1666
        %v1795 = vunpack.c.l.b16 %v1667
        %v1796 = vunpack.c.l.b16 %v1668
        %v1797 = vunpack.c.l.b16 %v1669
        %v1798 = vunpack.c.l.b16 %v1670
        %v1799 = vunpack.c.l.b16 %v1671
        %v1800 = vunpack.c.l.b16 %v1672
        %v1801 = vunpack.c.l.b16 %v1673
        %v1802 = vunpack.c.l.b16 %v1674
        %v1803 = vunpack.c.l.b16 %v1675
        %v1804 = vunpack.c.l.b16 %v1676
        %v1805 = vunpack.c.l.b16 %v1677
        %v1806 = vunpack.c.l.b16 %v1678
        %v1807 = vunpack.c.l.b16 %v1679
        %v1808 = vunpack.c.l.b16 %v1680
        %v1809 = vunpack.c.l.b16 %v1681
        %v1810 = vunpack.c.l.b16 %v1682
        %v1811 = vunpack.c.l.b16 %v1683
        %v1812 = vunpack.c.l.b16 %v1684
        %v1813 = vunpack.c.l.b16 %v1685
        %v1814 = vunpack.c.l.b16 %v1686
        %v1815 = vpack.c.b16 %v1752, %v1751
        %v1816 = vpack.c.b16 %v1754, %v1753
        %v1817 = vpack.c.b16 %v1756, %v1755
        %v1818 = vpack.c.b16 %v1758, %v1757
        %v1819 = vpack.c.b16 %v1760, %v1759
        %v1820 = vpack.c.b16 %v1762, %v1761
        %v1821 = vpack.c.b16 %v1764, %v1763
        %v1822 = vpack.c.b16 %v1766, %v1765
        %v1823 = vpack.c.b16 %v1768, %v1767
        %v1824 = vpack.c.b16 %v1770, %v1769
        %v1825 = vpack.c.b16 %v1772, %v1771
        %v1826 = vpack.c.b16 %v1774, %v1773
        %v1827 = vpack.c.b16 %v1776, %v1775
        %v1828 = vpack.c.b16 %v1778, %v1777
        %v1829 = vpack.c.b16 %v1780, %v1779
        %v1830 = vpack.c.b16 %v1782, %v1781
        %v1831 = vpack.c.b16 %v1784, %v1783
        %v1832 = vpack.c.b16 %v1786, %v1785
        %v1833 = vpack.c.b16 %v1788, %v1787
        %v1834 = vpack.c.b16 %v1790, %v1789
        %v1835 = vpack.c.b16 %v1792, %v1791
        %v1836 = vpack.c.b16 %v1794, %v1793
        %v1837 = vpack.c.b16 %v1796, %v1795
        %v1838 = vpack.c.b16 %v1798, %v1797
        %v1839 = vpack.c.b16 %v1800, %v1799
        %v1840 = vpack.c.b16 %v1802, %v1801
        %v1841 = vpack.c.b16 %v1804, %v1803
        %v1842 = vpack.c.b16 %v1806, %v1805
        %v1843 = vpack.c.b16 %v1808, %v1807
        %v1844 = vpack.c.b16 %v1810, %v1809
        %v1845 = vpack.c.b16 %v1812, %v1811
        %v1846 = vpack.c.b16 %v1814, %v1813
        %1879 = vmatpush.bf16.msra.mxu0 %v1822
        %1880 = vmatpush.bf16.msra.mxu0 %v1821
        %1881 = vmatpush.bf16.msra.mxu0 %v1820
        %1882 = vmatpush.bf16.msra.mxu0 %v1819
        %1883 = vmatpush.bf16.msra.mxu0 %v1818
        %1884 = vmatpush.bf16.msra.mxu0 %v1817
        %1885 = vmatpush.bf16.msra.mxu0 %v1816
        %1886 = vmatpush.bf16.msra.mxu0 %v1815
        %1887 = vmatmul.bf16.gmra.mxu0 %v1619
        %v1888 = vpop.f32.mrf.mxu0
        %v1889 = vadd.f32 0.0, %v1888
        %v1890 = vpop.f32.mrf.mxu0
        %v1891 = vadd.f32 0.0, %v1890
        %1892 = vdwg.mxu0
        %1893 = vmatpush.bf16.msra.mxu0 %v1830
        %1894 = vmatpush.bf16.msra.mxu0 %v1829
        %1895 = vmatpush.bf16.msra.mxu0 %v1828
        %1896 = vmatpush.bf16.msra.mxu0 %v1827
        %1897 = vmatpush.bf16.msra.mxu0 %v1826
        %1898 = vmatpush.bf16.msra.mxu0 %v1825
        %1899 = vmatpush.bf16.msra.mxu0 %v1824
        %1900 = vmatpush.bf16.msra.mxu0 %v1823
        %1901 = vmatmul.bf16.gmra.mxu0 %v1620
        %v1902 = vpop.f32.mrf.mxu0
        %v1903 = vadd.f32 %v1889, %v1902
        %v1904 = vpop.f32.mrf.mxu0
        %v1905 = vadd.f32 %v1891, %v1904
        %1906 = vdwg.mxu0
        %1907 = vmatpush.bf16.msra.mxu0 %v1838
        %1908 = vmatpush.bf16.msra.mxu0 %v1837
        %1909 = vmatpush.bf16.msra.mxu0 %v1836
        %1910 = vmatpush.bf16.msra.mxu0 %v1835
        %1911 = vmatpush.bf16.msra.mxu0 %v1834
        %1912 = vmatpush.bf16.msra.mxu0 %v1833
        %1913 = vmatpush.bf16.msra.mxu0 %v1832
        %1914 = vmatpush.bf16.msra.mxu0 %v1831
        %1915 = vmatmul.bf16.gmra.mxu0 %v1621
        %v1916 = vpop.f32.mrf.mxu0
        %v1917 = vadd.f32 %v1903, %v1916
        %v1918 = vpop.f32.mrf.mxu0
        %v1919 = vadd.f32 %v1905, %v1918
        %1920 = vdwg.mxu0
        %1921 = vmatpush.bf16.msra.mxu0 %v1846
        %1922 = vmatpush.bf16.msra.mxu0 %v1845
        %1923 = vmatpush.bf16.msra.mxu0 %v1844
        %1924 = vmatpush.bf16.msra.mxu0 %v1843
        %1925 = vmatpush.bf16.msra.mxu0 %v1842
        %1926 = vmatpush.bf16.msra.mxu0 %v1841
        %1927 = vmatpush.bf16.msra.mxu0 %v1840
        %1928 = vmatpush.bf16.msra.mxu0 %v1839
        %1929 = vmatmul.bf16.gmra.mxu0 %v1622
        %v1930 = vpop.f32.mrf.mxu0
        %v1931 = vadd.f32 %v1917, %v1930
        %v1932 = vpop.f32.mrf.mxu0
        %v1933 = vadd.f32 %v1919, %v1932
        %1934 = vdwg.mxu0
        %v1935 = vadd.f32 %v524, %v1543
        %v1936 = vadd.f32 %v525, %v1545
        %v1937 = vadd.f32 %v1935, %v1931
        %v1938 = vadd.f32 %v1936, %v1933
        %s1939 = scalar_lea.vmem %s6, 1
        %v1940 = vld [vmem:[%s1939] sm:$0x1]
        %s1941 = scalar_lea.vmem %s7, 1
        %v1942 = vld [vmem:[%s1941] sm:$0x1]
        %1943 = vadd.xlane.f32.xlu0 %v1937
        %v1944 = vpop.xlane.xlu0 %1943
        %1945 = vadd.xlane.f32.xlu0 %v1938
        %v1946 = vpop.xlane.xlu0 %1945
        %v1947 = vmul.f32 %v1944, %v568
        %v1948 = vmul.f32 %v1946, %v568
        %v1949 = vsub.f32 %v1937, %v1947
        %v1950 = vsub.f32 %v1938, %v1948
        %v1951 = vmul.f32 %v1949, %v1949
        %v1952 = vmul.f32 %v1950, %v1950
        %1953 = vadd.xlane.f32.xlu0 %v1951
        %v1954 = vpop.xlane.xlu0 %1953
        %1955 = vadd.xlane.f32.xlu0 %v1952
        %v1956 = vpop.xlane.xlu0 %1955
        %v1957 = vmul.f32 %v1954, %v568
        %v1958 = vmul.f32 %v1956, %v568
        %v1959 = vadd.f32 %v1957, 1e-05
        %v1960 = vadd.f32 %v1958, 1e-05
        %v1961 = vrsqrt.pop %v1959
        %v1962 = vmul.f32 %v1961, %v1959
        %v1963 = vmul.f32 %v1962, %v1961
        %v1964 = vmul.f32 0.5, %v1963
        %v1965 = vsub.f32 1.5, %v1964
        %v1966 = vmul.f32 %v1961, %v1965
        %vm1967 = vweird.f32 %v1959
        %vm1968 = vweird.f32 %v1961
        %vm1969 = vmor %vm1967, %vm1968
        %v1970 = vsel %vm1969, %v1961, %v1966
        %v1971 = vrsqrt.pop %v1960
        %v1972 = vmul.f32 %v1971, %v1960
        %v1973 = vmul.f32 %v1972, %v1971
        %v1974 = vmul.f32 0.5, %v1973
        %v1975 = vsub.f32 1.5, %v1974
        %v1976 = vmul.f32 %v1971, %v1975
        %vm1977 = vweird.f32 %v1960
        %vm1978 = vweird.f32 %v1971
        %vm1979 = vmor %vm1977, %vm1978
        %v1980 = vsel %vm1979, %v1971, %v1976
        %v1981 = vmul.f32 %v1949, %v1970
        %v1982 = vmul.f32 %v1950, %v1980
        %v1984 = vperm.slane %v1940, 0
        %v1986 = vmul.f32 %v1981, %v1984
        %v1987 = vmul.f32 %v1982, %v1984
        %v1989 = vperm.slane %v1942, 0
        %v1991 = vadd.f32 %v1986, %v1989
        %v1992 = vadd.f32 %v1987, %v1989
        %v1993 = vpack.c.bf16 %v1992, %v1991
        %s1994 = scalar_lea.vmem [#allocation2], 384
        %v1995 = vld [vmem:[%s1994] sm:$0xff]
        %v1996 = vld [vmem:[%s1994 + $0x8] sm:$0xff]
        %v1997 = vld [vmem:[%s1994 + $0x10] sm:$0xff]
        %v1998 = vld [vmem:[%s1994 + $0x18] sm:$0xff]
        %v1999 = vld [vmem:[%s1994 + $0x20] sm:$0xff]
        %v2000 = vld [vmem:[%s1994 + $0x28] sm:$0xff]
        %v2001 = vld [vmem:[%s1994 + $0x30] sm:$0xff]
        %v2002 = vld [vmem:[%s1994 + $0x38] sm:$0xff]
        %v2003 = vld [vmem:[%s1994 + $0x40] sm:$0xff]
        %v2004 = vld [vmem:[%s1994 + $0x48] sm:$0xff]
        %v2005 = vld [vmem:[%s1994 + $0x50] sm:$0xff]
        %v2006 = vld [vmem:[%s1994 + $0x58] sm:$0xff]
        %v2007 = vld [vmem:[%s1994 + $0x60] sm:$0xff]
        %v2008 = vld [vmem:[%s1994 + $0x68] sm:$0xff]
        %v2009 = vld [vmem:[%s1994 + $0x70] sm:$0xff]
        %v2010 = vld [vmem:[%s1994 + $0x78] sm:$0xff]
        %v2011 = vld [vmem:[%s1994 + $0x80] sm:$0xff]
        %v2012 = vld [vmem:[%s1994 + $0x88] sm:$0xff]
        %v2013 = vld [vmem:[%s1994 + $0x90] sm:$0xff]
        %v2014 = vld [vmem:[%s1994 + $0x98] sm:$0xff]
        %v2015 = vld [vmem:[%s1994 + $0xa0] sm:$0xff]
        %v2016 = vld [vmem:[%s1994 + $0xa8] sm:$0xff]
        %v2017 = vld [vmem:[%s1994 + $0xb0] sm:$0xff]
        %v2018 = vld [vmem:[%s1994 + $0xb8] sm:$0xff]
        %v2019 = vld [vmem:[%s1994 + $0xc0] sm:$0xff]
        %v2020 = vld [vmem:[%s1994 + $0xc8] sm:$0xff]
        %v2021 = vld [vmem:[%s1994 + $0xd0] sm:$0xff]
        %v2022 = vld [vmem:[%s1994 + $0xd8] sm:$0xff]
        %v2023 = vld [vmem:[%s1994 + $0xe0] sm:$0xff]
        %v2024 = vld [vmem:[%s1994 + $0xe8] sm:$0xff]
        %v2025 = vld [vmem:[%s1994 + $0xf0] sm:$0xff]
        %v2026 = vld [vmem:[%s1994 + $0xf8] sm:$0xff]
        %v2027 = vld [vmem:[%s1994 + $0x100] sm:$0xff]
        %v2028 = vld [vmem:[%s1994 + $0x108] sm:$0xff]
        %v2029 = vld [vmem:[%s1994 + $0x110] sm:$0xff]
        %v2030 = vld [vmem:[%s1994 + $0x118] sm:$0xff]
        %v2031 = vld [vmem:[%s1994 + $0x120] sm:$0xff]
        %v2032 = vld [vmem:[%s1994 + $0x128] sm:$0xff]
        %v2033 = vld [vmem:[%s1994 + $0x130] sm:$0xff]
        %v2034 = vld [vmem:[%s1994 + $0x138] sm:$0xff]
        %v2035 = vld [vmem:[%s1994 + $0x140] sm:$0xff]
        %v2036 = vld [vmem:[%s1994 + $0x148] sm:$0xff]
        %v2037 = vld [vmem:[%s1994 + $0x150] sm:$0xff]
        %v2038 = vld [vmem:[%s1994 + $0x158] sm:$0xff]
        %v2039 = vld [vmem:[%s1994 + $0x160] sm:$0xff]
        %v2040 = vld [vmem:[%s1994 + $0x168] sm:$0xff]
        %v2041 = vld [vmem:[%s1994 + $0x170] sm:$0xff]
        %v2042 = vld [vmem:[%s1994 + $0x178] sm:$0xff]
        %v2091 = vunpack.c.l.b16 %v1995
        %v2092 = vunpack.c.h.b16 %v1995
        %v2093 = vunpack.c.l.b16 %v1996
        %v2094 = vunpack.c.h.b16 %v1996
        %v2095 = vunpack.c.l.b16 %v1997
        %v2096 = vunpack.c.h.b16 %v1997
        %v2097 = vunpack.c.l.b16 %v1998
        %v2098 = vunpack.c.h.b16 %v1998
        %v2099 = vunpack.c.l.b16 %v1999
        %v2100 = vunpack.c.h.b16 %v1999
        %v2101 = vunpack.c.l.b16 %v2000
        %v2102 = vunpack.c.h.b16 %v2000
        %v2103 = vunpack.c.l.b16 %v2001
        %v2104 = vunpack.c.h.b16 %v2001
        %v2105 = vunpack.c.l.b16 %v2002
        %v2106 = vunpack.c.h.b16 %v2002
        %v2107 = vunpack.c.l.b16 %v2003
        %v2108 = vunpack.c.h.b16 %v2003
        %v2109 = vunpack.c.l.b16 %v2004
        %v2110 = vunpack.c.h.b16 %v2004
        %v2111 = vunpack.c.l.b16 %v2005
        %v2112 = vunpack.c.h.b16 %v2005
        %v2113 = vunpack.c.l.b16 %v2006
        %v2114 = vunpack.c.h.b16 %v2006
        %v2115 = vunpack.c.l.b16 %v2007
        %v2116 = vunpack.c.h.b16 %v2007
        %v2117 = vunpack.c.l.b16 %v2008
        %v2118 = vunpack.c.h.b16 %v2008
        %v2119 = vunpack.c.l.b16 %v2009
        %v2120 = vunpack.c.h.b16 %v2009
        %v2121 = vunpack.c.l.b16 %v2010
        %v2122 = vunpack.c.h.b16 %v2010
        %v2123 = vunpack.c.l.b16 %v2011
        %v2124 = vunpack.c.h.b16 %v2011
        %v2125 = vunpack.c.l.b16 %v2012
        %v2126 = vunpack.c.h.b16 %v2012
        %v2127 = vunpack.c.l.b16 %v2013
        %v2128 = vunpack.c.h.b16 %v2013
        %v2129 = vunpack.c.l.b16 %v2014
        %v2130 = vunpack.c.h.b16 %v2014
        %v2131 = vunpack.c.l.b16 %v2015
        %v2132 = vunpack.c.h.b16 %v2015
        %v2133 = vunpack.c.l.b16 %v2016
        %v2134 = vunpack.c.h.b16 %v2016
        %v2135 = vunpack.c.l.b16 %v2017
        %v2136 = vunpack.c.h.b16 %v2017
        %v2137 = vunpack.c.l.b16 %v2018
        %v2138 = vunpack.c.h.b16 %v2018
        %v2139 = vunpack.c.l.b16 %v2019
        %v2140 = vunpack.c.h.b16 %v2019
        %v2141 = vunpack.c.l.b16 %v2020
        %v2142 = vunpack.c.h.b16 %v2020
        %v2143 = vunpack.c.l.b16 %v2021
        %v2144 = vunpack.c.h.b16 %v2021
        %v2145 = vunpack.c.l.b16 %v2022
        %v2146 = vunpack.c.h.b16 %v2022
        %v2147 = vunpack.c.l.b16 %v2023
        %v2148 = vunpack.c.h.b16 %v2023
        %v2149 = vunpack.c.l.b16 %v2024
        %v2150 = vunpack.c.h.b16 %v2024
        %v2151 = vunpack.c.l.b16 %v2025
        %v2152 = vunpack.c.h.b16 %v2025
        %v2153 = vunpack.c.l.b16 %v2026
        %v2154 = vunpack.c.h.b16 %v2026
        %v2155 = vunpack.c.l.b16 %v2027
        %v2156 = vunpack.c.h.b16 %v2027
        %v2157 = vunpack.c.l.b16 %v2028
        %v2158 = vunpack.c.h.b16 %v2028
        %v2159 = vunpack.c.l.b16 %v2029
        %v2160 = vunpack.c.h.b16 %v2029
        %v2161 = vunpack.c.l.b16 %v2030
        %v2162 = vunpack.c.h.b16 %v2030
        %v2163 = vunpack.c.l.b16 %v2031
        %v2164 = vunpack.c.h.b16 %v2031
        %v2165 = vunpack.c.l.b16 %v2032
        %v2166 = vunpack.c.h.b16 %v2032
        %v2167 = vunpack.c.l.b16 %v2033
        %v2168 = vunpack.c.h.b16 %v2033
        %v2169 = vunpack.c.l.b16 %v2034
        %v2170 = vunpack.c.h.b16 %v2034
        %v2171 = vunpack.c.l.b16 %v2035
        %v2172 = vunpack.c.h.b16 %v2035
        %v2173 = vunpack.c.l.b16 %v2036
        %v2174 = vunpack.c.h.b16 %v2036
        %v2175 = vunpack.c.l.b16 %v2037
        %v2176 = vunpack.c.h.b16 %v2037
        %v2177 = vunpack.c.l.b16 %v2038
        %v2178 = vunpack.c.h.b16 %v2038
        %v2179 = vunpack.c.l.b16 %v2039
        %v2180 = vunpack.c.h.b16 %v2039
        %v2181 = vunpack.c.l.b16 %v2040
        %v2182 = vunpack.c.h.b16 %v2040
        %v2183 = vunpack.c.l.b16 %v2041
        %v2184 = vunpack.c.h.b16 %v2041
        %v2185 = vunpack.c.l.b16 %v2042
        %v2186 = vunpack.c.h.b16 %v2042
        %v2187 = vpack.c.b16 %v2097, %v2091
        %v2188 = vpack.c.b16 %v2098, %v2092
        %v2189 = vpack.c.b16 %v2099, %v2093
        %v2190 = vpack.c.b16 %v2100, %v2094
        %v2191 = vpack.c.b16 %v2101, %v2095
        %v2192 = vpack.c.b16 %v2102, %v2096
        %v2193 = vpack.c.b16 %v2109, %v2103
        %v2194 = vpack.c.b16 %v2110, %v2104
        %v2195 = vpack.c.b16 %v2111, %v2105
        %v2196 = vpack.c.b16 %v2112, %v2106
        %v2197 = vpack.c.b16 %v2113, %v2107
        %v2198 = vpack.c.b16 %v2114, %v2108
        %v2199 = vpack.c.b16 %v2121, %v2115
        %v2200 = vpack.c.b16 %v2122, %v2116
        %v2201 = vpack.c.b16 %v2123, %v2117
        %v2202 = vpack.c.b16 %v2124, %v2118
        %v2203 = vpack.c.b16 %v2125, %v2119
        %v2204 = vpack.c.b16 %v2126, %v2120
        %v2205 = vpack.c.b16 %v2133, %v2127
        %v2206 = vpack.c.b16 %v2134, %v2128
        %v2207 = vpack.c.b16 %v2135, %v2129
        %v2208 = vpack.c.b16 %v2136, %v2130
        %v2209 = vpack.c.b16 %v2137, %v2131
        %v2210 = vpack.c.b16 %v2138, %v2132
        %v2211 = vpack.c.b16 %v2145, %v2139
        %v2212 = vpack.c.b16 %v2146, %v2140
        %v2213 = vpack.c.b16 %v2147, %v2141
        %v2214 = vpack.c.b16 %v2148, %v2142
        %v2215 = vpack.c.b16 %v2149, %v2143
        %v2216 = vpack.c.b16 %v2150, %v2144
        %v2217 = vpack.c.b16 %v2157, %v2151
        %v2218 = vpack.c.b16 %v2158, %v2152
        %v2219 = vpack.c.b16 %v2159, %v2153
        %v2220 = vpack.c.b16 %v2160, %v2154
        %v2221 = vpack.c.b16 %v2161, %v2155
        %v2222 = vpack.c.b16 %v2162, %v2156
        %v2223 = vpack.c.b16 %v2169, %v2163
        %v2224 = vpack.c.b16 %v2170, %v2164
        %v2225 = vpack.c.b16 %v2171, %v2165
        %v2226 = vpack.c.b16 %v2172, %v2166
        %v2227 = vpack.c.b16 %v2173, %v2167
        %v2228 = vpack.c.b16 %v2174, %v2168
        %v2229 = vpack.c.b16 %v2181, %v2175
        %v2230 = vpack.c.b16 %v2182, %v2176
        %v2231 = vpack.c.b16 %v2183, %v2177
        %v2232 = vpack.c.b16 %v2184, %v2178
        %v2233 = vpack.c.b16 %v2185, %v2179
        %v2234 = vpack.c.b16 %v2186, %v2180
        %2283 = vmatpush.bf16.msra.mxu0 %v2229
        %2284 = vmatpush.bf16.msra.mxu0 %v2223
        %2285 = vmatpush.bf16.msra.mxu0 %v2217
        %2286 = vmatpush.bf16.msra.mxu0 %v2211
        %2287 = vmatpush.bf16.msra.mxu0 %v2205
        %2288 = vmatpush.bf16.msra.mxu0 %v2199
        %2289 = vmatpush.bf16.msra.mxu0 %v2193
        %2290 = vmatpush.bf16.msra.mxu0 %v2187
        %2291 = vmatmul.bf16.gmra.mxu0 %v1993
        %v2292 = vpop.f32.mrf.mxu0
        %v2293 = vadd.f32 0.0, %v2292
        %v2294 = vpop.f32.mrf.mxu0
        %v2295 = vadd.f32 0.0, %v2294
        %2296 = vdwg.mxu0
        %2297 = vmatpush.bf16.msra.mxu0 %v2230
        %2298 = vmatpush.bf16.msra.mxu0 %v2224
        %2299 = vmatpush.bf16.msra.mxu0 %v2218
        %2300 = vmatpush.bf16.msra.mxu0 %v2212
        %2301 = vmatpush.bf16.msra.mxu0 %v2206
        %2302 = vmatpush.bf16.msra.mxu0 %v2200
        %2303 = vmatpush.bf16.msra.mxu0 %v2194
        %2304 = vmatpush.bf16.msra.mxu0 %v2188
        %2305 = vmatmul.bf16.gmra.mxu0 %v1993
        %v2306 = vpop.f32.mrf.mxu0
        %v2307 = vadd.f32 0.0, %v2306
        %v2308 = vpop.f32.mrf.mxu0
        %v2309 = vadd.f32 0.0, %v2308
        %2310 = vdwg.mxu0
        %2311 = vmatpush.bf16.msra.mxu0 %v2231
        %2312 = vmatpush.bf16.msra.mxu0 %v2225
        %2313 = vmatpush.bf16.msra.mxu0 %v2219
        %2314 = vmatpush.bf16.msra.mxu0 %v2213
        %2315 = vmatpush.bf16.msra.mxu0 %v2207
        %2316 = vmatpush.bf16.msra.mxu0 %v2201
        %2317 = vmatpush.bf16.msra.mxu0 %v2195
        %2318 = vmatpush.bf16.msra.mxu0 %v2189
        %2319 = vmatmul.bf16.gmra.mxu0 %v1993
        %v2320 = vpop.f32.mrf.mxu0
        %v2321 = vadd.f32 0.0, %v2320
        %v2322 = vpop.f32.mrf.mxu0
        %v2323 = vadd.f32 0.0, %v2322
        %2324 = vdwg.mxu0
        %2325 = vmatpush.bf16.msra.mxu0 %v2232
        %2326 = vmatpush.bf16.msra.mxu0 %v2226
        %2327 = vmatpush.bf16.msra.mxu0 %v2220
        %2328 = vmatpush.bf16.msra.mxu0 %v2214
        %2329 = vmatpush.bf16.msra.mxu0 %v2208
        %2330 = vmatpush.bf16.msra.mxu0 %v2202
        %2331 = vmatpush.bf16.msra.mxu0 %v2196
        %2332 = vmatpush.bf16.msra.mxu0 %v2190
        %2333 = vmatmul.bf16.gmra.mxu0 %v1993
        %v2334 = vpop.f32.mrf.mxu0
        %v2335 = vadd.f32 0.0, %v2334
        %v2336 = vpop.f32.mrf.mxu0
        %v2337 = vadd.f32 0.0, %v2336
        %2338 = vdwg.mxu0
        %2339 = vmatpush.bf16.msra.mxu0 %v2233
        %2340 = vmatpush.bf16.msra.mxu0 %v2227
        %2341 = vmatpush.bf16.msra.mxu0 %v2221
        %2342 = vmatpush.bf16.msra.mxu0 %v2215
        %2343 = vmatpush.bf16.msra.mxu0 %v2209
        %2344 = vmatpush.bf16.msra.mxu0 %v2203
        %2345 = vmatpush.bf16.msra.mxu0 %v2197
        %2346 = vmatpush.bf16.msra.mxu0 %v2191
        %2347 = vmatmul.bf16.gmra.mxu0 %v1993
        %v2348 = vpop.f32.mrf.mxu0
        %v2349 = vadd.f32 0.0, %v2348
        %v2350 = vpop.f32.mrf.mxu0
        %v2351 = vadd.f32 0.0, %v2350
        %2352 = vdwg.mxu0
        %2353 = vmatpush.bf16.msra.mxu0 %v2234
        %2354 = vmatpush.bf16.msra.mxu0 %v2228
        %2355 = vmatpush.bf16.msra.mxu0 %v2222
        %2356 = vmatpush.bf16.msra.mxu0 %v2216
        %2357 = vmatpush.bf16.msra.mxu0 %v2210
        %2358 = vmatpush.bf16.msra.mxu0 %v2204
        %2359 = vmatpush.bf16.msra.mxu0 %v2198
        %2360 = vmatpush.bf16.msra.mxu0 %v2192
        %2361 = vmatmul.bf16.gmra.mxu0 %v1993
        %v2362 = vpop.f32.mrf.mxu0
        %v2363 = vadd.f32 0.0, %v2362
        %v2364 = vpop.f32.mrf.mxu0
        %v2365 = vadd.f32 0.0, %v2364
        %2366 = vdwg.mxu0
        %2368 = vrot.lane.b32.xlu0 %v2293, 96
        %v2369 = vpop.permute.xlu0 %2368
        %2371 = vrot.lane.b32.xlu0 %v2293, 64
        %v2372 = vpop.permute.xlu0 %2371
        %2374 = vrot.lane.b32.xlu0 %v2293, 32
        %v2375 = vpop.permute.xlu0 %2374
        %v2377 = vmul.f32 %v2293, %v526
        %v2378 = vmul.f32 %v2369, %v527
        %v2379 = vmul.f32 %v2372, %v528
        %v2380 = vmul.f32 %v2375, %v529
        %v2381 = vmul.f32 %v2293, %v1007
        %v2382 = vmul.f32 %v2369, %v1009
        %v2383 = vmul.f32 %v2372, %v1011
        %v2384 = vmul.f32 %v2375, %v1013
        %2389 = vrot.lane.b32.xlu0 %v2381, 112
        %v2390 = vpop.permute.xlu0 %2389
        %2391 = vrot.lane.b32.xlu0 %v2382, 112
        %v2392 = vpop.permute.xlu0 %2391
        %2393 = vrot.lane.b32.xlu0 %v2383, 112
        %v2394 = vpop.permute.xlu0 %2393
        %2395 = vrot.lane.b32.xlu0 %v2384, 112
        %v2396 = vpop.permute.xlu0 %2395
        %v2401 = vsub.f32 %v2377, %v2390
        %v2402 = vsub.f32 %v2378, %v2392
        %v2403 = vsub.f32 %v2379, %v2394
        %v2404 = vsub.f32 %v2380, %v2396
        %v2405 = vmul.f32 %v2293, %v1047
        %v2406 = vmul.f32 %v2369, %v1049
        %v2407 = vmul.f32 %v2372, %v1051
        %v2408 = vmul.f32 %v2375, %v1053
        %v2409 = vmul.f32 %v2293, %v530
        %v2410 = vmul.f32 %v2369, %v531
        %v2411 = vmul.f32 %v2372, %v532
        %v2412 = vmul.f32 %v2375, %v533
        %2417 = vrot.lane.b32.xlu0 %v2409, 16
        %v2418 = vpop.permute.xlu0 %2417
        %2419 = vrot.lane.b32.xlu0 %v2410, 16
        %v2420 = vpop.permute.xlu0 %2419
        %2421 = vrot.lane.b32.xlu0 %v2411, 16
        %v2422 = vpop.permute.xlu0 %2421
        %2423 = vrot.lane.b32.xlu0 %v2412, 16
        %v2424 = vpop.permute.xlu0 %2423
        %v2429 = vadd.f32 %v2405, %v2418
        %v2430 = vadd.f32 %v2406, %v2420
        %v2431 = vadd.f32 %v2407, %v2422
        %v2432 = vadd.f32 %v2408, %v2424
        %v2433 = vsel %vm1086, %v2401, %v2429
        %v2434 = vsel %vm1086, %v2402, %v2430
        %v2435 = vsel %vm1086, %v2403, %v2431
        %v2436 = vsel %vm1086, %v2404, %v2432
        %v2437 = vpack.c.bf16 %v2434, %v2433
        %v2438 = vpack.c.bf16 %v2436, %v2435
        %v2439 = vmul.f32 %v2307, %v534
        %v2440 = vmul.f32 %v2307, %v1096
        %2442 = vrot.lane.b32.xlu0 %v2440, 112
        %v2443 = vpop.permute.xlu0 %2442
        %v2445 = vsub.f32 %v2439, %v2443
        %v2446 = vmul.f32 %v2307, %v1106
        %v2447 = vmul.f32 %v2307, %v535
        %2449 = vrot.lane.b32.xlu0 %v2447, 16
        %v2450 = vpop.permute.xlu0 %2449
        %v2452 = vadd.f32 %v2446, %v2450
        %v2453 = vsel %vm1086, %v2445, %v2452
        %v2454 = vpack.c.bf16 %v2453, %v2453
        %v2455 = vpack.c.bf16 %v2307, %v2307
        %v2457 = vsel %vm1118, %v2437, 0
        %v2460 = vsel %vm1118, %v2438, 0
        %v2463 = vsel %vm1118, %v2454, 0
        %2465 = vmatpush.bf16.xpose.msra.mxu0 0
        %2466 = vmatpush.bf16.xpose.msra.mxu0 0
        %2467 = vmatpush.bf16.xpose.msra.mxu0 0
        %2468 = vmatpush.bf16.xpose.msra.mxu0 0
        %2469 = vmatpush.bf16.xpose.msra.mxu0 0
        %2470 = vmatpush.bf16.xpose.msra.mxu0 0
        %2471 = vmatpush.bf16.xpose.msra.mxu0 0
        %2472 = vmatpush.bf16.xpose.msra.mxu0 %v2463
        %2473 = vmatmul.bf16.gmra.mxu0 %v2457
        %v2474 = vpop.f32.mrf.mxu0
        %v2475 = vadd.f32 0.0, %v2474
        %v2476 = vpop.f32.mrf.mxu0
        %v2477 = vadd.f32 0.0, %v2476
        %2478 = vmatmul.bf16.gmra.mxu0 %v2460
        %v2479 = vpop.f32.mrf.mxu0
        %v2480 = vadd.f32 0.0, %v2479
        %v2481 = vpop.f32.mrf.mxu0
        %v2482 = vadd.f32 0.0, %v2481
        %2483 = vdwg.mxu0
        %v2484 = vmul.f32 %v2475, 0.17677669
        %v2485 = vmul.f32 %v2477, 0.17677669
        %v2486 = vmul.f32 %v2480, 0.17677669
        %v2487 = vmul.f32 %v2482, 0.17677669
        %v2488 = vadd.f32 %v2484, %v547
        %v2489 = vadd.f32 %v2485, %v547
        %v2490 = vadd.f32 %v2486, %v547
        %v2491 = vadd.f32 %v2487, %v547
        %v2492 = vsel %vm1155, %v2488, -inf
        %2493 = vmax.xlane.f32.xlu0 %v2492
        %v2494 = vpop.xlane.xlu0 %2493
        %v2495 = vsel %vm1155, %v2489, -inf
        %2496 = vmax.xlane.f32.xlu0 %v2495
        %v2497 = vpop.xlane.xlu0 %2496
        %v2498 = vsel %vm1155, %v2490, -inf
        %2499 = vmax.xlane.f32.xlu0 %v2498
        %v2500 = vpop.xlane.xlu0 %2499
        %v2501 = vsel %vm1155, %v2491, -inf
        %2502 = vmax.xlane.f32.xlu0 %v2501
        %v2503 = vpop.xlane.xlu0 %2502
        %v2504 = vsub.f32 %v2488, %v2494
        %v2505 = vsub.f32 %v2489, %v2497
        %v2506 = vsub.f32 %v2490, %v2500
        %v2507 = vsub.f32 %v2491, %v2503
        %v2508 = vmul.f32 %v2504, 1.442695
        %v2509 = vpow.pop %v2508
        %v2510 = vmul.f32 %v2505, 1.442695
        %v2511 = vpow.pop %v2510
        %v2512 = vmul.f32 %v2506, 1.442695
        %v2513 = vpow.pop %v2512
        %v2514 = vmul.f32 %v2507, 1.442695
        %v2515 = vpow.pop %v2514
        %v2516 = vsel %vm1155, %v2509, 0.0
        %2517 = vadd.xlane.f32.xlu0 %v2516
        %v2518 = vpop.xlane.xlu0 %2517
        %v2519 = vsel %vm1155, %v2511, 0.0
        %2520 = vadd.xlane.f32.xlu0 %v2519
        %v2521 = vpop.xlane.xlu0 %2520
        %v2522 = vsel %vm1155, %v2513, 0.0
        %2523 = vadd.xlane.f32.xlu0 %v2522
        %v2524 = vpop.xlane.xlu0 %2523
        %v2525 = vsel %vm1155, %v2515, 0.0
        %2526 = vadd.xlane.f32.xlu0 %v2525
        %v2527 = vpop.xlane.xlu0 %2526
        %v2528 = vrcp.pop %v2518
        %v2529 = vrcp.pop %v2521
        %v2530 = vrcp.pop %v2524
        %v2531 = vrcp.pop %v2527
        %v2532 = vmul.f32 %v2509, %v2528
        %v2533 = vmul.f32 %v2511, %v2529
        %v2534 = vmul.f32 %v2513, %v2530
        %v2535 = vmul.f32 %v2515, %v2531
        %v2536 = vpack.c.bf16 %v2533, %v2532
        %v2537 = vpack.c.bf16 %v2535, %v2534
        %2539 = vrot.lane.b32.xlu0 %v2455, 96
        %v2540 = vpop.permute.xlu0 %2539
        %v2542 = vsel %vm1155, %v2536, 0
        %v2545 = vsel %vm1155, %v2537, 0
        %v2548 = vsel %vm1211, %v2540, 0
        %2550 = vmatpush.bf16.msra.mxu0 0
        %2551 = vmatpush.bf16.msra.mxu0 0
        %2552 = vmatpush.bf16.msra.mxu0 0
        %2553 = vmatpush.bf16.msra.mxu0 0
        %2554 = vmatpush.bf16.msra.mxu0 0
        %2555 = vmatpush.bf16.msra.mxu0 0
        %2556 = vmatpush.bf16.msra.mxu0 0
        %2557 = vmatpush.bf16.msra.mxu0 %v2548
        %2558 = vmatmul.bf16.gmra.mxu0 %v2542
        %v2559 = vpop.f32.mrf.mxu0
        %v2560 = vadd.f32 0.0, %v2559
        %v2561 = vpop.f32.mrf.mxu0
        %v2562 = vadd.f32 0.0, %v2561
        %2563 = vmatmul.bf16.gmra.mxu0 %v2545
        %v2564 = vpop.f32.mrf.mxu0
        %v2565 = vadd.f32 0.0, %v2564
        %v2566 = vpop.f32.mrf.mxu0
        %v2567 = vadd.f32 0.0, %v2566
        %2568 = vdwg.mxu0
        %2570 = vrot.lane.b32.xlu0 %v2562, 32
        %v2571 = vpop.permute.xlu0 %2570
        %2574 = vrot.lane.b32.xlu0 %v2565, 64
        %v2575 = vpop.permute.xlu0 %2574
        %2578 = vrot.lane.b32.xlu0 %v2567, 96
        %v2579 = vpop.permute.xlu0 %2578
        %v2581 = vsel %vm1118, %v2560, %v2571
        %v2582 = vsel %vm1247, %v2581, %v2575
        %v2583 = vsel %vm1249, %v2582, %v2579
        %2585 = vrot.lane.b32.xlu0 %v2295, 96
        %v2586 = vpop.permute.xlu0 %2585
        %2588 = vrot.lane.b32.xlu0 %v2295, 64
        %v2589 = vpop.permute.xlu0 %2588
        %2591 = vrot.lane.b32.xlu0 %v2295, 32
        %v2592 = vpop.permute.xlu0 %2591
        %v2594 = vmul.f32 %v2295, %v526
        %v2595 = vmul.f32 %v2586, %v527
        %v2596 = vmul.f32 %v2589, %v528
        %v2597 = vmul.f32 %v2592, %v529
        %v2598 = vmul.f32 %v2295, %v1007
        %v2599 = vmul.f32 %v2586, %v1009
        %v2600 = vmul.f32 %v2589, %v1011
        %v2601 = vmul.f32 %v2592, %v1013
        %2606 = vrot.lane.b32.xlu0 %v2598, 112
        %v2607 = vpop.permute.xlu0 %2606
        %2608 = vrot.lane.b32.xlu0 %v2599, 112
        %v2609 = vpop.permute.xlu0 %2608
        %2610 = vrot.lane.b32.xlu0 %v2600, 112
        %v2611 = vpop.permute.xlu0 %2610
        %2612 = vrot.lane.b32.xlu0 %v2601, 112
        %v2613 = vpop.permute.xlu0 %2612
        %v2618 = vsub.f32 %v2594, %v2607
        %v2619 = vsub.f32 %v2595, %v2609
        %v2620 = vsub.f32 %v2596, %v2611
        %v2621 = vsub.f32 %v2597, %v2613
        %v2622 = vmul.f32 %v2295, %v1047
        %v2623 = vmul.f32 %v2586, %v1049
        %v2624 = vmul.f32 %v2589, %v1051
        %v2625 = vmul.f32 %v2592, %v1053
        %v2626 = vmul.f32 %v2295, %v530
        %v2627 = vmul.f32 %v2586, %v531
        %v2628 = vmul.f32 %v2589, %v532
        %v2629 = vmul.f32 %v2592, %v533
        %2634 = vrot.lane.b32.xlu0 %v2626, 16
        %v2635 = vpop.permute.xlu0 %2634
        %2636 = vrot.lane.b32.xlu0 %v2627, 16
        %v2637 = vpop.permute.xlu0 %2636
        %2638 = vrot.lane.b32.xlu0 %v2628, 16
        %v2639 = vpop.permute.xlu0 %2638
        %2640 = vrot.lane.b32.xlu0 %v2629, 16
        %v2641 = vpop.permute.xlu0 %2640
        %v2646 = vadd.f32 %v2622, %v2635
        %v2647 = vadd.f32 %v2623, %v2637
        %v2648 = vadd.f32 %v2624, %v2639
        %v2649 = vadd.f32 %v2625, %v2641
        %v2650 = vsel %vm1086, %v2618, %v2646
        %v2651 = vsel %vm1086, %v2619, %v2647
        %v2652 = vsel %vm1086, %v2620, %v2648
        %v2653 = vsel %vm1086, %v2621, %v2649
        %v2654 = vpack.c.bf16 %v2651, %v2650
        %v2655 = vpack.c.bf16 %v2653, %v2652
        %v2656 = vmul.f32 %v2309, %v534
        %v2657 = vmul.f32 %v2309, %v1096
        %2659 = vrot.lane.b32.xlu0 %v2657, 112
        %v2660 = vpop.permute.xlu0 %2659
        %v2662 = vsub.f32 %v2656, %v2660
        %v2663 = vmul.f32 %v2309, %v1106
        %v2664 = vmul.f32 %v2309, %v535
        %2666 = vrot.lane.b32.xlu0 %v2664, 16
        %v2667 = vpop.permute.xlu0 %2666
        %v2669 = vadd.f32 %v2663, %v2667
        %v2670 = vsel %vm1086, %v2662, %v2669
        %v2671 = vpack.c.bf16 %v2670, %v2670
        %v2672 = vpack.c.bf16 %v2309, %v2309
        %v2674 = vsel %vm1118, %v2654, 0
        %v2677 = vsel %vm1118, %v2655, 0
        %v2680 = vsel %vm1118, %v2671, 0
        %2682 = vmatpush.bf16.xpose.msra.mxu0 0
        %2683 = vmatpush.bf16.xpose.msra.mxu0 0
        %2684 = vmatpush.bf16.xpose.msra.mxu0 0
        %2685 = vmatpush.bf16.xpose.msra.mxu0 0
        %2686 = vmatpush.bf16.xpose.msra.mxu0 0
        %2687 = vmatpush.bf16.xpose.msra.mxu0 0
        %2688 = vmatpush.bf16.xpose.msra.mxu0 0
        %2689 = vmatpush.bf16.xpose.msra.mxu0 %v2680
        %2690 = vmatmul.bf16.gmra.mxu0 %v2674
        %v2691 = vpop.f32.mrf.mxu0
        %v2692 = vadd.f32 0.0, %v2691
        %v2693 = vpop.f32.mrf.mxu0
        %v2694 = vadd.f32 0.0, %v2693
        %2695 = vmatmul.bf16.gmra.mxu0 %v2677
        %v2696 = vpop.f32.mrf.mxu0
        %v2697 = vadd.f32 0.0, %v2696
        %v2698 = vpop.f32.mrf.mxu0
        %v2699 = vadd.f32 0.0, %v2698
        %2700 = vdwg.mxu0
        %v2701 = vmul.f32 %v2692, 0.17677669
        %v2702 = vmul.f32 %v2694, 0.17677669
        %v2703 = vmul.f32 %v2697, 0.17677669
        %v2704 = vmul.f32 %v2699, 0.17677669
        %v2705 = vadd.f32 %v2701, %v555
        %v2706 = vadd.f32 %v2702, %v555
        %v2707 = vadd.f32 %v2703, %v555
        %v2708 = vadd.f32 %v2704, %v555
        %v2709 = vsel %vm1155, %v2705, -inf
        %2710 = vmax.xlane.f32.xlu0 %v2709
        %v2711 = vpop.xlane.xlu0 %2710
        %v2712 = vsel %vm1155, %v2706, -inf
        %2713 = vmax.xlane.f32.xlu0 %v2712
        %v2714 = vpop.xlane.xlu0 %2713
        %v2715 = vsel %vm1155, %v2707, -inf
        %2716 = vmax.xlane.f32.xlu0 %v2715
        %v2717 = vpop.xlane.xlu0 %2716
        %v2718 = vsel %vm1155, %v2708, -inf
        %2719 = vmax.xlane.f32.xlu0 %v2718
        %v2720 = vpop.xlane.xlu0 %2719
        %v2721 = vsub.f32 %v2705, %v2711
        %v2722 = vsub.f32 %v2706, %v2714
        %v2723 = vsub.f32 %v2707, %v2717
        %v2724 = vsub.f32 %v2708, %v2720
        %v2725 = vmul.f32 %v2721, 1.442695
        %v2726 = vpow.pop %v2725
        %v2727 = vmul.f32 %v2722, 1.442695
        %v2728 = vpow.pop %v2727
        %v2729 = vmul.f32 %v2723, 1.442695
        %v2730 = vpow.pop %v2729
        %v2731 = vmul.f32 %v2724, 1.442695
        %v2732 = vpow.pop %v2731
        %v2733 = vsel %vm1155, %v2726, 0.0
        %2734 = vadd.xlane.f32.xlu0 %v2733
        %v2735 = vpop.xlane.xlu0 %2734
        %v2736 = vsel %vm1155, %v2728, 0.0
        %2737 = vadd.xlane.f32.xlu0 %v2736
        %v2738 = vpop.xlane.xlu0 %2737
        %v2739 = vsel %vm1155, %v2730, 0.0
        %2740 = vadd.xlane.f32.xlu0 %v2739
        %v2741 = vpop.xlane.xlu0 %2740
        %v2742 = vsel %vm1155, %v2732, 0.0
        %2743 = vadd.xlane.f32.xlu0 %v2742
        %v2744 = vpop.xlane.xlu0 %2743
        %v2745 = vrcp.pop %v2735
        %v2746 = vrcp.pop %v2738
        %v2747 = vrcp.pop %v2741
        %v2748 = vrcp.pop %v2744
        %v2749 = vmul.f32 %v2726, %v2745
        %v2750 = vmul.f32 %v2728, %v2746
        %v2751 = vmul.f32 %v2730, %v2747
        %v2752 = vmul.f32 %v2732, %v2748
        %v2753 = vpack.c.bf16 %v2750, %v2749
        %v2754 = vpack.c.bf16 %v2752, %v2751
        %2756 = vrot.lane.b32.xlu0 %v2672, 96
        %v2757 = vpop.permute.xlu0 %2756
        %v2759 = vsel %vm1155, %v2753, 0
        %v2762 = vsel %vm1155, %v2754, 0
        %v2765 = vsel %vm1211, %v2757, 0
        %2767 = vmatpush.bf16.msra.mxu0 0
        %2768 = vmatpush.bf16.msra.mxu0 0
        %2769 = vmatpush.bf16.msra.mxu0 0
        %2770 = vmatpush.bf16.msra.mxu0 0
        %2771 = vmatpush.bf16.msra.mxu0 0
        %2772 = vmatpush.bf16.msra.mxu0 0
        %2773 = vmatpush.bf16.msra.mxu0 0
        %2774 = vmatpush.bf16.msra.mxu0 %v2765
        %2775 = vmatmul.bf16.gmra.mxu0 %v2759
        %v2776 = vpop.f32.mrf.mxu0
        %v2777 = vadd.f32 0.0, %v2776
        %v2778 = vpop.f32.mrf.mxu0
        %v2779 = vadd.f32 0.0, %v2778
        %2780 = vmatmul.bf16.gmra.mxu0 %v2762
        %v2781 = vpop.f32.mrf.mxu0
        %v2782 = vadd.f32 0.0, %v2781
        %v2783 = vpop.f32.mrf.mxu0
        %v2784 = vadd.f32 0.0, %v2783
        %2785 = vdwg.mxu0
        %2787 = vrot.lane.b32.xlu0 %v2779, 32
        %v2788 = vpop.permute.xlu0 %2787
        %2791 = vrot.lane.b32.xlu0 %v2782, 64
        %v2792 = vpop.permute.xlu0 %2791
        %2795 = vrot.lane.b32.xlu0 %v2784, 96
        %v2796 = vpop.permute.xlu0 %2795
        %v2798 = vsel %vm1118, %v2777, %v2788
        %v2799 = vsel %vm1247, %v2798, %v2792
        %v2800 = vsel %vm1249, %v2799, %v2796
        %v2801 = vpack.c.bf16 %v2800, %v2583
        %s2802 = scalar_lea.vmem %s9, 64
        %v2803 = vld [vmem:[%s2802] sm:$0xf]
        %v2804 = vld [vmem:[%s2802 + $0x4] sm:$0xf]
        %v2805 = vld [vmem:[%s2802 + $0x8] sm:$0xf]
        %v2806 = vld [vmem:[%s2802 + $0xc] sm:$0xf]
        %v2807 = vld [vmem:[%s2802 + $0x10] sm:$0xf]
        %v2808 = vld [vmem:[%s2802 + $0x14] sm:$0xf]
        %v2809 = vld [vmem:[%s2802 + $0x18] sm:$0xf]
        %v2810 = vld [vmem:[%s2802 + $0x1c] sm:$0xf]
        %v2811 = vld [vmem:[%s2802 + $0x20] sm:$0xf]
        %v2812 = vld [vmem:[%s2802 + $0x24] sm:$0xf]
        %v2813 = vld [vmem:[%s2802 + $0x28] sm:$0xf]
        %v2814 = vld [vmem:[%s2802 + $0x2c] sm:$0xf]
        %v2815 = vld [vmem:[%s2802 + $0x30] sm:$0xf]
        %v2816 = vld [vmem:[%s2802 + $0x34] sm:$0xf]
        %v2817 = vld [vmem:[%s2802 + $0x38] sm:$0xf]
        %v2818 = vld [vmem:[%s2802 + $0x3c] sm:$0xf]
        %v2835 = vunpack.c.l.b16 %v2803
        %v2836 = vunpack.c.l.b16 %v2804
        %v2837 = vunpack.c.l.b16 %v2805
        %v2838 = vunpack.c.l.b16 %v2806
        %v2839 = vunpack.c.l.b16 %v2807
        %v2840 = vunpack.c.l.b16 %v2808
        %v2841 = vunpack.c.l.b16 %v2809
        %v2842 = vunpack.c.l.b16 %v2810
        %v2843 = vunpack.c.l.b16 %v2811
        %v2844 = vunpack.c.l.b16 %v2812
        %v2845 = vunpack.c.l.b16 %v2813
        %v2846 = vunpack.c.l.b16 %v2814
        %v2847 = vunpack.c.l.b16 %v2815
        %v2848 = vunpack.c.l.b16 %v2816
        %v2849 = vunpack.c.l.b16 %v2817
        %v2850 = vunpack.c.l.b16 %v2818
        %v2851 = vpack.c.b16 %v2836, %v2835
        %v2852 = vpack.c.b16 %v2838, %v2837
        %v2853 = vpack.c.b16 %v2840, %v2839
        %v2854 = vpack.c.b16 %v2842, %v2841
        %v2855 = vpack.c.b16 %v2844, %v2843
        %v2856 = vpack.c.b16 %v2846, %v2845
        %v2857 = vpack.c.b16 %v2848, %v2847
        %v2858 = vpack.c.b16 %v2850, %v2849
        %2867 = vmatpush.bf16.msra.mxu0 %v2858
        %2868 = vmatpush.bf16.msra.mxu0 %v2857
        %2869 = vmatpush.bf16.msra.mxu0 %v2856
        %2870 = vmatpush.bf16.msra.mxu0 %v2855
        %2871 = vmatpush.bf16.msra.mxu0 %v2854
        %2872 = vmatpush.bf16.msra.mxu0 %v2853
        %2873 = vmatpush.bf16.msra.mxu0 %v2852
        %2874 = vmatpush.bf16.msra.mxu0 %v2851
        %2875 = vmatmul.bf16.gmra.mxu0 %v2801
        %v2876 = vpop.f32.mrf.mxu0
        %v2877 = vadd.f32 0.0, %v2876
        %v2878 = vpop.f32.mrf.mxu0
        %v2879 = vadd.f32 0.0, %v2878
        %2880 = vdwg.mxu0
        %v2881 = vmul.f32 %v2321, 0.5
        %v2882 = vmul.f32 %v2335, 0.5
        %v2883 = vmul.f32 %v2349, 0.5
        %v2884 = vmul.f32 %v2363, 0.5
        %v2885 = vmul.f32 %v2323, 0.5
        %v2886 = vmul.f32 %v2337, 0.5
        %v2887 = vmul.f32 %v2351, 0.5
        %v2888 = vmul.f32 %v2365, 0.5
        %v2889 = vmul.f32 %v2321, 0.044715
        %v2890 = vmul.f32 %v2335, 0.044715
        %v2891 = vmul.f32 %v2349, 0.044715
        %v2892 = vmul.f32 %v2363, 0.044715
        %v2893 = vmul.f32 %v2323, 0.044715
        %v2894 = vmul.f32 %v2337, 0.044715
        %v2895 = vmul.f32 %v2351, 0.044715
        %v2896 = vmul.f32 %v2365, 0.044715
        %v2897 = vmul.f32 %v2889, %v2321
        %v2898 = vmul.f32 %v2890, %v2335
        %v2899 = vmul.f32 %v2891, %v2349
        %v2900 = vmul.f32 %v2892, %v2363
        %v2901 = vmul.f32 %v2893, %v2323
        %v2902 = vmul.f32 %v2894, %v2337
        %v2903 = vmul.f32 %v2895, %v2351
        %v2904 = vmul.f32 %v2896, %v2365
        %v2905 = vmul.f32 %v2897, %v2321
        %v2906 = vmul.f32 %v2898, %v2335
        %v2907 = vmul.f32 %v2899, %v2349
        %v2908 = vmul.f32 %v2900, %v2363
        %v2909 = vmul.f32 %v2901, %v2323
        %v2910 = vmul.f32 %v2902, %v2337
        %v2911 = vmul.f32 %v2903, %v2351
        %v2912 = vmul.f32 %v2904, %v2365
        %v2913 = vadd.f32 %v2321, %v2905
        %v2914 = vadd.f32 %v2335, %v2906
        %v2915 = vadd.f32 %v2349, %v2907
        %v2916 = vadd.f32 %v2363, %v2908
        %v2917 = vadd.f32 %v2323, %v2909
        %v2918 = vadd.f32 %v2337, %v2910
        %v2919 = vadd.f32 %v2351, %v2911
        %v2920 = vadd.f32 %v2365, %v2912
        %v2921 = vmul.f32 %v2913, 0.7978846
        %v2922 = vmul.f32 %v2914, 0.7978846
        %v2923 = vmul.f32 %v2915, 0.7978846
        %v2924 = vmul.f32 %v2916, 0.7978846
        %v2925 = vmul.f32 %v2917, 0.7978846
        %v2926 = vmul.f32 %v2918, 0.7978846
        %v2927 = vmul.f32 %v2919, 0.7978846
        %v2928 = vmul.f32 %v2920, 0.7978846
        %v2929 = vtanh.pop %v2921
        %v2930 = vtanh.pop %v2922
        %v2931 = vtanh.pop %v2923
        %v2932 = vtanh.pop %v2924
        %v2933 = vtanh.pop %v2925
        %v2934 = vtanh.pop %v2926
        %v2935 = vtanh.pop %v2927
        %v2936 = vtanh.pop %v2928
        %v2937 = vadd.f32 %v2929, 1.0
        %v2938 = vadd.f32 %v2930, 1.0
        %v2939 = vadd.f32 %v2931, 1.0
        %v2940 = vadd.f32 %v2932, 1.0
        %v2941 = vadd.f32 %v2933, 1.0
        %v2942 = vadd.f32 %v2934, 1.0
        %v2943 = vadd.f32 %v2935, 1.0
        %v2944 = vadd.f32 %v2936, 1.0
        %v2945 = vmul.f32 %v2881, %v2937
        %v2946 = vmul.f32 %v2882, %v2938
        %v2947 = vmul.f32 %v2883, %v2939
        %v2948 = vmul.f32 %v2884, %v2940
        %v2949 = vmul.f32 %v2885, %v2941
        %v2950 = vmul.f32 %v2886, %v2942
        %v2951 = vmul.f32 %v2887, %v2943
        %v2952 = vmul.f32 %v2888, %v2944
        %v2953 = vpack.c.bf16 %v2949, %v2945
        %v2954 = vpack.c.bf16 %v2950, %v2946
        %v2955 = vpack.c.bf16 %v2951, %v2947
        %v2956 = vpack.c.bf16 %v2952, %v2948
        %s2957 = scalar_lea.vmem [#allocation4], 256
        %v2958 = vld [vmem:[%s2957] sm:$0xf]
        %v2959 = vld [vmem:[%s2957 + $0x4] sm:$0xf]
        %v2960 = vld [vmem:[%s2957 + $0x8] sm:$0xf]
        %v2961 = vld [vmem:[%s2957 + $0xc] sm:$0xf]
        %v2962 = vld [vmem:[%s2957 + $0x10] sm:$0xf]
        %v2963 = vld [vmem:[%s2957 + $0x14] sm:$0xf]
        %v2964 = vld [vmem:[%s2957 + $0x18] sm:$0xf]
        %v2965 = vld [vmem:[%s2957 + $0x1c] sm:$0xf]
        %v2966 = vld [vmem:[%s2957 + $0x20] sm:$0xf]
        %v2967 = vld [vmem:[%s2957 + $0x24] sm:$0xf]
        %v2968 = vld [vmem:[%s2957 + $0x28] sm:$0xf]
        %v2969 = vld [vmem:[%s2957 + $0x2c] sm:$0xf]
        %v2970 = vld [vmem:[%s2957 + $0x30] sm:$0xf]
        %v2971 = vld [vmem:[%s2957 + $0x34] sm:$0xf]
        %v2972 = vld [vmem:[%s2957 + $0x38] sm:$0xf]
        %v2973 = vld [vmem:[%s2957 + $0x3c] sm:$0xf]
        %v2974 = vld [vmem:[%s2957 + $0x40] sm:$0xf]
        %v2975 = vld [vmem:[%s2957 + $0x44] sm:$0xf]
        %v2976 = vld [vmem:[%s2957 + $0x48] sm:$0xf]
        %v2977 = vld [vmem:[%s2957 + $0x4c] sm:$0xf]
        %v2978 = vld [vmem:[%s2957 + $0x50] sm:$0xf]
        %v2979 = vld [vmem:[%s2957 + $0x54] sm:$0xf]
        %v2980 = vld [vmem:[%s2957 + $0x58] sm:$0xf]
        %v2981 = vld [vmem:[%s2957 + $0x5c] sm:$0xf]
        %v2982 = vld [vmem:[%s2957 + $0x60] sm:$0xf]
        %v2983 = vld [vmem:[%s2957 + $0x64] sm:$0xf]
        %v2984 = vld [vmem:[%s2957 + $0x68] sm:$0xf]
        %v2985 = vld [vmem:[%s2957 + $0x6c] sm:$0xf]
        %v2986 = vld [vmem:[%s2957 + $0x70] sm:$0xf]
        %v2987 = vld [vmem:[%s2957 + $0x74] sm:$0xf]
        %v2988 = vld [vmem:[%s2957 + $0x78] sm:$0xf]
        %v2989 = vld [vmem:[%s2957 + $0x7c] sm:$0xf]
        %v2990 = vld [vmem:[%s2957 + $0x80] sm:$0xf]
        %v2991 = vld [vmem:[%s2957 + $0x84] sm:$0xf]
        %v2992 = vld [vmem:[%s2957 + $0x88] sm:$0xf]
        %v2993 = vld [vmem:[%s2957 + $0x8c] sm:$0xf]
        %v2994 = vld [vmem:[%s2957 + $0x90] sm:$0xf]
        %v2995 = vld [vmem:[%s2957 + $0x94] sm:$0xf]
        %v2996 = vld [vmem:[%s2957 + $0x98] sm:$0xf]
        %v2997 = vld [vmem:[%s2957 + $0x9c] sm:$0xf]
        %v2998 = vld [vmem:[%s2957 + $0xa0] sm:$0xf]
        %v2999 = vld [vmem:[%s2957 + $0xa4] sm:$0xf]
        %v3000 = vld [vmem:[%s2957 + $0xa8] sm:$0xf]
        %v3001 = vld [vmem:[%s2957 + $0xac] sm:$0xf]
        %v3002 = vld [vmem:[%s2957 + $0xb0] sm:$0xf]
        %v3003 = vld [vmem:[%s2957 + $0xb4] sm:$0xf]
        %v3004 = vld [vmem:[%s2957 + $0xb8] sm:$0xf]
        %v3005 = vld [vmem:[%s2957 + $0xbc] sm:$0xf]
        %v3006 = vld [vmem:[%s2957 + $0xc0] sm:$0xf]
        %v3007 = vld [vmem:[%s2957 + $0xc4] sm:$0xf]
        %v3008 = vld [vmem:[%s2957 + $0xc8] sm:$0xf]
        %v3009 = vld [vmem:[%s2957 + $0xcc] sm:$0xf]
        %v3010 = vld [vmem:[%s2957 + $0xd0] sm:$0xf]
        %v3011 = vld [vmem:[%s2957 + $0xd4] sm:$0xf]
        %v3012 = vld [vmem:[%s2957 + $0xd8] sm:$0xf]
        %v3013 = vld [vmem:[%s2957 + $0xdc] sm:$0xf]
        %v3014 = vld [vmem:[%s2957 + $0xe0] sm:$0xf]
        %v3015 = vld [vmem:[%s2957 + $0xe4] sm:$0xf]
        %v3016 = vld [vmem:[%s2957 + $0xe8] sm:$0xf]
        %v3017 = vld [vmem:[%s2957 + $0xec] sm:$0xf]
        %v3018 = vld [vmem:[%s2957 + $0xf0] sm:$0xf]
        %v3019 = vld [vmem:[%s2957 + $0xf4] sm:$0xf]
        %v3020 = vld [vmem:[%s2957 + $0xf8] sm:$0xf]
        %v3021 = vld [vmem:[%s2957 + $0xfc] sm:$0xf]
        %v3086 = vunpack.c.l.b16 %v2958
        %v3087 = vunpack.c.l.b16 %v2959
        %v3088 = vunpack.c.l.b16 %v2960
        %v3089 = vunpack.c.l.b16 %v2961
        %v3090 = vunpack.c.l.b16 %v2962
        %v3091 = vunpack.c.l.b16 %v2963
        %v3092 = vunpack.c.l.b16 %v2964
        %v3093 = vunpack.c.l.b16 %v2965
        %v3094 = vunpack.c.l.b16 %v2966
        %v3095 = vunpack.c.l.b16 %v2967
        %v3096 = vunpack.c.l.b16 %v2968
        %v3097 = vunpack.c.l.b16 %v2969
        %v3098 = vunpack.c.l.b16 %v2970
        %v3099 = vunpack.c.l.b16 %v2971
        %v3100 = vunpack.c.l.b16 %v2972
        %v3101 = vunpack.c.l.b16 %v2973
        %v3102 = vunpack.c.l.b16 %v2974
        %v3103 = vunpack.c.l.b16 %v2975
        %v3104 = vunpack.c.l.b16 %v2976
        %v3105 = vunpack.c.l.b16 %v2977
        %v3106 = vunpack.c.l.b16 %v2978
        %v3107 = vunpack.c.l.b16 %v2979
        %v3108 = vunpack.c.l.b16 %v2980
        %v3109 = vunpack.c.l.b16 %v2981
        %v3110 = vunpack.c.l.b16 %v2982
        %v3111 = vunpack.c.l.b16 %v2983
        %v3112 = vunpack.c.l.b16 %v2984
        %v3113 = vunpack.c.l.b16 %v2985
        %v3114 = vunpack.c.l.b16 %v2986
        %v3115 = vunpack.c.l.b16 %v2987
        %v3116 = vunpack.c.l.b16 %v2988
        %v3117 = vunpack.c.l.b16 %v2989
        %v3118 = vunpack.c.l.b16 %v2990
        %v3119 = vunpack.c.l.b16 %v2991
        %v3120 = vunpack.c.l.b16 %v2992
        %v3121 = vunpack.c.l.b16 %v2993
        %v3122 = vunpack.c.l.b16 %v2994
        %v3123 = vunpack.c.l.b16 %v2995
        %v3124 = vunpack.c.l.b16 %v2996
        %v3125 = vunpack.c.l.b16 %v2997
        %v3126 = vunpack.c.l.b16 %v2998
        %v3127 = vunpack.c.l.b16 %v2999
        %v3128 = vunpack.c.l.b16 %v3000
        %v3129 = vunpack.c.l.b16 %v3001
        %v3130 = vunpack.c.l.b16 %v3002
        %v3131 = vunpack.c.l.b16 %v3003
        %v3132 = vunpack.c.l.b16 %v3004
        %v3133 = vunpack.c.l.b16 %v3005
        %v3134 = vunpack.c.l.b16 %v3006
        %v3135 = vunpack.c.l.b16 %v3007
        %v3136 = vunpack.c.l.b16 %v3008
        %v3137 = vunpack.c.l.b16 %v3009
        %v3138 = vunpack.c.l.b16 %v3010
        %v3139 = vunpack.c.l.b16 %v3011
        %v3140 = vunpack.c.l.b16 %v3012
        %v3141 = vunpack.c.l.b16 %v3013
        %v3142 = vunpack.c.l.b16 %v3014
        %v3143 = vunpack.c.l.b16 %v3015
        %v3144 = vunpack.c.l.b16 %v3016
        %v3145 = vunpack.c.l.b16 %v3017
        %v3146 = vunpack.c.l.b16 %v3018
        %v3147 = vunpack.c.l.b16 %v3019
        %v3148 = vunpack.c.l.b16 %v3020
        %v3149 = vunpack.c.l.b16 %v3021
        %v3150 = vpack.c.b16 %v3087, %v3086
        %v3151 = vpack.c.b16 %v3089, %v3088
        %v3152 = vpack.c.b16 %v3091, %v3090
        %v3153 = vpack.c.b16 %v3093, %v3092
        %v3154 = vpack.c.b16 %v3095, %v3094
        %v3155 = vpack.c.b16 %v3097, %v3096
        %v3156 = vpack.c.b16 %v3099, %v3098
        %v3157 = vpack.c.b16 %v3101, %v3100
        %v3158 = vpack.c.b16 %v3103, %v3102
        %v3159 = vpack.c.b16 %v3105, %v3104
        %v3160 = vpack.c.b16 %v3107, %v3106
        %v3161 = vpack.c.b16 %v3109, %v3108
        %v3162 = vpack.c.b16 %v3111, %v3110
        %v3163 = vpack.c.b16 %v3113, %v3112
        %v3164 = vpack.c.b16 %v3115, %v3114
        %v3165 = vpack.c.b16 %v3117, %v3116
        %v3166 = vpack.c.b16 %v3119, %v3118
        %v3167 = vpack.c.b16 %v3121, %v3120
        %v3168 = vpack.c.b16 %v3123, %v3122
        %v3169 = vpack.c.b16 %v3125, %v3124
        %v3170 = vpack.c.b16 %v3127, %v3126
        %v3171 = vpack.c.b16 %v3129, %v3128
        %v3172 = vpack.c.b16 %v3131, %v3130
        %v3173 = vpack.c.b16 %v3133, %v3132
        %v3174 = vpack.c.b16 %v3135, %v3134
        %v3175 = vpack.c.b16 %v3137, %v3136
        %v3176 = vpack.c.b16 %v3139, %v3138
        %v3177 = vpack.c.b16 %v3141, %v3140
        %v3178 = vpack.c.b16 %v3143, %v3142
        %v3179 = vpack.c.b16 %v3145, %v3144
        %v3180 = vpack.c.b16 %v3147, %v3146
        %v3181 = vpack.c.b16 %v3149, %v3148
        %3214 = vmatpush.bf16.msra.mxu0 %v3157
        %3215 = vmatpush.bf16.msra.mxu0 %v3156
        %3216 = vmatpush.bf16.msra.mxu0 %v3155
        %3217 = vmatpush.bf16.msra.mxu0 %v3154
        %3218 = vmatpush.bf16.msra.mxu0 %v3153
        %3219 = vmatpush.bf16.msra.mxu0 %v3152
        %3220 = vmatpush.bf16.msra.mxu0 %v3151
        %3221 = vmatpush.bf16.msra.mxu0 %v3150
        %3222 = vmatmul.bf16.gmra.mxu0 %v2953
        %v3223 = vpop.f32.mrf.mxu0
        %v3224 = vadd.f32 0.0, %v3223
        %v3225 = vpop.f32.mrf.mxu0
        %v3226 = vadd.f32 0.0, %v3225
        %3227 = vdwg.mxu0
        %3228 = vmatpush.bf16.msra.mxu0 %v3165
        %3229 = vmatpush.bf16.msra.mxu0 %v3164
        %3230 = vmatpush.bf16.msra.mxu0 %v3163
        %3231 = vmatpush.bf16.msra.mxu0 %v3162
        %3232 = vmatpush.bf16.msra.mxu0 %v3161
        %3233 = vmatpush.bf16.msra.mxu0 %v3160
        %3234 = vmatpush.bf16.msra.mxu0 %v3159
        %3235 = vmatpush.bf16.msra.mxu0 %v3158
        %3236 = vmatmul.bf16.gmra.mxu0 %v2954
        %v3237 = vpop.f32.mrf.mxu0
        %v3238 = vadd.f32 %v3224, %v3237
        %v3239 = vpop.f32.mrf.mxu0
        %v3240 = vadd.f32 %v3226, %v3239
        %3241 = vdwg.mxu0
        %3242 = vmatpush.bf16.msra.mxu0 %v3173
        %3243 = vmatpush.bf16.msra.mxu0 %v3172
        %3244 = vmatpush.bf16.msra.mxu0 %v3171
        %3245 = vmatpush.bf16.msra.mxu0 %v3170
        %3246 = vmatpush.bf16.msra.mxu0 %v3169
        %3247 = vmatpush.bf16.msra.mxu0 %v3168
        %3248 = vmatpush.bf16.msra.mxu0 %v3167
        %3249 = vmatpush.bf16.msra.mxu0 %v3166
        %3250 = vmatmul.bf16.gmra.mxu0 %v2955
        %v3251 = vpop.f32.mrf.mxu0
        %v3252 = vadd.f32 %v3238, %v3251
        %v3253 = vpop.f32.mrf.mxu0
        %v3254 = vadd.f32 %v3240, %v3253
        %3255 = vdwg.mxu0
        %3256 = vmatpush.bf16.msra.mxu0 %v3181
        %3257 = vmatpush.bf16.msra.mxu0 %v3180
        %3258 = vmatpush.bf16.msra.mxu0 %v3179
        %3259 = vmatpush.bf16.msra.mxu0 %v3178
        %3260 = vmatpush.bf16.msra.mxu0 %v3177
        %3261 = vmatpush.bf16.msra.mxu0 %v3176
        %3262 = vmatpush.bf16.msra.mxu0 %v3175
        %3263 = vmatpush.bf16.msra.mxu0 %v3174
        %3264 = vmatmul.bf16.gmra.mxu0 %v2956
        %v3265 = vpop.f32.mrf.mxu0
        %v3266 = vadd.f32 %v3252, %v3265
        %v3267 = vpop.f32.mrf.mxu0
        %v3268 = vadd.f32 %v3254, %v3267
        %3269 = vdwg.mxu0
        %v3270 = vadd.f32 %v1937, %v2877
        %v3271 = vadd.f32 %v1938, %v2879
        %v3272 = vadd.f32 %v3270, %v3266
        %v3273 = vadd.f32 %v3271, %v3268
        %v3275 = vrot.slane %v3272, 7
        %v3278 = vrot.slane %v3273, 6
        %vm3280 = vcmask 1040384
        %v3281 = vsel %vm3280, %v3275, %v3278
        %v3282 = vld [vmem:[%s11] sm:$0x1]
        %v3283 = vld [vmem:[%s12] sm:$0x1]
        %vm3284 = vcmask 1041408
        %v3285 = vsel %vm3284, %v3281, 0.0
        %3286 = vadd.xlane.f32.xlu0 %v3285
        %v3287 = vpop.xlane.xlu0 %3286
        %v3288 = vmul.f32 %v3287, %v568
        %v3289 = vsub.f32 %v3281, %v3288
        %v3290 = vmul.f32 %v3289, %v3289
        %v3291 = vsel %vm3284, %v3290, 0.0
        %3292 = vadd.xlane.f32.xlu0 %v3291
        %v3293 = vpop.xlane.xlu0 %3292
        %v3294 = vmul.f32 %v3293, %v568
        %v3295 = vadd.f32 %v3294, 1e-05
        %v3296 = vrsqrt.pop %v3295
        %v3297 = vmul.f32 %v3296, %v3295
        %v3298 = vmul.f32 %v3297, %v3296
        %v3299 = vmul.f32 0.5, %v3298
        %v3300 = vsub.f32 1.5, %v3299
        %v3301 = vmul.f32 %v3296, %v3300
        %vm3302 = vweird.f32 %v3295
        %vm3303 = vweird.f32 %v3296
        %vm3304 = vmor %vm3302, %vm3303
        %v3305 = vsel %vm3304, %v3296, %v3301
        %v3306 = vmul.f32 %v3289, %v3305
        %v3308 = vperm.slane %v3282, 0
        %v3310 = vmul.f32 %v3306, %v3308
        %v3312 = vperm.slane %v3283, 0
        %v3314 = vadd.f32 %v3310, %v3312
        %v3315 = vpack.c.bf16 %v3314, %v3314
        %v3316 = vld [vmem:[%s13] sm:$0xff]
        %v3317 = vld [vmem:[%s13 + $0x8] sm:$0xff]
        %v3318 = vld [vmem:[%s13 + $0x10] sm:$0xff]
        %v3319 = vld [vmem:[%s13 + $0x18] sm:$0xff]
        %v3320 = vld [vmem:[%s13 + $0x20] sm:$0xff]
        %v3321 = vld [vmem:[%s13 + $0x28] sm:$0xff]
        %v3322 = vld [vmem:[%s13 + $0x30] sm:$0xff]
        %v3323 = vld [vmem:[%s13 + $0x38] sm:$0xff]
        %v3324 = vld [vmem:[%s13 + $0x40] sm:$0xff]
        %v3325 = vld [vmem:[%s13 + $0x48] sm:$0xff]
        %v3326 = vld [vmem:[%s13 + $0x50] sm:$0xff]
        %v3327 = vld [vmem:[%s13 + $0x58] sm:$0xff]
        %v3328 = vld [vmem:[%s13 + $0x60] sm:$0xff]
        %v3329 = vld [vmem:[%s13 + $0x68] sm:$0xff]
        %v3330 = vld [vmem:[%s13 + $0x70] sm:$0xff]
        %v3331 = vld [vmem:[%s13 + $0x78] sm:$0xff]
        %v3348 = vunpack.c.l.b16 %v3316
        %v3349 = vunpack.c.h.b16 %v3316
        %v3350 = vunpack.c.l.b16 %v3317
        %v3351 = vunpack.c.h.b16 %v3317
        %v3352 = vunpack.c.l.b16 %v3318
        %v3353 = vunpack.c.h.b16 %v3318
        %v3354 = vunpack.c.l.b16 %v3319
        %v3355 = vunpack.c.h.b16 %v3319
        %v3356 = vunpack.c.l.b16 %v3320
        %v3357 = vunpack.c.h.b16 %v3320
        %v3358 = vunpack.c.l.b16 %v3321
        %v3359 = vunpack.c.h.b16 %v3321
        %v3360 = vunpack.c.l.b16 %v3322
        %v3361 = vunpack.c.h.b16 %v3322
        %v3362 = vunpack.c.l.b16 %v3323
        %v3363 = vunpack.c.h.b16 %v3323
        %v3364 = vunpack.c.l.b16 %v3324
        %v3365 = vunpack.c.h.b16 %v3324
        %v3366 = vunpack.c.l.b16 %v3325
        %v3367 = vunpack.c.h.b16 %v3325
        %v3368 = vunpack.c.l.b16 %v3326
        %v3369 = vunpack.c.h.b16 %v3326
        %v3370 = vunpack.c.l.b16 %v3327
        %v3371 = vunpack.c.h.b16 %v3327
        %v3372 = vunpack.c.l.b16 %v3328
        %v3373 = vunpack.c.h.b16 %v3328
        %v3374 = vunpack.c.l.b16 %v3329
        %v3375 = vunpack.c.h.b16 %v3329
        %v3376 = vunpack.c.l.b16 %v3330
        %v3377 = vunpack.c.h.b16 %v3330
        %v3378 = vunpack.c.l.b16 %v3331
        %v3379 = vunpack.c.h.b16 %v3331
        %v3380 = vpack.c.b16 %v3350, %v3348
        %v3381 = vpack.c.b16 %v3351, %v3349
        %v3382 = vpack.c.b16 %v3354, %v3352
        %v3383 = vpack.c.b16 %v3355, %v3353
        %v3384 = vpack.c.b16 %v3358, %v3356
        %v3385 = vpack.c.b16 %v3359, %v3357
        %v3386 = vpack.c.b16 %v3362, %v3360
        %v3387 = vpack.c.b16 %v3363, %v3361
        %v3388 = vpack.c.b16 %v3366, %v3364
        %v3389 = vpack.c.b16 %v3367, %v3365
        %v3390 = vpack.c.b16 %v3370, %v3368
        %v3391 = vpack.c.b16 %v3371, %v3369
        %v3392 = vpack.c.b16 %v3374, %v3372
        %v3393 = vpack.c.b16 %v3375, %v3373
        %v3394 = vpack.c.b16 %v3378, %v3376
        %v3395 = vpack.c.b16 %v3379, %v3377
        %3412 = vmatpush.bf16.msra.mxu0 %v3394
        %3413 = vmatpush.bf16.msra.mxu0 %v3392
        %3414 = vmatpush.bf16.msra.mxu0 %v3390
        %3415 = vmatpush.bf16.msra.mxu0 %v3388
        %3416 = vmatpush.bf16.msra.mxu0 %v3386
        %3417 = vmatpush.bf16.msra.mxu0 %v3384
        %3418 = vmatpush.bf16.msra.mxu0 %v3382
        %3419 = vmatpush.bf16.msra.mxu0 %v3380
        %3420 = vmatmul.bf16.gmra.mxu0 %v3315
        %v3421 = vpop.f32.mrf.mxu0
        %v3422 = vadd.f32 0.0, %v3421
        %v3423 = vpop.f32.mrf.mxu0
        %3424 = vdwg.mxu0
        %3425 = vmatpush.bf16.msra.mxu0 %v3395
        %3426 = vmatpush.bf16.msra.mxu0 %v3393
        %3427 = vmatpush.bf16.msra.mxu0 %v3391
        %3428 = vmatpush.bf16.msra.mxu0 %v3389
        %3429 = vmatpush.bf16.msra.mxu0 %v3387
        %3430 = vmatpush.bf16.msra.mxu0 %v3385
        %3431 = vmatpush.bf16.msra.mxu0 %v3383
        %3432 = vmatpush.bf16.msra.mxu0 %v3381
        %3433 = vmatmul.bf16.gmra.mxu0 %v3315
        %v3434 = vpop.f32.mrf.mxu0
        %v3435 = vadd.f32 0.0, %v3434
        %v3436 = vpop.f32.mrf.mxu0
        %3437 = vdwg.mxu0
        %v3440 = vrot.slane %v3435, 6
        %v3441 = vsel %vm3284, %v3422, %v3440
        %3443 = vst [vmem:[%s522] sm:$0xf] %v3441
        %p3444 = scmp.lt.s32.totalorder %s27, 1
        %s3445 = scalar_select %p3444, %s27, 1
        %s3446 = smul.addr %s3445, 2
        %s3447 = smul.addr %s3446, 2
        %s3448 = scalar_lea.vmem %s14, %s3447
        // Predicated region
        $region85: #{h2ogpt_forward.1} parent=75 // pred_check
          %p3449 = pneg %p349
        $region86: #{h2ogpt_forward.1} parent=75 // pred_check_branch
          %3451 = sbr.rel (%p3449) target = $region88
        $region87: #{h2ogpt_forward.1} parent=75 // pred_region
          _
        $region88: #{h2ogpt_forward.1} parent=75 // pred_fallthru
          _
      $region76: #{h2ogpt_forward.1} parent=5 // pred_fallthru
        _
      %p3452 = scmp.le.s32.totalorder 2, %s22
      // Predicated region
      $region89: #{h2ogpt_forward.1} parent=5 // pred_check
        %p3453 = pneg %p3452
      $region90: #{h2ogpt_forward.1} parent=5 // pred_check_branch
        %3455 = sbr.rel (%p3453) target = $region92
      $region91: #{h2ogpt_forward.1} parent=5 // pred_region
        %s3456 = ssub.s32 %s22, 2
        // Predicated region
        $region93: #{h2ogpt_forward.1} parent=91 // pred_check
          %p3457 = pneg %p355
        $region94: #{h2ogpt_forward.1} parent=91 // pred_check_branch
          %3459 = sbr.rel (%p3457) target = $region96
        $region95: #{h2ogpt_forward.1} parent=91 // pred_region
          %p3460 = scmp.lt.s32.totalorder %s28, 1
          %s3461 = scalar_select %p3460, %s28, 1
          %s3462 = smul.addr %s3461, 2
          %s3463 = smul.addr %s3462, 2
          %s3464 = scalar_lea.vmem %s14, %s3463
        $region96: #{h2ogpt_forward.1} parent=91 // pred_fallthru
          _
      $region92: #{h2ogpt_forward.1} parent=5 // pred_fallthru
        _
    $region6: #{h2ogpt_forward.1} parent=1 // loop_footer
      %s26 = sadd.s32 1, %s22
    $region7: #{h2ogpt_forward.1} parent=1 // loop_footer_branch
      %21 = sbr.rel target = $region3
    $region8: #{h2ogpt_forward.1} parent=1 // loop_exit
      _
    %3465 = vsyncpa [#allocation3], 1
    %s3466 = scalar_lea.sflag [#allocation3], 1
    %3467 = vsyncpa %s3466, 1
    %3468 = vsyncpa [#allocation5], 1

</llo_original>
